<compile_context>
chip_gen: v7x
topology: tpu7x:2x2x1
jax: 0.10.0
libtpu: 0.0.40
codegen_flags: <defaults>
</compile_context>

<pallas_src>
import functools

import jax
import jax.numpy as jnp
from jax.experimental import pallas as pl
from jax.experimental.pallas import tpu as pltpu

EPS = 1e-5  # PyTorch InstanceNorm2d default


# ------------------------------ Pallas kernel --------------------------------
def _up_fused_kernel(x4_ref, x2_ref, mask_ref, w4_ref, bt_ref, wg_ref, bg_ref,
                     wm1_ref, wm2_ref, bm_ref, o_ref, *, inv_valid, mix_dtype):
    """One batch sample.  Activations are (4*P, C) with row = phase*P + pixel, so the
    1x1 gate/merge convs are dense matmuls and IN statistics are plain axis-0 sums."""
    P4 = o_ref.shape[1]               # 4 * H * W output positions
    inv_n = 1.0 / P4

    def norm_relu(y, s1, s2, inv_count):
        mean = s1 * inv_count
        var = jnp.maximum(s2 * inv_count - mean * mean, 0.0)
        return jnp.maximum((y - mean) * jax.lax.rsqrt(var + EPS), 0.0)

    # --- up_conv: stride-2 ConvTranspose2d as 4 sub-pixel phase matmuls (MXU,
    #     bf16 operands / f32 accumulate) + InstanceNorm + ReLU (f32) ---
    x4 = x4_ref[0]                                                      # (P, 4*Cin)
    y1 = jnp.concatenate(
        [jnp.dot(x4, w4_ref[p], preferred_element_type=jnp.float32) for p in range(4)],
        axis=0) + bt_ref[...]                                           # (4P, Cout) f32
    s1 = jnp.sum(y1, axis=0, keepdims=True)
    s2 = jnp.sum(y1 * y1, axis=0, keepdims=True)
    y1 = norm_relu(y1, s1, s2, inv_n)

    # --- gate: dense 1x1 conv + InstanceNorm over the valid (un-padded) pixels + ReLU;
    #     F.pad is realised by zeroing the padded rows with the (4P, 1) mask ---
    m = mask_ref[...]                                                   # (4P, 1), {0,1}
    g = jnp.dot(x2_ref[0], wg_ref[...],
                preferred_element_type=jnp.float32) + bg_ref[...]       # (4P, Cg) f32
    gm = g * m                                       # computed once, reused for stats
    s1 = jnp.sum(gm, axis=0, keepdims=True)
    s2 = jnp.sum(gm * gm, axis=0, keepdims=True)     # m is 0/1 -> (m*g)^2 == m*g^2
    g = norm_relu(gm, s1, s2, inv_valid) * m

    # --- merge: concat-as-sum of two dense matmuls + InstanceNorm + ReLU ---
    z = (jnp.dot(y1.astype(mix_dtype), wm1_ref[...], preferred_element_type=jnp.float32)
         + jnp.dot(g.astype(mix_dtype), wm2_ref[...], preferred_element_type=jnp.float32)
         + bm_ref[...])                                                 # (4P, Cout) f32
    s1 = jnp.sum(z, axis=0, keepdims=True)
    s2 = jnp.sum(z * z, axis=0, keepdims=True)
    o_ref[0] = norm_relu(z, s1, s2, inv_n).astype(o_ref.dtype)


def _vmem_capacity_bytes():
    try:
        cap = int(pltpu.get_tpu_info().vmem_capacity_bytes)
        if cap > 0:
            return cap
    except Exception:
        pass
    return 128 * 1024 * 1024  # v5e / v6e physical VMEM


def up_pallas_call(x4, x2r, mask, w4, bt, wg, bg, wm1, wm2, bm, *, valid, mix_dtype):
    N, P, K4 = x4.shape
    _, P4, Cout = x2r.shape
    Cg = wg.shape[1]

    # Explicit VMEM budget: double-buffered per-step blocks + grid-invariant operands
    # + in-kernel f32 temporaries (generous), capped at 85% of physical VMEM.
    per_step = (P * K4 * x4.dtype.itemsize          # x4 block
                + P4 * Cout * x2r.dtype.itemsize    # x2 block
                + P4 * Cout * 4)                    # output block (f32)
    consts = sum(int(a.size) * a.dtype.itemsize
                 for a in (mask, w4, wg, wm1, wm2, bt, bg, bm))
    temps = 12 * P4 * Cout * 4 + 4 * P4 * Cg * 4
    need = 2 * (per_step + consts) + temps + (4 << 20)
    vmem_limit = int(min(0.85 * _vmem_capacity_bytes(), max(need, 16 << 20)))

    kernel = functools.partial(_up_fused_kernel, inv_valid=1.0 / valid,
                               mix_dtype=mix_dtype)
    return pl.pallas_call(
        kernel,
        out_shape=jax.ShapeDtypeStruct((N, P4, Cout), jnp.float32),
        grid_spec=pltpu.PrefetchScalarGridSpec(
            num_scalar_prefetch=0,
            grid=(N,),
            in_specs=[
                pl.BlockSpec((1, P, K4), lambda n: (n, 0, 0)),     # x1 sub-pixel views
                pl.BlockSpec((1, P4, Cout), lambda n: (n, 0, 0)),  # x2, padded, phase rows
                pl.BlockSpec((P4, 1), lambda n: (0, 0)),           # validity mask (per row)
                pl.BlockSpec((4, K4, Cout), lambda n: (0, 0, 0)),  # convT per-phase weights
                pl.BlockSpec((1, Cout), lambda n: (0, 0)),         # bt
                pl.BlockSpec((Cout, Cg), lambda n: (0, 0)),        # Wg (dense)
                pl.BlockSpec((1, Cg), lambda n: (0, 0)),           # bg
                pl.BlockSpec((Cout, Cout), lambda n: (0, 0)),      # Wm1 (dense)
                pl.BlockSpec((Cg, Cout), lambda n: (0, 0)),        # Wm2 (dense)
                pl.BlockSpec((1, Cout), lambda n: (0, 0)),         # bm
            ],
            out_specs=pl.BlockSpec((1, P4, Cout), lambda n: (n, 0, 0)),
        ),
        compiler_params=pltpu.CompilerParams(
            dimension_semantics=("parallel",),   # batch shards across TCs (v7x)
            vmem_limit_bytes=vmem_limit,
        ),
    )(x4, x2r, mask, w4, bt, wg, bg, wm1, wm2, bm)


# ------------------------------ JAX glue --------------------------------------
def _phase_rows(x_nhwc):
    """(N, 2H, 2W, C) -> (N, 4*H*W, C), row = (dy*2+dx)*H*W + iy*W + ix."""
    N, H2_, W2_, C = x_nhwc.shape
    H, W = H2_ // 2, W2_ // 2
    x = x_nhwc.reshape(N, H, 2, W, 2, C).transpose(0, 2, 4, 1, 3, 5)
    return x.reshape(N, 4 * H * W, C)


def _subpixel_views(x_nhwc):
    """(N, H, W, C) -> (N, H*W, 4*C): [x[r,c], x[r,c+1], x[r+1,c], x[r+1,c+1]]."""
    N, H, W, C = x_nhwc.shape
    xp = jnp.pad(x_nhwc, ((0, 0), (0, 1), (0, 1), (0, 0)))
    views = [xp[:, sy:sy + H, sx:sx + W, :] for sy in range(2) for sx in range(2)]
    return jnp.concatenate(views, axis=-1).reshape(N, H * W, 4 * C)


def _subpixel_weight(wt):
    """ConvTranspose2d weight (Cin, Cout, 3, 3) -> (4, 4*Cin, Cout).
    Slab p = dy*2+dx holds, stacked over shifts s = sy*2+sx (matching
    _subpixel_views order), the tap applied to the (sy, sx)-shifted view."""
    Cin, Cout = wt.shape[0], wt.shape[1]
    zero = jnp.zeros((Cin, Cout), wt.dtype)
    phases = []
    for dy in range(2):
        for dx in range(2):
            rows = []
            for sy in range(2):
                for sx in range(2):
                    ky, kx = 1 + dy - 2 * sy, 1 + dx - 2 * sx
                    rows.append(wt[:, :, ky, kx]
                                if (0 <= ky <= 2 and 0 <= kx <= 2) else zero)
            phases.append(jnp.concatenate(rows, axis=0))   # (4*Cin, Cout)
    return jnp.stack(phases, axis=0)                        # (4, 4*Cin, Cout)


def up_forward(x1, x2, params, *, compute_dtype=jnp.bfloat16):
    N, Cin, H, W = x1.shape
    Cout = params["bt"].shape[0]
    Cg = Cout // 2
    H1, W1 = 2 * H, 2 * W
    _, _, H2, W2 = x2.shape
    dY, dX = H1 - H2, W1 - W2
    pT, pB, pL, pR = dY // 2, dY - dY // 2, dX // 2, dX - dX // 2
    P = H * W

    # x1 -> 4 shifted sub-pixel views (MXU dtype).
    x4 = _subpixel_views(jnp.transpose(x1, (0, 2, 3, 1))).astype(compute_dtype)

    # x2 pre-padded onto the output grid in phase-row layout; the gate bias/IN at the
    # padded positions is corrected in-kernel via `mask`.
    x2p = jnp.pad(jnp.transpose(x2, (0, 2, 3, 1)),
                  ((0, 0), (pT, pB), (pL, pR), (0, 0)))
    x2r = _phase_rows(x2p).astype(compute_dtype)                         # (N, 4P, Cout)

    valid = jnp.pad(jnp.ones((1, H2, W2, 1), jnp.float32),
                    ((0, 0), (pT, pB), (pL, pR), (0, 0)))
    mask = _phase_rows(valid)[0]                                         # (4P, 1)

    # dense weights (no block-diagonal replication), MXU dtype
    w4 = _subpixel_weight(params["wt"]).astype(compute_dtype)            # (4, 4Cin, Cout)
    wg = jnp.transpose(params["wg"][:, :, 0, 0], (1, 0)).astype(compute_dtype)
    wm = jnp.transpose(params["wm"][:, :, 0, 0], (1, 0))                 # (Cout+Cg, Cout)
    wm1 = wm[:Cout, :].astype(compute_dtype)                             # (Cout, Cout)
    wm2 = wm[Cout:, :].astype(compute_dtype)                             # (Cg, Cout)
    bt = params["bt"].reshape(1, Cout)
    bg = params["bg"].reshape(1, Cg)
    bm = params["bm"].reshape(1, Cout)

    out = up_pallas_call(x4, x2r, mask, w4, bt, wg, bg, wm1, wm2, bm,
                         valid=H2 * W2, mix_dtype=compute_dtype)         # (N, 4P, Cout)

    # depth-to-space (row = (dy*2+dx)*P + iy*W+ix) + NCHW for the public interface
    out = out.reshape(N, 2, 2, H, W, Cout).transpose(0, 5, 3, 1, 4, 2)
    return out.reshape(N, Cout, H1, W1)


# --------------------------- params & reference --------------------------------
def init_params(key, in_features, out_features):
    ks = jax.random.split(key, 6)

    def u(k, shape, fan_in):
        b = 1.0 / (fan_in ** 0.5)
        return jax.random.uniform(k, shape, jnp.float32, -b, b)

    return dict(
        wt=u(ks[0], (in_features, out_features, 3, 3), in_features * 9),
        bt=u(ks[1], (out_features,), in_features * 9),
        wg=u(ks[2], (out_features // 2, out_features, 1, 1), out_features),
        bg=u(ks[3], (out_features // 2,), out_features),
        wm=u(ks[4], (out_features, out_features + out_features // 2, 1, 1),
             out_features + out_features // 2),
        bm=u(ks[5], (out_features,), out_features + out_features // 2),
    )


def _in_relu_nchw(x):
    mean = x.mean(axis=(2, 3), keepdims=True)
    var = jnp.square(x - mean).mean(axis=(2, 3), keepdims=True)
    return jnp.maximum((x - mean) / jnp.sqrt(var + EPS), 0.0)


def ref_up(x1, x2, p):
    dn = ("NCHW", "OIHW", "NCHW")
    wconv = jnp.transpose(p["wt"], (1, 0, 2, 3))[:, :, ::-1, ::-1]
    y1 = jax.lax.conv_general_dilated(x1, wconv, (1, 1), [(1, 2), (1, 2)],
                                      lhs_dilation=(2, 2), dimension_numbers=dn)
    y1 = _in_relu_nchw(y1 + p["bt"][None, :, None, None])
    y2 = jax.lax.conv_general_dilated(x2, p["wg"], (1, 1), "VALID",
                                      dimension_numbers=dn)
    y2 = _in_relu_nchw(y2 + p["bg"][None, :, None, None])
    dY, dX = y1.shape[2] - y2.shape[2], y1.shape[3] - y2.shape[3]
    y2 = jnp.pad(y2, ((0, 0), (0, 0),
                      (dY // 2, dY - dY // 2), (dX // 2, dX - dX // 2)))
    y = jnp.concatenate([y1, y2], axis=1)
    y = jax.lax.conv_general_dilated(y, p["wm"], (1, 1), "VALID",
                                     dimension_numbers=dn)
    return _in_relu_nchw(y + p["bm"][None, :, None, None])


# ----------------------------------- main ---------------------------------------
if __name__ == "__main__":
    key = jax.random.PRNGKey(0)
    in_features, out_features = 32, 32
    N = 2
    k1, k2, kp = jax.random.split(key, 3)
    x1 = jax.random.normal(k1, (N, in_features, 8, 8), jnp.float32)      # -> 16x16
    x2 = jax.random.normal(k2, (N, out_features, 12, 12), jnp.float32)   # exercises F.pad
    params = init_params(kp, in_features, out_features)

    ref = ref_up(x1, x2, params)

    # f32 MXU path: tight check against the XLA reference.
    fwd_f32 = jax.jit(functools.partial(up_forward, compute_dtype=jnp.float32))
    out_f32 = jax.block_until_ready(fwd_f32(x1, x2, params))
    assert out_f32.shape == (N, out_features, 16, 16), out_f32.shape
    err32 = float(jnp.max(jnp.abs(out_f32 - ref)))
    assert jnp.allclose(out_f32, ref, atol=2e-4, rtol=2e-4), f"f32 max abs err {err32}"

    # bf16 MXU path (production config): tolerance sized for bf16 operand rounding.
    fwd_bf16 = jax.jit(functools.partial(up_forward, compute_dtype=jnp.bfloat16))
    out_bf16 = jax.block_until_ready(fwd_bf16(x1, x2, params))
    assert out_bf16.shape == (N, out_features, 16, 16), out_bf16.shape
    err16 = float(jnp.max(jnp.abs(out_bf16 - ref)))
    assert jnp.allclose(out_bf16, ref, atol=8e-2, rtol=8e-2), f"bf16 max abs err {err16}"

    print("KERNEL_OK")
</pallas_src>

<mosaic_0001>
module attributes {stable_mosaic.version = 11 : i64} {
  func.func @_up_fused_kernel(%arg0: i32, %arg1: memref<1x64x128xf32, #tpu.memory_space<vmem>>, %arg2: memref<1x256x32xf32, #tpu.memory_space<vmem>>, %arg3: memref<256x1xf32, #tpu.memory_space<vmem>>, %arg4: memref<4x128x32xf32, #tpu.memory_space<vmem>>, %arg5: memref<1x32xf32, #tpu.memory_space<vmem>>, %arg6: memref<32x16xf32, #tpu.memory_space<vmem>>, %arg7: memref<1x16xf32, #tpu.memory_space<vmem>>, %arg8: memref<32x32xf32, #tpu.memory_space<vmem>>, %arg9: memref<16x32xf32, #tpu.memory_space<vmem>>, %arg10: memref<1x32xf32, #tpu.memory_space<vmem>>, %arg11: memref<1x256x32xf32, #tpu.memory_space<vmem>>) attributes {dimension_semantics = [#tpu.dimension_semantics<parallel>], iteration_bounds = array<i64: 2>, scalar_prefetch = 0 : i64, scratch_operands = 0 : i64, tpu.core_type = #tpu.core_type<tc>, window_params = [{transform_indices = @transform_0, window_bounds = array<i64: 1, 64, 128>}, {transform_indices = @transform_1, window_bounds = array<i64: 1, 256, 32>}, {pipeline_mode = #tpu.pipeline_mode<synchronous>, transform_indices = @transform_2, window_bounds = array<i64: 256, 1>}, {pipeline_mode = #tpu.pipeline_mode<synchronous>, transform_indices = @transform_3, window_bounds = array<i64: 4, 128, 32>}, {pipeline_mode = #tpu.pipeline_mode<synchronous>, transform_indices = @transform_4, window_bounds = array<i64: 1, 32>}, {pipeline_mode = #tpu.pipeline_mode<synchronous>, transform_indices = @transform_5, window_bounds = array<i64: 32, 16>}, {pipeline_mode = #tpu.pipeline_mode<synchronous>, transform_indices = @transform_6, window_bounds = array<i64: 1, 16>}, {pipeline_mode = #tpu.pipeline_mode<synchronous>, transform_indices = @transform_7, window_bounds = array<i64: 32, 32>}, {pipeline_mode = #tpu.pipeline_mode<synchronous>, transform_indices = @transform_8, window_bounds = array<i64: 16, 32>}, {pipeline_mode = #tpu.pipeline_mode<synchronous>, transform_indices = @transform_9, window_bounds = array<i64: 1, 32>}, {transform_indices = @transform_10, window_bounds = array<i64: 1, 256, 32>}]} {
    %c0 = arith.constant 0 : index
    %c0_0 = arith.constant 0 : index
    %c0_1 = arith.constant 0 : index
    %0 = vector.load %arg1[%c0, %c0_0, %c0_1] : memref<1x64x128xf32, #tpu.memory_space<vmem>>, vector<1x64x128xf32>
    %1 = vector.shape_cast %0 : vector<1x64x128xf32> to vector<64x128xf32>
    %c0_2 = arith.constant 0 : index
    %c0_3 = arith.constant 0 : index
    %c0_4 = arith.constant 0 : index
    %2 = vector.load %arg4[%c0_2, %c0_3, %c0_4] : memref<4x128x32xf32, #tpu.memory_space<vmem>>, vector<1x128x32xf32>
    %3 = vector.shape_cast %2 : vector<1x128x32xf32> to vector<128x32xf32>
    %cst = arith.constant dense<0.000000e+00> : vector<64x32xf32>
    %4 = tpu.matmul %1, %3, %cst {dimension_numbers = #tpu.dot_dimension_numbers<[1], [0], [0], [1], [0, 0, 1, 1], [], []>} : vector<64x128xf32>, vector<128x32xf32>, vector<64x32xf32> -> vector<64x32xf32>
    %c1 = arith.constant 1 : index
    %c0_5 = arith.constant 0 : index
    %c0_6 = arith.constant 0 : index
    %5 = vector.load %arg4[%c1, %c0_5, %c0_6] : memref<4x128x32xf32, #tpu.memory_space<vmem>>, vector<1x128x32xf32>
    %6 = vector.shape_cast %5 : vector<1x128x32xf32> to vector<128x32xf32>
    %cst_7 = arith.constant dense<0.000000e+00> : vector<64x32xf32>
    %7 = tpu.matmul %1, %6, %cst_7 {dimension_numbers = #tpu.dot_dimension_numbers<[1], [0], [0], [1], [0, 0, 1, 1], [], []>} : vector<64x128xf32>, vector<128x32xf32>, vector<64x32xf32> -> vector<64x32xf32>
    %c2 = arith.constant 2 : index
    %c0_8 = arith.constant 0 : index
    %c0_9 = arith.constant 0 : index
    %8 = vector.load %arg4[%c2, %c0_8, %c0_9] : memref<4x128x32xf32, #tpu.memory_space<vmem>>, vector<1x128x32xf32>
    %9 = vector.shape_cast %8 : vector<1x128x32xf32> to vector<128x32xf32>
    %cst_10 = arith.constant dense<0.000000e+00> : vector<64x32xf32>
    %10 = tpu.matmul %1, %9, %cst_10 {dimension_numbers = #tpu.dot_dimension_numbers<[1], [0], [0], [1], [0, 0, 1, 1], [], []>} : vector<64x128xf32>, vector<128x32xf32>, vector<64x32xf32> -> vector<64x32xf32>
    %c3 = arith.constant 3 : index
    %c0_11 = arith.constant 0 : index
    %c0_12 = arith.constant 0 : index
    %11 = vector.load %arg4[%c3, %c0_11, %c0_12] : memref<4x128x32xf32, #tpu.memory_space<vmem>>, vector<1x128x32xf32>
    %12 = vector.shape_cast %11 : vector<1x128x32xf32> to vector<128x32xf32>
    %cst_13 = arith.constant dense<0.000000e+00> : vector<64x32xf32>
    %13 = tpu.matmul %1, %12, %cst_13 {dimension_numbers = #tpu.dot_dimension_numbers<[1], [0], [0], [1], [0, 0, 1, 1], [], []>} : vector<64x128xf32>, vector<128x32xf32>, vector<64x32xf32> -> vector<64x32xf32>
    %14 = tpu.concatenate %4, %7, %10, %13 in 0 : vector<64x32xf32>, vector<64x32xf32>, vector<64x32xf32>, vector<64x32xf32> -> vector<256x32xf32>
    %c0_14 = arith.constant 0 : index
    %c0_15 = arith.constant 0 : index
    %15 = vector.load %arg5[%c0_14, %c0_15] : memref<1x32xf32, #tpu.memory_space<vmem>>, vector<1x32xf32>
    %16 = vector.broadcast %15 : vector<1x32xf32> to vector<256x32xf32>
    %17 = arith.addf %14, %16 : vector<256x32xf32>
    %cst_16 = arith.constant dense<0.000000e+00> : vector<32xf32>
    %18 = vector.multi_reduction <add>, %17, %cst_16 [0] : vector<256x32xf32> to vector<32xf32>
    %19 = vector.shape_cast %18 : vector<32xf32> to vector<1x32xf32>
    %20 = arith.mulf %17, %17 : vector<256x32xf32>
    %cst_17 = arith.constant dense<0.000000e+00> : vector<32xf32>
    %21 = vector.multi_reduction <add>, %20, %cst_17 [0] : vector<256x32xf32> to vector<32xf32>
    %22 = vector.shape_cast %21 : vector<32xf32> to vector<1x32xf32>
    %cst_18 = arith.constant 3.906250e-03 : f32
    %23 = vector.broadcast %cst_18 : f32 to vector<1x32xf32>
    %24 = arith.mulf %19, %23 : vector<1x32xf32>
    %cst_19 = arith.constant 3.906250e-03 : f32
    %25 = vector.broadcast %cst_19 : f32 to vector<1x32xf32>
    %26 = arith.mulf %22, %25 : vector<1x32xf32>
    %27 = arith.mulf %24, %24 : vector<1x32xf32>
    %28 = arith.subf %26, %27 : vector<1x32xf32>
    %cst_20 = arith.constant 0.000000e+00 : f32
    %29 = vector.broadcast %cst_20 : f32 to vector<1x32xf32>
    %30 = arith.maximumf %28, %29 : vector<1x32xf32>
    %31 = vector.broadcast %24 : vector<1x32xf32> to vector<256x32xf32>
    %32 = arith.subf %17, %31 : vector<256x32xf32>
    %cst_21 = arith.constant 9.99999974E-6 : f32
    %33 = vector.broadcast %cst_21 : f32 to vector<1x32xf32>
    %34 = arith.addf %30, %33 : vector<1x32xf32>
    %35 = math.rsqrt %34 : vector<1x32xf32>
    %36 = vector.broadcast %35 : vector<1x32xf32> to vector<256x32xf32>
    %37 = arith.mulf %32, %36 : vector<256x32xf32>
    %cst_22 = arith.constant 0.000000e+00 : f32
    %38 = vector.broadcast %cst_22 : f32 to vector<256x32xf32>
    %39 = arith.maximumf %37, %38 : vector<256x32xf32>
    %c0_23 = arith.constant 0 : index
    %c0_24 = arith.constant 0 : index
    %40 = vector.load %arg3[%c0_23, %c0_24] : memref<256x1xf32, #tpu.memory_space<vmem>>, vector<256x1xf32>
    %c0_25 = arith.constant 0 : index
    %c0_26 = arith.constant 0 : index
    %c0_27 = arith.constant 0 : index
    %41 = vector.load %arg2[%c0_25, %c0_26, %c0_27] : memref<1x256x32xf32, #tpu.memory_space<vmem>>, vector<1x256x32xf32>
    %42 = vector.shape_cast %41 : vector<1x256x32xf32> to vector<256x32xf32>
    %c0_28 = arith.constant 0 : index
    %c0_29 = arith.constant 0 : index
    %43 = vector.load %arg6[%c0_28, %c0_29] : memref<32x16xf32, #tpu.memory_space<vmem>>, vector<32x16xf32>
    %cst_30 = arith.constant dense<0.000000e+00> : vector<256x16xf32>
    %44 = tpu.matmul %42, %43, %cst_30 {dimension_numbers = #tpu.dot_dimension_numbers<[1], [0], [0], [1], [0, 0, 1, 1], [], []>} : vector<256x32xf32>, vector<32x16xf32>, vector<256x16xf32> -> vector<256x16xf32>
    %c0_31 = arith.constant 0 : index
    %c0_32 = arith.constant 0 : index
    %45 = vector.load %arg7[%c0_31, %c0_32] : memref<1x16xf32, #tpu.memory_space<vmem>>, vector<1x16xf32>
    %46 = vector.broadcast %45 : vector<1x16xf32> to vector<256x16xf32>
    %47 = arith.addf %44, %46 : vector<256x16xf32>
    %48 = vector.broadcast %40 : vector<256x1xf32> to vector<256x16xf32>
    %49 = arith.mulf %47, %48 : vector<256x16xf32>
    %cst_33 = arith.constant dense<0.000000e+00> : vector<16xf32>
    %50 = vector.multi_reduction <add>, %49, %cst_33 [0] : vector<256x16xf32> to vector<16xf32>
    %51 = vector.shape_cast %50 : vector<16xf32> to vector<1x16xf32>
    %52 = arith.mulf %49, %49 : vector<256x16xf32>
    %cst_34 = arith.constant dense<0.000000e+00> : vector<16xf32>
    %53 = vector.multi_reduction <add>, %52, %cst_34 [0] : vector<256x16xf32> to vector<16xf32>
    %54 = vector.shape_cast %53 : vector<16xf32> to vector<1x16xf32>
    %cst_35 = arith.constant 0.0069444445 : f32
    %55 = vector.broadcast %cst_35 : f32 to vector<1x16xf32>
    %56 = arith.mulf %51, %55 : vector<1x16xf32>
    %cst_36 = arith.constant 0.0069444445 : f32
    %57 = vector.broadcast %cst_36 : f32 to vector<1x16xf32>
    %58 = arith.mulf %54, %57 : vector<1x16xf32>
    %59 = arith.mulf %56, %56 : vector<1x16xf32>
    %60 = arith.subf %58, %59 : vector<1x16xf32>
    %cst_37 = arith.constant 0.000000e+00 : f32
    %61 = vector.broadcast %cst_37 : f32 to vector<1x16xf32>
    %62 = arith.maximumf %60, %61 : vector<1x16xf32>
    %63 = vector.broadcast %56 : vector<1x16xf32> to vector<256x16xf32>
    %64 = arith.subf %49, %63 : vector<256x16xf32>
    %cst_38 = arith.constant 9.99999974E-6 : f32
    %65 = vector.broadcast %cst_38 : f32 to vector<1x16xf32>
    %66 = arith.addf %62, %65 : vector<1x16xf32>
    %67 = math.rsqrt %66 : vector<1x16xf32>
    %68 = vector.broadcast %67 : vector<1x16xf32> to vector<256x16xf32>
    %69 = arith.mulf %64, %68 : vector<256x16xf32>
    %cst_39 = arith.constant 0.000000e+00 : f32
    %70 = vector.broadcast %cst_39 : f32 to vector<256x16xf32>
    %71 = arith.maximumf %69, %70 : vector<256x16xf32>
    %72 = vector.broadcast %40 : vector<256x1xf32> to vector<256x16xf32>
    %73 = arith.mulf %71, %72 : vector<256x16xf32>
    %c0_40 = arith.constant 0 : index
    %c0_41 = arith.constant 0 : index
    %74 = vector.load %arg8[%c0_40, %c0_41] : memref<32x32xf32, #tpu.memory_space<vmem>>, vector<32x32xf32>
    %cst_42 = arith.constant dense<0.000000e+00> : vector<256x32xf32>
    %75 = tpu.matmul %39, %74, %cst_42 {dimension_numbers = #tpu.dot_dimension_numbers<[1], [0], [0], [1], [0, 0, 1, 1], [], []>} : vector<256x32xf32>, vector<32x32xf32>, vector<256x32xf32> -> vector<256x32xf32>
    %c0_43 = arith.constant 0 : index
    %c0_44 = arith.constant 0 : index
    %76 = vector.load %arg9[%c0_43, %c0_44] : memref<16x32xf32, #tpu.memory_space<vmem>>, vector<16x32xf32>
    %cst_45 = arith.constant dense<0.000000e+00> : vector<256x32xf32>
    %77 = tpu.matmul %73, %76, %cst_45 {dimension_numbers = #tpu.dot_dimension_numbers<[1], [0], [0], [1], [0, 0, 1, 1], [], []>} : vector<256x16xf32>, vector<16x32xf32>, vector<256x32xf32> -> vector<256x32xf32>
    %78 = arith.addf %75, %77 : vector<256x32xf32>
    %c0_46 = arith.constant 0 : index
    %c0_47 = arith.constant 0 : index
    %79 = vector.load %arg10[%c0_46, %c0_47] : memref<1x32xf32, #tpu.memory_space<vmem>>, vector<1x32xf32>
    %80 = vector.broadcast %79 : vector<1x32xf32> to vector<256x32xf32>
    %81 = arith.addf %78, %80 : vector<256x32xf32>
    %cst_48 = arith.constant dense<0.000000e+00> : vector<32xf32>
    %82 = vector.multi_reduction <add>, %81, %cst_48 [0] : vector<256x32xf32> to vector<32xf32>
    %83 = vector.shape_cast %82 : vector<32xf32> to vector<1x32xf32>
    %84 = arith.mulf %81, %81 : vector<256x32xf32>
    %cst_49 = arith.constant dense<0.000000e+00> : vector<32xf32>
    %85 = vector.multi_reduction <add>, %84, %cst_49 [0] : vector<256x32xf32> to vector<32xf32>
    %86 = vector.shape_cast %85 : vector<32xf32> to vector<1x32xf32>
    %cst_50 = arith.constant 3.906250e-03 : f32
    %87 = vector.broadcast %cst_50 : f32 to vector<1x32xf32>
    %88 = arith.mulf %83, %87 : vector<1x32xf32>
    %cst_51 = arith.constant 3.906250e-03 : f32
    %89 = vector.broadcast %cst_51 : f32 to vector<1x32xf32>
    %90 = arith.mulf %86, %89 : vector<1x32xf32>
    %91 = arith.mulf %88, %88 : vector<1x32xf32>
    %92 = arith.subf %90, %91 : vector<1x32xf32>
    %cst_52 = arith.constant 0.000000e+00 : f32
    %93 = vector.broadcast %cst_52 : f32 to vector<1x32xf32>
    %94 = arith.maximumf %92, %93 : vector<1x32xf32>
    %95 = vector.broadcast %88 : vector<1x32xf32> to vector<256x32xf32>
    %96 = arith.subf %81, %95 : vector<256x32xf32>
    %cst_53 = arith.constant 9.99999974E-6 : f32
    %97 = vector.broadcast %cst_53 : f32 to vector<1x32xf32>
    %98 = arith.addf %94, %97 : vector<1x32xf32>
    %99 = math.rsqrt %98 : vector<1x32xf32>
    %100 = vector.broadcast %99 : vector<1x32xf32> to vector<256x32xf32>
    %101 = arith.mulf %96, %100 : vector<256x32xf32>
    %cst_54 = arith.constant 0.000000e+00 : f32
    %102 = vector.broadcast %cst_54 : f32 to vector<256x32xf32>
    %103 = arith.maximumf %101, %102 : vector<256x32xf32>
    %c0_55 = arith.constant 0 : index
    %c0_56 = arith.constant 0 : index
    %c0_57 = arith.constant 0 : index
    %104 = vector.load %arg11[%c0_55, %c0_56, %c0_57] : memref<1x256x32xf32, #tpu.memory_space<vmem>>, vector<1x256x32xf32>
    %105 = vector.shape_cast %104 : vector<1x256x32xf32> to vector<256x32xf32>
    %106 = vector.shape_cast %103 : vector<256x32xf32> to vector<1x256x32xf32>
    tpu.vector_store %arg11[%c0_55, %c0_56, %c0_57], %106 {strides = array<i32>} : memref<1x256x32xf32, #tpu.memory_space<vmem>>, vector<1x256x32xf32>,
    return
  }
  func.func @transform_0(%arg0: i32) -> (i32, i32, i32) {
    %c0_i32 = arith.constant 0 : i32
    %c0_i32_0 = arith.constant 0 : i32
    %c0_i32_1 = arith.constant 0 : i32
    return %arg0, %c0_i32, %c0_i32_0 : i32, i32, i32
  }
  func.func @transform_1(%arg0: i32) -> (i32, i32, i32) {
    %c0_i32 = arith.constant 0 : i32
    %c0_i32_0 = arith.constant 0 : i32
    %c0_i32_1 = arith.constant 0 : i32
    return %arg0, %c0_i32, %c0_i32_0 : i32, i32, i32
  }
  func.func @transform_2(%arg0: i32) -> (i32, i32) {
    %c0_i32 = arith.constant 0 : i32
    %c0_i32_0 = arith.constant 0 : i32
    %c0_i32_1 = arith.constant 0 : i32
    return %c0_i32, %c0_i32_0 : i32, i32
  }
  func.func @transform_3(%arg0: i32) -> (i32, i32, i32) {
    %c0_i32 = arith.constant 0 : i32
    %c0_i32_0 = arith.constant 0 : i32
    %c0_i32_1 = arith.constant 0 : i32
    %c0_i32_2 = arith.constant 0 : i32
    return %c0_i32, %c0_i32_0, %c0_i32_1 : i32, i32, i32
  }
  func.func @transform_4(%arg0: i32) -> (i32, i32) {
    %c0_i32 = arith.constant 0 : i32
    %c0_i32_0 = arith.constant 0 : i32
    %c0_i32_1 = arith.constant 0 : i32
    return %c0_i32, %c0_i32_0 : i32, i32
  }
  func.func @transform_5(%arg0: i32) -> (i32, i32) {
    %c0_i32 = arith.constant 0 : i32
    %c0_i32_0 = arith.constant 0 : i32
    %c0_i32_1 = arith.constant 0 : i32
    return %c0_i32, %c0_i32_0 : i32, i32
  }
  func.func @transform_6(%arg0: i32) -> (i32, i32) {
    %c0_i32 = arith.constant 0 : i32
    %c0_i32_0 = arith.constant 0 : i32
    %c0_i32_1 = arith.constant 0 : i32
    return %c0_i32, %c0_i32_0 : i32, i32
  }
  func.func @transform_7(%arg0: i32) -> (i32, i32) {
    %c0_i32 = arith.constant 0 : i32
    %c0_i32_0 = arith.constant 0 : i32
    %c0_i32_1 = arith.constant 0 : i32
    return %c0_i32, %c0_i32_0 : i32, i32
  }
  func.func @transform_8(%arg0: i32) -> (i32, i32) {
    %c0_i32 = arith.constant 0 : i32
    %c0_i32_0 = arith.constant 0 : i32
    %c0_i32_1 = arith.constant 0 : i32
    return %c0_i32, %c0_i32_0 : i32, i32
  }
  func.func @transform_9(%arg0: i32) -> (i32, i32) {
    %c0_i32 = arith.constant 0 : i32
    %c0_i32_0 = arith.constant 0 : i32
    %c0_i32_1 = arith.constant 0 : i32
    return %c0_i32, %c0_i32_0 : i32, i32
  }
  func.func @transform_10(%arg0: i32) -> (i32, i32, i32) {
    %c0_i32 = arith.constant 0 : i32
    %c0_i32_0 = arith.constant 0 : i32
    %c0_i32_1 = arith.constant 0 : i32
    return %arg0, %c0_i32, %c0_i32_0 : i32, i32, i32
  }
}

</mosaic_0001>

<llo_original>
// kernel: up_forward.1
$region0: #{up_forward.1}
  #allocation0 [shape = 'u32[]', space=smem, size = 0x4, offset = 0x4, fixed_abs, tag = 'smem constant byte address 0x4 - core index']
  #allocation1 [shape = 'u32[144,128]{1,0:T(1,128)}', space=vmem, size = 0x12000, scoped, tag = 'internal scratch']
  %s0 = inlined_call_operand.vmem [shape: f32[2,64,128], index: 0, kind: input, shape index: {}]
  %s1 = inlined_call_operand.vmem [shape: f32[2,256,32], index: 1, kind: input, shape index: {}]
  %s2 = inlined_call_operand.vmem [shape: f32[256,1], index: 2, kind: input, shape index: {}]
  %s3 = inlined_call_operand.vmem [shape: f32[4,128,32], index: 3, kind: input, shape index: {}]
  %s4 = inlined_call_operand.vmem [shape: f32[1,32], index: 4, kind: input, shape index: {}]
  %s5 = inlined_call_operand.vmem [shape: f32[32,16], index: 5, kind: input, shape index: {}]
  %s6 = inlined_call_operand.vmem [shape: f32[1,16], index: 6, kind: input, shape index: {}]
  %s7 = inlined_call_operand.vmem [shape: f32[32,32], index: 7, kind: input, shape index: {}]
  %s8 = inlined_call_operand.vmem [shape: f32[16,32], index: 8, kind: input, shape index: {}]
  %s9 = inlined_call_operand.vmem [shape: f32[1,32], index: 9, kind: input, shape index: {}]
  %s10 = inlined_call_operand.vmem [shape: f32[2,256,32], index: 10, kind: output, shape index: {}]
  %s11 = sld [smem:[#allocation0]]
  $region73: #{up_forward.1} parent=0
    _
  %s13 = ssub.s32 1, %s11
  %s14 = scalar_select 0, %s13, %s11
  loop: start=0, step=1, limit=4
  $region2: #{up_forward.1} parent=0 // loop_pre_header
    _
  $region3: #{up_forward.1} parent=0 // loop_header
    %s16 = sphi 0, %s20
    %p17 = scmp.ge.s32.totalorder %s16, 4
    %s26 = sphi 0, %s28
    %s29 = sphi 0, %s26
    %s30 = sphi 0, %s29
    %s46 = sphi 0, %s30
    %s52 = sphi 0, %s54
    %s55 = sphi 0, %s52
    %s56 = sphi 0, %s55
    %s72 = sphi 0, %s56
    %s76 = sphi 0, %s76
    %s78 = sphi 0, %s76
    %s79 = sphi 0, %s78
    %s93 = sphi 0, %s79
    %s97 = sphi 0, %s97
    %s99 = sphi 0, %s97
    %s100 = sphi 0, %s99
    %s114 = sphi 0, %s100
    %s118 = sphi 0, %s118
    %s120 = sphi 0, %s118
    %s121 = sphi 0, %s120
    %s135 = sphi 0, %s121
    %s139 = sphi 0, %s139
    %s141 = sphi 0, %s139
    %s142 = sphi 0, %s141
    %s156 = sphi 0, %s142
    %s160 = sphi 0, %s160
    %s162 = sphi 0, %s160
    %s163 = sphi 0, %s162
    %s177 = sphi 0, %s163
    %s181 = sphi 0, %s181
    %s183 = sphi 0, %s181
    %s184 = sphi 0, %s183
    %s198 = sphi 0, %s184
    %s202 = sphi 0, %s202
    %s204 = sphi 0, %s202
    %s205 = sphi 0, %s204
    %s219 = sphi 0, %s205
    %s223 = sphi 0, %s223
    %s225 = sphi 0, %s223
    %s226 = sphi 0, %s225
    %s240 = sphi 0, %s226
    %s246 = sphi 0, %s248
    %s249 = sphi 0, %s246
    %s250 = sphi 0, %s249
    %s266 = sphi 0, %s250
  $region4: #{up_forward.1} parent=0 // loop_header_branch
    %19 = sbr.rel (%p17) target = $region8
  $region5: #{up_forward.1} parent=0 // loop_body
    %s21 = ssub.s32 %s16, 1
    %s22 = ssub.s32 %s16, 2
    %s23 = sadd.s32 %s16, 1
    %s24 = ssub.s32 %s16, %s23
    %p25 = scmp.eq.s32.totalorder %s24, 0
    %s27 = sadd.s32 %s26, 1
    %s28 = scalar_select %p25, %s26, %s27
    %p31 = pneg %p25
    %p32 = scmp.eq.s32.totalorder %s16, 1
    %p33 = por %p31, %p32
    %p34 = scmp.ne.s32.totalorder %s26, %s29
    %p35 = scmp.eq.s32.totalorder %s16, 0
    %p36 = por %p34, %p35
    %p37 = scmp.ne.s32.totalorder %s26, %s29
    %p38 = scmp.eq.s32.totalorder %s21, 1
    %p39 = por %p37, %p38
    %p40 = scmp.ne.s32.totalorder %s29, %s30
    %p41 = scmp.eq.s32.totalorder %s21, 0
    %p42 = por %p40, %p41
    %p43 = scmp.ne.s32.totalorder %s29, %s30
    %p44 = scmp.eq.s32.totalorder %s22, 1
    %p45 = por %p43, %p44
    %p47 = scmp.ne.s32.totalorder %s30, %s46
    %p48 = scmp.eq.s32.totalorder %s22, 0
    %p49 = por %p47, %p48
    %s50 = ssub.s32 %s16, %s23
    %p51 = scmp.eq.s32.totalorder %s50, 0
    %s53 = sadd.s32 %s52, 1
    %s54 = scalar_select %p51, %s52, %s53
    %p57 = pneg %p51
    %p58 = scmp.eq.s32.totalorder %s16, 1
    %p59 = por %p57, %p58
    %p60 = scmp.ne.s32.totalorder %s52, %s55
    %p61 = scmp.eq.s32.totalorder %s16, 0
    %p62 = por %p60, %p61
    %p63 = scmp.ne.s32.totalorder %s52, %s55
    %p64 = scmp.eq.s32.totalorder %s21, 1
    %p65 = por %p63, %p64
    %p66 = scmp.ne.s32.totalorder %s55, %s56
    %p67 = scmp.eq.s32.totalorder %s21, 0
    %p68 = por %p66, %p67
    %p69 = scmp.ne.s32.totalorder %s55, %s56
    %p70 = scmp.eq.s32.totalorder %s22, 1
    %p71 = por %p69, %p70
    %p73 = scmp.ne.s32.totalorder %s56, %s72
    %p74 = scmp.eq.s32.totalorder %s22, 0
    %p75 = por %p73, %p74
    %s77 = sadd.s32 %s76, 1
    %p80 = scmp.eq.s32.totalorder %s16, 1
    %p81 = scmp.ne.s32.totalorder %s76, %s78
    %p82 = scmp.eq.s32.totalorder %s16, 0
    %p83 = por %p81, %p82
    %p84 = scmp.ne.s32.totalorder %s76, %s78
    %p85 = scmp.eq.s32.totalorder %s21, 1
    %p86 = por %p84, %p85
    %p87 = scmp.ne.s32.totalorder %s78, %s79
    %p88 = scmp.eq.s32.totalorder %s21, 0
    %p89 = por %p87, %p88
    %p90 = scmp.ne.s32.totalorder %s78, %s79
    %p91 = scmp.eq.s32.totalorder %s22, 1
    %p92 = por %p90, %p91
    %p94 = scmp.ne.s32.totalorder %s79, %s93
    %p95 = scmp.eq.s32.totalorder %s22, 0
    %p96 = por %p94, %p95
    %s98 = sadd.s32 %s97, 1
    %p101 = scmp.eq.s32.totalorder %s16, 1
    %p102 = scmp.ne.s32.totalorder %s97, %s99
    %p103 = scmp.eq.s32.totalorder %s16, 0
    %p104 = por %p102, %p103
    %p105 = scmp.ne.s32.totalorder %s97, %s99
    %p106 = scmp.eq.s32.totalorder %s21, 1
    %p107 = por %p105, %p106
    %p108 = scmp.ne.s32.totalorder %s99, %s100
    %p109 = scmp.eq.s32.totalorder %s21, 0
    %p110 = por %p108, %p109
    %p111 = scmp.ne.s32.totalorder %s99, %s100
    %p112 = scmp.eq.s32.totalorder %s22, 1
    %p113 = por %p111, %p112
    %p115 = scmp.ne.s32.totalorder %s100, %s114
    %p116 = scmp.eq.s32.totalorder %s22, 0
    %p117 = por %p115, %p116
    %s119 = sadd.s32 %s118, 1
    %p122 = scmp.eq.s32.totalorder %s16, 1
    %p123 = scmp.ne.s32.totalorder %s118, %s120
    %p124 = scmp.eq.s32.totalorder %s16, 0
    %p125 = por %p123, %p124
    %p126 = scmp.ne.s32.totalorder %s118, %s120
    %p127 = scmp.eq.s32.totalorder %s21, 1
    %p128 = por %p126, %p127
    %p129 = scmp.ne.s32.totalorder %s120, %s121
    %p130 = scmp.eq.s32.totalorder %s21, 0
    %p131 = por %p129, %p130
    %p132 = scmp.ne.s32.totalorder %s120, %s121
    %p133 = scmp.eq.s32.totalorder %s22, 1
    %p134 = por %p132, %p133
    %p136 = scmp.ne.s32.totalorder %s121, %s135
    %p137 = scmp.eq.s32.totalorder %s22, 0
    %p138 = por %p136, %p137
    %s140 = sadd.s32 %s139, 1
    %p143 = scmp.eq.s32.totalorder %s16, 1
    %p144 = scmp.ne.s32.totalorder %s139, %s141
    %p145 = scmp.eq.s32.totalorder %s16, 0
    %p146 = por %p144, %p145
    %p147 = scmp.ne.s32.totalorder %s139, %s141
    %p148 = scmp.eq.s32.totalorder %s21, 1
    %p149 = por %p147, %p148
    %p150 = scmp.ne.s32.totalorder %s141, %s142
    %p151 = scmp.eq.s32.totalorder %s21, 0
    %p152 = por %p150, %p151
    %p153 = scmp.ne.s32.totalorder %s141, %s142
    %p154 = scmp.eq.s32.totalorder %s22, 1
    %p155 = por %p153, %p154
    %p157 = scmp.ne.s32.totalorder %s142, %s156
    %p158 = scmp.eq.s32.totalorder %s22, 0
    %p159 = por %p157, %p158
    %s161 = sadd.s32 %s160, 1
    %p164 = scmp.eq.s32.totalorder %s16, 1
    %p165 = scmp.ne.s32.totalorder %s160, %s162
    %p166 = scmp.eq.s32.totalorder %s16, 0
    %p167 = por %p165, %p166
    %p168 = scmp.ne.s32.totalorder %s160, %s162
    %p169 = scmp.eq.s32.totalorder %s21, 1
    %p170 = por %p168, %p169
    %p171 = scmp.ne.s32.totalorder %s162, %s163
    %p172 = scmp.eq.s32.totalorder %s21, 0
    %p173 = por %p171, %p172
    %p174 = scmp.ne.s32.totalorder %s162, %s163
    %p175 = scmp.eq.s32.totalorder %s22, 1
    %p176 = por %p174, %p175
    %p178 = scmp.ne.s32.totalorder %s163, %s177
    %p179 = scmp.eq.s32.totalorder %s22, 0
    %p180 = por %p178, %p179
    %s182 = sadd.s32 %s181, 1
    %p185 = scmp.eq.s32.totalorder %s16, 1
    %p186 = scmp.ne.s32.totalorder %s181, %s183
    %p187 = scmp.eq.s32.totalorder %s16, 0
    %p188 = por %p186, %p187
    %p189 = scmp.ne.s32.totalorder %s181, %s183
    %p190 = scmp.eq.s32.totalorder %s21, 1
    %p191 = por %p189, %p190
    %p192 = scmp.ne.s32.totalorder %s183, %s184
    %p193 = scmp.eq.s32.totalorder %s21, 0
    %p194 = por %p192, %p193
    %p195 = scmp.ne.s32.totalorder %s183, %s184
    %p196 = scmp.eq.s32.totalorder %s22, 1
    %p197 = por %p195, %p196
    %p199 = scmp.ne.s32.totalorder %s184, %s198
    %p200 = scmp.eq.s32.totalorder %s22, 0
    %p201 = por %p199, %p200
    %s203 = sadd.s32 %s202, 1
    %p206 = scmp.eq.s32.totalorder %s16, 1
    %p207 = scmp.ne.s32.totalorder %s202, %s204
    %p208 = scmp.eq.s32.totalorder %s16, 0
    %p209 = por %p207, %p208
    %p210 = scmp.ne.s32.totalorder %s202, %s204
    %p211 = scmp.eq.s32.totalorder %s21, 1
    %p212 = por %p210, %p211
    %p213 = scmp.ne.s32.totalorder %s204, %s205
    %p214 = scmp.eq.s32.totalorder %s21, 0
    %p215 = por %p213, %p214
    %p216 = scmp.ne.s32.totalorder %s204, %s205
    %p217 = scmp.eq.s32.totalorder %s22, 1
    %p218 = por %p216, %p217
    %p220 = scmp.ne.s32.totalorder %s205, %s219
    %p221 = scmp.eq.s32.totalorder %s22, 0
    %p222 = por %p220, %p221
    %s224 = sadd.s32 %s223, 1
    %p227 = scmp.eq.s32.totalorder %s16, 1
    %p228 = scmp.ne.s32.totalorder %s223, %s225
    %p229 = scmp.eq.s32.totalorder %s16, 0
    %p230 = por %p228, %p229
    %p231 = scmp.ne.s32.totalorder %s223, %s225
    %p232 = scmp.eq.s32.totalorder %s21, 1
    %p233 = por %p231, %p232
    %p234 = scmp.ne.s32.totalorder %s225, %s226
    %p235 = scmp.eq.s32.totalorder %s21, 0
    %p236 = por %p234, %p235
    %p237 = scmp.ne.s32.totalorder %s225, %s226
    %p238 = scmp.eq.s32.totalorder %s22, 1
    %p239 = por %p237, %p238
    %p241 = scmp.ne.s32.totalorder %s226, %s240
    %p242 = scmp.eq.s32.totalorder %s22, 0
    %p243 = por %p241, %p242
    %s244 = ssub.s32 %s16, %s23
    %p245 = scmp.eq.s32.totalorder %s244, 0
    %s247 = sadd.s32 %s246, 1
    %s248 = scalar_select %p245, %s246, %s247
    %p251 = pneg %p245
    %p252 = scmp.eq.s32.totalorder %s16, 1
    %p253 = por %p251, %p252
    %p254 = scmp.ne.s32.totalorder %s246, %s249
    %p255 = scmp.eq.s32.totalorder %s16, 0
    %p256 = por %p254, %p255
    %p257 = scmp.ne.s32.totalorder %s246, %s249
    %p258 = scmp.eq.s32.totalorder %s21, 1
    %p259 = por %p257, %p258
    %p260 = scmp.ne.s32.totalorder %s249, %s250
    %p261 = scmp.eq.s32.totalorder %s21, 0
    %p262 = por %p260, %p261
    %p263 = scmp.ne.s32.totalorder %s249, %s250
    %p264 = scmp.eq.s32.totalorder %s22, 1
    %p265 = por %p263, %p264
    %p267 = scmp.ne.s32.totalorder %s250, %s266
    %p268 = scmp.eq.s32.totalorder %s22, 0
    %p269 = por %p267, %p268
    %p270 = scmp.le.s32.totalorder 1, %s16
    %p271 = scmp.lt.s32.totalorder %s16, 3
    %p272 = pnand %p270, %p271
    %p273 = pneg %p272
    // Predicated region
    $region9: #{up_forward.1} parent=5 // pred_check
      _
    $region10: #{up_forward.1} parent=5 // pred_check_branch
      %275 = sbr.rel (%p272) target = $region12
    $region11: #{up_forward.1} parent=5 // pred_region
      %s276 = ssub.s32 %s16, 1
      // Predicated region
      $region13: #{up_forward.1} parent=11 // pred_check
        %p277 = pneg %p89
      $region14: #{up_forward.1} parent=11 // pred_check_branch
        %279 = sbr.rel (%p277) target = $region16
      $region15: #{up_forward.1} parent=11 // pred_region
        _
      $region16: #{up_forward.1} parent=11 // pred_fallthru
        _
      // Predicated region
      $region17: #{up_forward.1} parent=11 // pred_check
        %p280 = pneg %p110
      $region18: #{up_forward.1} parent=11 // pred_check_branch
        %282 = sbr.rel (%p280) target = $region20
      $region19: #{up_forward.1} parent=11 // pred_region
        _
      $region20: #{up_forward.1} parent=11 // pred_fallthru
        _
      // Predicated region
      $region21: #{up_forward.1} parent=11 // pred_check
        %p283 = pneg %p131
      $region22: #{up_forward.1} parent=11 // pred_check_branch
        %285 = sbr.rel (%p283) target = $region24
      $region23: #{up_forward.1} parent=11 // pred_region
        _
      $region24: #{up_forward.1} parent=11 // pred_fallthru
        _
      // Predicated region
      $region25: #{up_forward.1} parent=11 // pred_check
        %p286 = pneg %p152
      $region26: #{up_forward.1} parent=11 // pred_check_branch
        %288 = sbr.rel (%p286) target = $region28
      $region27: #{up_forward.1} parent=11 // pred_region
        _
      $region28: #{up_forward.1} parent=11 // pred_fallthru
        _
      // Predicated region
      $region29: #{up_forward.1} parent=11 // pred_check
        %p289 = pneg %p173
      $region30: #{up_forward.1} parent=11 // pred_check_branch
        %291 = sbr.rel (%p289) target = $region32
      $region31: #{up_forward.1} parent=11 // pred_region
        _
      $region32: #{up_forward.1} parent=11 // pred_fallthru
        _
      // Predicated region
      $region33: #{up_forward.1} parent=11 // pred_check
        %p292 = pneg %p194
      $region34: #{up_forward.1} parent=11 // pred_check_branch
        %294 = sbr.rel (%p292) target = $region36
      $region35: #{up_forward.1} parent=11 // pred_region
        _
      $region36: #{up_forward.1} parent=11 // pred_fallthru
        _
      // Predicated region
      $region37: #{up_forward.1} parent=11 // pred_check
        %p295 = pneg %p215
      $region38: #{up_forward.1} parent=11 // pred_check_branch
        %297 = sbr.rel (%p295) target = $region40
      $region39: #{up_forward.1} parent=11 // pred_region
        _
      $region40: #{up_forward.1} parent=11 // pred_fallthru
        _
      // Predicated region
      $region41: #{up_forward.1} parent=11 // pred_check
        %p298 = pneg %p236
      $region42: #{up_forward.1} parent=11 // pred_check_branch
        %300 = sbr.rel (%p298) target = $region44
      $region43: #{up_forward.1} parent=11 // pred_region
        _
      $region44: #{up_forward.1} parent=11 // pred_fallthru
        _
    $region12: #{up_forward.1} parent=5 // pred_fallthru
      _
    %p301 = scmp.lt.s32.totalorder %s16, 2
    // Predicated region
    $region45: #{up_forward.1} parent=5 // pred_check
      %p302 = pneg %p301
    $region46: #{up_forward.1} parent=5 // pred_check_branch
      %304 = sbr.rel (%p302) target = $region48
    $region47: #{up_forward.1} parent=5 // pred_region
      // Predicated region
      $region49: #{up_forward.1} parent=47 // pred_check
        %p305 = pneg %p36
      $region50: #{up_forward.1} parent=47 // pred_check_branch
        %307 = sbr.rel (%p305) target = $region52
      $region51: #{up_forward.1} parent=47 // pred_region
        %p308 = scmp.lt.s32.totalorder %s16, 1
        %s309 = scalar_select %p308, %s16, 1
        %s310 = smul.addr %s309, 8
        %s311 = smul.addr %s310, 8
        %s312 = scalar_lea.vmem %s0, %s311
      $region52: #{up_forward.1} parent=47 // pred_fallthru
        _
      // Predicated region
      $region53: #{up_forward.1} parent=47 // pred_check
        %p313 = pneg %p62
      $region54: #{up_forward.1} parent=47 // pred_check_branch
        %315 = sbr.rel (%p313) target = $region56
      $region55: #{up_forward.1} parent=47 // pred_region
        %p316 = scmp.lt.s32.totalorder %s16, 1
        %s317 = scalar_select %p316, %s16, 1
        %s318 = smul.addr %s317, 32
        %s319 = smul.addr %s318, 8
        %s320 = scalar_lea.vmem %s1, %s319
      $region56: #{up_forward.1} parent=47 // pred_fallthru
        _
    $region48: #{up_forward.1} parent=5 // pred_fallthru
      _
    %p321 = scmp.le.s32.totalorder 1, %s16
    %p322 = scmp.lt.s32.totalorder %s16, 3
    %p323 = pnand %p321, %p322
    %p324 = pneg %p323
    // Predicated region
    $region57: #{up_forward.1} parent=5 // pred_check
      _
    $region58: #{up_forward.1} parent=5 // pred_check_branch
      %326 = sbr.rel (%p323) target = $region60
    $region59: #{up_forward.1} parent=5 // pred_region
      %s327 = ssub.s32 %s16, 1
      %p328 = scmp.lt.s32.totalorder %s21, 1
      %s329 = scalar_select %p328, %s21, 1
      %s330 = smul.addr %s329, 8
      %s331 = smul.addr %s330, 8
      %s332 = scalar_lea.vmem %s0, %s331
      %p333 = pneg %p42
      %p334 = pneg %p39
      %p335 = scmp.lt.s32.totalorder %s21, 1
      %s336 = scalar_select %p335, %s21, 1
      %s337 = smul.addr %s336, 32
      %s338 = smul.addr %s337, 8
      %s339 = scalar_lea.vmem %s1, %s338
      %p340 = pneg %p68
      %p341 = pneg %p65
      %p342 = pneg %p89
      %p343 = pneg %p86
      %p344 = pneg %p110
      %p345 = pneg %p107
      %p346 = pneg %p131
      %p347 = pneg %p128
      %p348 = pneg %p152
      %p349 = pneg %p149
      %p350 = pneg %p173
      %p351 = pneg %p170
      %p352 = pneg %p194
      %p353 = pneg %p191
      %p354 = pneg %p215
      %p355 = pneg %p212
      %p356 = pneg %p236
      %p357 = pneg %p233
      %p358 = pneg %p262
      %p359 = pneg %p259
      %p360 = scmp.lt.s32.totalorder %s21, 1
      %s361 = scalar_select %p360, %s21, 1
      %s362 = smul.addr %s361, 32
      %s363 = smul.addr %s362, 8
      %s364 = scalar_lea.vmem %s10, %s363
      %p365 = scmp.lt.s32.totalorder %s21, 1
      %s366 = scalar_select %p365, %s21, 1
      %s367 = smul.addr %s366, 8
      %s368 = smul.addr %s367, 8
      %s369 = scalar_lea.vmem %s0, %s368
      %p370 = scmp.lt.s32.totalorder %s21, 1
      %s371 = scalar_select %p370, %s21, 1
      %s372 = smul.addr %s371, 32
      %s373 = smul.addr %s372, 8
      %s374 = scalar_lea.vmem %s1, %s373
      %p375 = scmp.lt.s32.totalorder %s21, 1
      %s376 = scalar_select %p375, %s21, 1
      %s377 = smul.addr %s376, 32
      %s378 = smul.addr %s377, 8
      %s379 = scalar_lea.vmem %s10, %s378
      %v380 = vld [vmem:[%s369] sm:$0xff]
      %v381 = vld [vmem:[%s369 + $0x8] sm:$0xff]
      %v382 = vld [vmem:[%s369 + $0x10] sm:$0xff]
      %v383 = vld [vmem:[%s369 + $0x18] sm:$0xff]
      %v384 = vld [vmem:[%s369 + $0x20] sm:$0xff]
      %v385 = vld [vmem:[%s369 + $0x28] sm:$0xff]
      %v386 = vld [vmem:[%s369 + $0x30] sm:$0xff]
      %v387 = vld [vmem:[%s369 + $0x38] sm:$0xff]
      %v388 = vld [vmem:[%s3] sm:$0xff]
      %v389 = vld [vmem:[%s3 + $0x8] sm:$0xff]
      %v390 = vld [vmem:[%s3 + $0x10] sm:$0xff]
      %v391 = vld [vmem:[%s3 + $0x18] sm:$0xff]
      %v392 = vld [vmem:[%s3 + $0x20] sm:$0xff]
      %v393 = vld [vmem:[%s3 + $0x28] sm:$0xff]
      %v394 = vld [vmem:[%s3 + $0x30] sm:$0xff]
      %v395 = vld [vmem:[%s3 + $0x38] sm:$0xff]
      %v396 = vld [vmem:[%s3 + $0x40] sm:$0xff]
      %v397 = vld [vmem:[%s3 + $0x48] sm:$0xff]
      %v398 = vld [vmem:[%s3 + $0x50] sm:$0xff]
      %v399 = vld [vmem:[%s3 + $0x58] sm:$0xff]
      %v400 = vld [vmem:[%s3 + $0x60] sm:$0xff]
      %v401 = vld [vmem:[%s3 + $0x68] sm:$0xff]
      %v402 = vld [vmem:[%s3 + $0x70] sm:$0xff]
      %v403 = vld [vmem:[%s3 + $0x78] sm:$0xff]
      %404 = vmatprep.subr.mxu0 0.0
      %405 = vmatpush1.msra.mxu0 %v388
      %406 = vmatprep.subr.mxu0 0.0
      %407 = vmatpush1.msra.mxu0 %v389
      %408 = vmatprep.subr.mxu0 0.0
      %409 = vmatpush1.msra.mxu0 %v390
      %410 = vmatprep.subr.mxu0 0.0
      %411 = vmatpush1.msra.mxu0 %v391
      %412 = vmatprep.subr.mxu0 0.0
      %413 = vmatpush1.msra.mxu0 %v392
      %414 = vmatprep.subr.mxu0 0.0
      %415 = vmatpush1.msra.mxu0 %v393
      %416 = vmatprep.subr.mxu0 0.0
      %417 = vmatpush1.msra.mxu0 %v394
      %418 = vmatprep.subr.mxu0 0.0
      %419 = vmatpush1.msra.mxu0 %v395
      %420 = vmatprep.subr.mxu0 0.0
      %421 = vmatpush1.msra.mxu0 %v396
      %422 = vmatprep.subr.mxu0 0.0
      %423 = vmatpush1.msra.mxu0 %v397
      %424 = vmatprep.subr.mxu0 0.0
      %425 = vmatpush1.msra.mxu0 %v398
      %426 = vmatprep.subr.mxu0 0.0
      %427 = vmatpush1.msra.mxu0 %v399
      %428 = vmatprep.subr.mxu0 0.0
      %429 = vmatpush1.msra.mxu0 %v400
      %430 = vmatprep.subr.mxu0 0.0
      %431 = vmatpush1.msra.mxu0 %v401
      %432 = vmatprep.subr.mxu0 0.0
      %433 = vmatpush1.msra.mxu0 %v402
      %434 = vmatprep.subr.mxu0 0.0
      %435 = vmatpush1.msra.mxu0 %v403
      %436 = vmatprep.subr.mxu0 0.0
      %437 = vmatpush1.msra.mxu0 0.0
      %438 = vmatprep.subr.mxu0 0.0
      %439 = vmatpush1.msra.mxu0 0.0
      %440 = vmatprep.subr.mxu0 0.0
      %441 = vmatpush1.msra.mxu0 0.0
      %442 = vmatprep.subr.mxu0 0.0
      %443 = vmatpush1.msra.mxu0 0.0
      %444 = vmatprep.subr.mxu0 0.0
      %445 = vmatpush1.msra.mxu0 0.0
      %446 = vmatprep.subr.mxu0 0.0
      %447 = vmatpush1.msra.mxu0 0.0
      %448 = vmatprep.subr.mxu0 0.0
      %449 = vmatpush1.msra.mxu0 0.0
      %450 = vmatprep.subr.mxu0 0.0
      %451 = vmatpush1.msra.mxu0 0.0
      %452 = vmatprep.subr.mxu0 0.0
      %453 = vmatpush1.msra.mxu0 0.0
      %454 = vmatprep.subr.mxu0 0.0
      %455 = vmatpush1.msra.mxu0 0.0
      %456 = vmatprep.subr.mxu0 0.0
      %457 = vmatpush1.msra.mxu0 0.0
      %458 = vmatprep.subr.mxu0 0.0
      %459 = vmatpush1.msra.mxu0 0.0
      %460 = vmatprep.subr.mxu0 0.0
      %461 = vmatpush1.msra.mxu0 0.0
      %462 = vmatprep.subr.mxu0 0.0
      %463 = vmatpush1.msra.mxu0 0.0
      %464 = vmatprep.subr.mxu0 0.0
      %465 = vmatpush1.msra.mxu0 0.0
      %466 = vmatprep.subr.mxu0 0.0
      %467 = vmatpush1.msra.mxu0 0.0
      %468 = vmatprep.mubr.f32.mxu0 0.0
      %469 = vmatmul.mubr.f32.gmra.mrb[0].mxu0 %v380
      %v470 = vpop.f32.mrb[0].mxu0
      %v471 = vadd.f32 0.0, %v470
      %v472 = vpop.f32.mrb[0].mxu0
      %473 = vmatprep.mubr.f32.mxu0 0.0
      %474 = vmatmul.mubr.f32.gmra.mrb[0].mxu0 %v381
      %v475 = vpop.f32.mrb[0].mxu0
      %v476 = vadd.f32 0.0, %v475
      %v477 = vpop.f32.mrb[0].mxu0
      %478 = vmatprep.mubr.f32.mxu0 0.0
      %479 = vmatmul.mubr.f32.gmra.mrb[0].mxu0 %v382
      %v480 = vpop.f32.mrb[0].mxu0
      %v481 = vadd.f32 0.0, %v480
      %v482 = vpop.f32.mrb[0].mxu0
      %483 = vmatprep.mubr.f32.mxu0 0.0
      %484 = vmatmul.mubr.f32.gmra.mrb[0].mxu0 %v383
      %v485 = vpop.f32.mrb[0].mxu0
      %v486 = vadd.f32 0.0, %v485
      %v487 = vpop.f32.mrb[0].mxu0
      %488 = vmatprep.mubr.f32.mxu0 0.0
      %489 = vmatmul.mubr.f32.gmra.mrb[0].mxu0 %v384
      %v490 = vpop.f32.mrb[0].mxu0
      %v491 = vadd.f32 0.0, %v490
      %v492 = vpop.f32.mrb[0].mxu0
      %493 = vmatprep.mubr.f32.mxu0 0.0
      %494 = vmatmul.mubr.f32.gmra.mrb[0].mxu0 %v385
      %v495 = vpop.f32.mrb[0].mxu0
      %v496 = vadd.f32 0.0, %v495
      %v497 = vpop.f32.mrb[0].mxu0
      %498 = vmatprep.mubr.f32.mxu0 0.0
      %499 = vmatmul.mubr.f32.gmra.mrb[0].mxu0 %v386
      %v500 = vpop.f32.mrb[0].mxu0
      %v501 = vadd.f32 0.0, %v500
      %v502 = vpop.f32.mrb[0].mxu0
      %503 = vmatprep.mubr.f32.mxu0 0.0
      %504 = vmatmul.mubr.f32.gmra.mrb[0].mxu0 %v387
      %v505 = vpop.f32.mrb[0].mxu0
      %v506 = vadd.f32 0.0, %v505
      %v507 = vpop.f32.mrb[0].mxu0
      %508 = vdwg.mxu0
      %s509 = scalar_lea.vmem %s3, 128
      %v510 = vld [vmem:[%s509] sm:$0xff]
      %v511 = vld [vmem:[%s509 + $0x8] sm:$0xff]
      %v512 = vld [vmem:[%s509 + $0x10] sm:$0xff]
      %v513 = vld [vmem:[%s509 + $0x18] sm:$0xff]
      %v514 = vld [vmem:[%s509 + $0x20] sm:$0xff]
      %v515 = vld [vmem:[%s509 + $0x28] sm:$0xff]
      %v516 = vld [vmem:[%s509 + $0x30] sm:$0xff]
      %v517 = vld [vmem:[%s509 + $0x38] sm:$0xff]
      %v518 = vld [vmem:[%s509 + $0x40] sm:$0xff]
      %v519 = vld [vmem:[%s509 + $0x48] sm:$0xff]
      %v520 = vld [vmem:[%s509 + $0x50] sm:$0xff]
      %v521 = vld [vmem:[%s509 + $0x58] sm:$0xff]
      %v522 = vld [vmem:[%s509 + $0x60] sm:$0xff]
      %v523 = vld [vmem:[%s509 + $0x68] sm:$0xff]
      %v524 = vld [vmem:[%s509 + $0x70] sm:$0xff]
      %v525 = vld [vmem:[%s509 + $0x78] sm:$0xff]
      %526 = vmatprep.subr.mxu0 0.0
      %527 = vmatpush1.msra.mxu0 %v510
      %528 = vmatprep.subr.mxu0 0.0
      %529 = vmatpush1.msra.mxu0 %v511
      %530 = vmatprep.subr.mxu0 0.0
      %531 = vmatpush1.msra.mxu0 %v512
      %532 = vmatprep.subr.mxu0 0.0
      %533 = vmatpush1.msra.mxu0 %v513
      %534 = vmatprep.subr.mxu0 0.0
      %535 = vmatpush1.msra.mxu0 %v514
      %536 = vmatprep.subr.mxu0 0.0
      %537 = vmatpush1.msra.mxu0 %v515
      %538 = vmatprep.subr.mxu0 0.0
      %539 = vmatpush1.msra.mxu0 %v516
      %540 = vmatprep.subr.mxu0 0.0
      %541 = vmatpush1.msra.mxu0 %v517
      %542 = vmatprep.subr.mxu0 0.0
      %543 = vmatpush1.msra.mxu0 %v518
      %544 = vmatprep.subr.mxu0 0.0
      %545 = vmatpush1.msra.mxu0 %v519
      %546 = vmatprep.subr.mxu0 0.0
      %547 = vmatpush1.msra.mxu0 %v520
      %548 = vmatprep.subr.mxu0 0.0
      %549 = vmatpush1.msra.mxu0 %v521
      %550 = vmatprep.subr.mxu0 0.0
      %551 = vmatpush1.msra.mxu0 %v522
      %552 = vmatprep.subr.mxu0 0.0
      %553 = vmatpush1.msra.mxu0 %v523
      %554 = vmatprep.subr.mxu0 0.0
      %555 = vmatpush1.msra.mxu0 %v524
      %556 = vmatprep.subr.mxu0 0.0
      %557 = vmatpush1.msra.mxu0 %v525
      %558 = vmatprep.subr.mxu0 0.0
      %559 = vmatpush1.msra.mxu0 0.0
      %560 = vmatprep.subr.mxu0 0.0
      %561 = vmatpush1.msra.mxu0 0.0
      %562 = vmatprep.subr.mxu0 0.0
      %563 = vmatpush1.msra.mxu0 0.0
      %564 = vmatprep.subr.mxu0 0.0
      %565 = vmatpush1.msra.mxu0 0.0
      %566 = vmatprep.subr.mxu0 0.0
      %567 = vmatpush1.msra.mxu0 0.0
      %568 = vmatprep.subr.mxu0 0.0
      %569 = vmatpush1.msra.mxu0 0.0
      %570 = vmatprep.subr.mxu0 0.0
      %571 = vmatpush1.msra.mxu0 0.0
      %572 = vmatprep.subr.mxu0 0.0
      %573 = vmatpush1.msra.mxu0 0.0
      %574 = vmatprep.subr.mxu0 0.0
      %575 = vmatpush1.msra.mxu0 0.0
      %576 = vmatprep.subr.mxu0 0.0
      %577 = vmatpush1.msra.mxu0 0.0
      %578 = vmatprep.subr.mxu0 0.0
      %579 = vmatpush1.msra.mxu0 0.0
      %580 = vmatprep.subr.mxu0 0.0
      %581 = vmatpush1.msra.mxu0 0.0
      %582 = vmatprep.subr.mxu0 0.0
      %583 = vmatpush1.msra.mxu0 0.0
      %584 = vmatprep.subr.mxu0 0.0
      %585 = vmatpush1.msra.mxu0 0.0
      %586 = vmatprep.subr.mxu0 0.0
      %587 = vmatpush1.msra.mxu0 0.0
      %588 = vmatprep.subr.mxu0 0.0
      %589 = vmatpush1.msra.mxu0 0.0
      %590 = vmatprep.mubr.f32.mxu0 0.0
      %591 = vmatmul.mubr.f32.gmra.mrb[0].mxu0 %v380
      %v592 = vpop.f32.mrb[0].mxu0
      %v593 = vadd.f32 0.0, %v592
      %v594 = vpop.f32.mrb[0].mxu0
      %595 = vmatprep.mubr.f32.mxu0 0.0
      %596 = vmatmul.mubr.f32.gmra.mrb[0].mxu0 %v381
      %v597 = vpop.f32.mrb[0].mxu0
      %v598 = vadd.f32 0.0, %v597
      %v599 = vpop.f32.mrb[0].mxu0
      %600 = vmatprep.mubr.f32.mxu0 0.0
      %601 = vmatmul.mubr.f32.gmra.mrb[0].mxu0 %v382
      %v602 = vpop.f32.mrb[0].mxu0
      %v603 = vadd.f32 0.0, %v602
      %v604 = vpop.f32.mrb[0].mxu0
      %605 = vmatprep.mubr.f32.mxu0 0.0
      %606 = vmatmul.mubr.f32.gmra.mrb[0].mxu0 %v383
      %v607 = vpop.f32.mrb[0].mxu0
      %v608 = vadd.f32 0.0, %v607
      %v609 = vpop.f32.mrb[0].mxu0
      %610 = vmatprep.mubr.f32.mxu0 0.0
      %611 = vmatmul.mubr.f32.gmra.mrb[0].mxu0 %v384
      %v612 = vpop.f32.mrb[0].mxu0
      %v613 = vadd.f32 0.0, %v612
      %v614 = vpop.f32.mrb[0].mxu0
      %615 = vmatprep.mubr.f32.mxu0 0.0
      %616 = vmatmul.mubr.f32.gmra.mrb[0].mxu0 %v385
      %v617 = vpop.f32.mrb[0].mxu0
      %v618 = vadd.f32 0.0, %v617
      %v619 = vpop.f32.mrb[0].mxu0
      %620 = vmatprep.mubr.f32.mxu0 0.0
      %621 = vmatmul.mubr.f32.gmra.mrb[0].mxu0 %v386
      %v622 = vpop.f32.mrb[0].mxu0
      %v623 = vadd.f32 0.0, %v622
      %v624 = vpop.f32.mrb[0].mxu0
      %625 = vmatprep.mubr.f32.mxu0 0.0
      %626 = vmatmul.mubr.f32.gmra.mrb[0].mxu0 %v387
      %v627 = vpop.f32.mrb[0].mxu0
      %v628 = vadd.f32 0.0, %v627
      %v629 = vpop.f32.mrb[0].mxu0
      %630 = vdwg.mxu0
      %s631 = scalar_lea.vmem %s3, 256
      %v632 = vld [vmem:[%s631] sm:$0xff]
      %v633 = vld [vmem:[%s631 + $0x8] sm:$0xff]
      %v634 = vld [vmem:[%s631 + $0x10] sm:$0xff]
      %v635 = vld [vmem:[%s631 + $0x18] sm:$0xff]
      %v636 = vld [vmem:[%s631 + $0x20] sm:$0xff]
      %v637 = vld [vmem:[%s631 + $0x28] sm:$0xff]
      %v638 = vld [vmem:[%s631 + $0x30] sm:$0xff]
      %v639 = vld [vmem:[%s631 + $0x38] sm:$0xff]
      %v640 = vld [vmem:[%s631 + $0x40] sm:$0xff]
      %v641 = vld [vmem:[%s631 + $0x48] sm:$0xff]
      %v642 = vld [vmem:[%s631 + $0x50] sm:$0xff]
      %v643 = vld [vmem:[%s631 + $0x58] sm:$0xff]
      %v644 = vld [vmem:[%s631 + $0x60] sm:$0xff]
      %v645 = vld [vmem:[%s631 + $0x68] sm:$0xff]
      %v646 = vld [vmem:[%s631 + $0x70] sm:$0xff]
      %v647 = vld [vmem:[%s631 + $0x78] sm:$0xff]
      %648 = vmatprep.subr.mxu0 0.0
      %649 = vmatpush1.msra.mxu0 %v632
      %650 = vmatprep.subr.mxu0 0.0
      %651 = vmatpush1.msra.mxu0 %v633
      %652 = vmatprep.subr.mxu0 0.0
      %653 = vmatpush1.msra.mxu0 %v634
      %654 = vmatprep.subr.mxu0 0.0
      %655 = vmatpush1.msra.mxu0 %v635
      %656 = vmatprep.subr.mxu0 0.0
      %657 = vmatpush1.msra.mxu0 %v636
      %658 = vmatprep.subr.mxu0 0.0
      %659 = vmatpush1.msra.mxu0 %v637
      %660 = vmatprep.subr.mxu0 0.0
      %661 = vmatpush1.msra.mxu0 %v638
      %662 = vmatprep.subr.mxu0 0.0
      %663 = vmatpush1.msra.mxu0 %v639
      %664 = vmatprep.subr.mxu0 0.0
      %665 = vmatpush1.msra.mxu0 %v640
      %666 = vmatprep.subr.mxu0 0.0
      %667 = vmatpush1.msra.mxu0 %v641
      %668 = vmatprep.subr.mxu0 0.0
      %669 = vmatpush1.msra.mxu0 %v642
      %670 = vmatprep.subr.mxu0 0.0
      %671 = vmatpush1.msra.mxu0 %v643
      %672 = vmatprep.subr.mxu0 0.0
      %673 = vmatpush1.msra.mxu0 %v644
      %674 = vmatprep.subr.mxu0 0.0
      %675 = vmatpush1.msra.mxu0 %v645
      %676 = vmatprep.subr.mxu0 0.0
      %677 = vmatpush1.msra.mxu0 %v646
      %678 = vmatprep.subr.mxu0 0.0
      %679 = vmatpush1.msra.mxu0 %v647
      %680 = vmatprep.subr.mxu0 0.0
      %681 = vmatpush1.msra.mxu0 0.0
      %682 = vmatprep.subr.mxu0 0.0
      %683 = vmatpush1.msra.mxu0 0.0
      %684 = vmatprep.subr.mxu0 0.0
      %685 = vmatpush1.msra.mxu0 0.0
      %686 = vmatprep.subr.mxu0 0.0
      %687 = vmatpush1.msra.mxu0 0.0
      %688 = vmatprep.subr.mxu0 0.0
      %689 = vmatpush1.msra.mxu0 0.0
      %690 = vmatprep.subr.mxu0 0.0
      %691 = vmatpush1.msra.mxu0 0.0
      %692 = vmatprep.subr.mxu0 0.0
      %693 = vmatpush1.msra.mxu0 0.0
      %694 = vmatprep.subr.mxu0 0.0
      %695 = vmatpush1.msra.mxu0 0.0
      %696 = vmatprep.subr.mxu0 0.0
      %697 = vmatpush1.msra.mxu0 0.0
      %698 = vmatprep.subr.mxu0 0.0
      %699 = vmatpush1.msra.mxu0 0.0
      %700 = vmatprep.subr.mxu0 0.0
      %701 = vmatpush1.msra.mxu0 0.0
      %702 = vmatprep.subr.mxu0 0.0
      %703 = vmatpush1.msra.mxu0 0.0
      %704 = vmatprep.subr.mxu0 0.0
      %705 = vmatpush1.msra.mxu0 0.0
      %706 = vmatprep.subr.mxu0 0.0
      %707 = vmatpush1.msra.mxu0 0.0
      %708 = vmatprep.subr.mxu0 0.0
      %709 = vmatpush1.msra.mxu0 0.0
      %710 = vmatprep.subr.mxu0 0.0
      %711 = vmatpush1.msra.mxu0 0.0
      %712 = vmatprep.mubr.f32.mxu0 0.0
      %713 = vmatmul.mubr.f32.gmra.mrb[0].mxu0 %v380
      %v714 = vpop.f32.mrb[0].mxu0
      %v715 = vadd.f32 0.0, %v714
      %v716 = vpop.f32.mrb[0].mxu0
      %717 = vmatprep.mubr.f32.mxu0 0.0
      %718 = vmatmul.mubr.f32.gmra.mrb[0].mxu0 %v381
      %v719 = vpop.f32.mrb[0].mxu0
      %v720 = vadd.f32 0.0, %v719
      %v721 = vpop.f32.mrb[0].mxu0
      %722 = vmatprep.mubr.f32.mxu0 0.0
      %723 = vmatmul.mubr.f32.gmra.mrb[0].mxu0 %v382
      %v724 = vpop.f32.mrb[0].mxu0
      %v725 = vadd.f32 0.0, %v724
      %v726 = vpop.f32.mrb[0].mxu0
      %727 = vmatprep.mubr.f32.mxu0 0.0
      %728 = vmatmul.mubr.f32.gmra.mrb[0].mxu0 %v383
      %v729 = vpop.f32.mrb[0].mxu0
      %v730 = vadd.f32 0.0, %v729
      %v731 = vpop.f32.mrb[0].mxu0
      %732 = vmatprep.mubr.f32.mxu0 0.0
      %733 = vmatmul.mubr.f32.gmra.mrb[0].mxu0 %v384
      %v734 = vpop.f32.mrb[0].mxu0
      %v735 = vadd.f32 0.0, %v734
      %v736 = vpop.f32.mrb[0].mxu0
      %737 = vmatprep.mubr.f32.mxu0 0.0
      %738 = vmatmul.mubr.f32.gmra.mrb[0].mxu0 %v385
      %v739 = vpop.f32.mrb[0].mxu0
      %v740 = vadd.f32 0.0, %v739
      %v741 = vpop.f32.mrb[0].mxu0
      %742 = vmatprep.mubr.f32.mxu0 0.0
      %743 = vmatmul.mubr.f32.gmra.mrb[0].mxu0 %v386
      %v744 = vpop.f32.mrb[0].mxu0
      %v745 = vadd.f32 0.0, %v744
      %v746 = vpop.f32.mrb[0].mxu0
      %747 = vmatprep.mubr.f32.mxu0 0.0
      %748 = vmatmul.mubr.f32.gmra.mrb[0].mxu0 %v387
      %v749 = vpop.f32.mrb[0].mxu0
      %v750 = vadd.f32 0.0, %v749
      %v751 = vpop.f32.mrb[0].mxu0
      %752 = vdwg.mxu0
      %s753 = scalar_lea.vmem %s3, 384
      %v754 = vld [vmem:[%s753] sm:$0xff]
      %v755 = vld [vmem:[%s753 + $0x8] sm:$0xff]
      %v756 = vld [vmem:[%s753 + $0x10] sm:$0xff]
      %v757 = vld [vmem:[%s753 + $0x18] sm:$0xff]
      %v758 = vld [vmem:[%s753 + $0x20] sm:$0xff]
      %v759 = vld [vmem:[%s753 + $0x28] sm:$0xff]
      %v760 = vld [vmem:[%s753 + $0x30] sm:$0xff]
      %v761 = vld [vmem:[%s753 + $0x38] sm:$0xff]
      %v762 = vld [vmem:[%s753 + $0x40] sm:$0xff]
      %v763 = vld [vmem:[%s753 + $0x48] sm:$0xff]
      %v764 = vld [vmem:[%s753 + $0x50] sm:$0xff]
      %v765 = vld [vmem:[%s753 + $0x58] sm:$0xff]
      %v766 = vld [vmem:[%s753 + $0x60] sm:$0xff]
      %v767 = vld [vmem:[%s753 + $0x68] sm:$0xff]
      %v768 = vld [vmem:[%s753 + $0x70] sm:$0xff]
      %v769 = vld [vmem:[%s753 + $0x78] sm:$0xff]
      %770 = vmatprep.subr.mxu0 0.0
      %771 = vmatpush1.msra.mxu0 %v754
      %772 = vmatprep.subr.mxu0 0.0
      %773 = vmatpush1.msra.mxu0 %v755
      %774 = vmatprep.subr.mxu0 0.0
      %775 = vmatpush1.msra.mxu0 %v756
      %776 = vmatprep.subr.mxu0 0.0
      %777 = vmatpush1.msra.mxu0 %v757
      %778 = vmatprep.subr.mxu0 0.0
      %779 = vmatpush1.msra.mxu0 %v758
      %780 = vmatprep.subr.mxu0 0.0
      %781 = vmatpush1.msra.mxu0 %v759
      %782 = vmatprep.subr.mxu0 0.0
      %783 = vmatpush1.msra.mxu0 %v760
      %784 = vmatprep.subr.mxu0 0.0
      %785 = vmatpush1.msra.mxu0 %v761
      %786 = vmatprep.subr.mxu0 0.0
      %787 = vmatpush1.msra.mxu0 %v762
      %788 = vmatprep.subr.mxu0 0.0
      %789 = vmatpush1.msra.mxu0 %v763
      %790 = vmatprep.subr.mxu0 0.0
      %791 = vmatpush1.msra.mxu0 %v764
      %792 = vmatprep.subr.mxu0 0.0
      %793 = vmatpush1.msra.mxu0 %v765
      %794 = vmatprep.subr.mxu0 0.0
      %795 = vmatpush1.msra.mxu0 %v766
      %796 = vmatprep.subr.mxu0 0.0
      %797 = vmatpush1.msra.mxu0 %v767
      %798 = vmatprep.subr.mxu0 0.0
      %799 = vmatpush1.msra.mxu0 %v768
      %800 = vmatprep.subr.mxu0 0.0
      %801 = vmatpush1.msra.mxu0 %v769
      %802 = vmatprep.subr.mxu0 0.0
      %803 = vmatpush1.msra.mxu0 0.0
      %804 = vmatprep.subr.mxu0 0.0
      %805 = vmatpush1.msra.mxu0 0.0
      %806 = vmatprep.subr.mxu0 0.0
      %807 = vmatpush1.msra.mxu0 0.0
      %808 = vmatprep.subr.mxu0 0.0
      %809 = vmatpush1.msra.mxu0 0.0
      %810 = vmatprep.subr.mxu0 0.0
      %811 = vmatpush1.msra.mxu0 0.0
      %812 = vmatprep.subr.mxu0 0.0
      %813 = vmatpush1.msra.mxu0 0.0
      %814 = vmatprep.subr.mxu0 0.0
      %815 = vmatpush1.msra.mxu0 0.0
      %816 = vmatprep.subr.mxu0 0.0
      %817 = vmatpush1.msra.mxu0 0.0
      %818 = vmatprep.subr.mxu0 0.0
      %819 = vmatpush1.msra.mxu0 0.0
      %820 = vmatprep.subr.mxu0 0.0
      %821 = vmatpush1.msra.mxu0 0.0
      %822 = vmatprep.subr.mxu0 0.0
      %823 = vmatpush1.msra.mxu0 0.0
      %824 = vmatprep.subr.mxu0 0.0
      %825 = vmatpush1.msra.mxu0 0.0
      %826 = vmatprep.subr.mxu0 0.0
      %827 = vmatpush1.msra.mxu0 0.0
      %828 = vmatprep.subr.mxu0 0.0
      %829 = vmatpush1.msra.mxu0 0.0
      %830 = vmatprep.subr.mxu0 0.0
      %831 = vmatpush1.msra.mxu0 0.0
      %832 = vmatprep.subr.mxu0 0.0
      %833 = vmatpush1.msra.mxu0 0.0
      %834 = vmatprep.mubr.f32.mxu0 0.0
      %835 = vmatmul.mubr.f32.gmra.mrb[0].mxu0 %v380
      %v836 = vpop.f32.mrb[0].mxu0
      %v837 = vadd.f32 0.0, %v836
      %v838 = vpop.f32.mrb[0].mxu0
      %839 = vmatprep.mubr.f32.mxu0 0.0
      %840 = vmatmul.mubr.f32.gmra.mrb[0].mxu0 %v381
      %v841 = vpop.f32.mrb[0].mxu0
      %v842 = vadd.f32 0.0, %v841
      %v843 = vpop.f32.mrb[0].mxu0
      %844 = vmatprep.mubr.f32.mxu0 0.0
      %845 = vmatmul.mubr.f32.gmra.mrb[0].mxu0 %v382
      %v846 = vpop.f32.mrb[0].mxu0
      %v847 = vadd.f32 0.0, %v846
      %v848 = vpop.f32.mrb[0].mxu0
      %849 = vmatprep.mubr.f32.mxu0 0.0
      %850 = vmatmul.mubr.f32.gmra.mrb[0].mxu0 %v383
      %v851 = vpop.f32.mrb[0].mxu0
      %v852 = vadd.f32 0.0, %v851
      %v853 = vpop.f32.mrb[0].mxu0
      %854 = vmatprep.mubr.f32.mxu0 0.0
      %855 = vmatmul.mubr.f32.gmra.mrb[0].mxu0 %v384
      %v856 = vpop.f32.mrb[0].mxu0
      %v857 = vadd.f32 0.0, %v856
      %v858 = vpop.f32.mrb[0].mxu0
      %859 = vmatprep.mubr.f32.mxu0 0.0
      %860 = vmatmul.mubr.f32.gmra.mrb[0].mxu0 %v385
      %v861 = vpop.f32.mrb[0].mxu0
      %v862 = vadd.f32 0.0, %v861
      %v863 = vpop.f32.mrb[0].mxu0
      %864 = vmatprep.mubr.f32.mxu0 0.0
      %865 = vmatmul.mubr.f32.gmra.mrb[0].mxu0 %v386
      %v866 = vpop.f32.mrb[0].mxu0
      %v867 = vadd.f32 0.0, %v866
      %v868 = vpop.f32.mrb[0].mxu0
      %869 = vmatprep.mubr.f32.mxu0 0.0
      %870 = vmatmul.mubr.f32.gmra.mrb[0].mxu0 %v387
      %v871 = vpop.f32.mrb[0].mxu0
      %v872 = vadd.f32 0.0, %v871
      %v873 = vpop.f32.mrb[0].mxu0
      %874 = vdwg.mxu0
      %v875 = vld [vmem:[%s4] sm:$0x1]
      %v877 = vlaneseq
      %v878 = vshrl.u32 %v877, 7
      %v879 = vsub.s32 0, %v878
      %v880 = vrot.slane %v875, %v879
      %v882 = vadd.f32 %v471, %v880
      %v883 = vadd.f32 %v476, %v880
      %v884 = vadd.f32 %v481, %v880
      %v885 = vadd.f32 %v486, %v880
      %v886 = vadd.f32 %v491, %v880
      %v887 = vadd.f32 %v496, %v880
      %v888 = vadd.f32 %v501, %v880
      %v889 = vadd.f32 %v506, %v880
      %v890 = vadd.f32 %v593, %v880
      %v891 = vadd.f32 %v598, %v880
      %v892 = vadd.f32 %v603, %v880
      %v893 = vadd.f32 %v608, %v880
      %v894 = vadd.f32 %v613, %v880
      %v895 = vadd.f32 %v618, %v880
      %v896 = vadd.f32 %v623, %v880
      %v897 = vadd.f32 %v628, %v880
      %v898 = vadd.f32 %v715, %v880
      %v899 = vadd.f32 %v720, %v880
      %v900 = vadd.f32 %v725, %v880
      %v901 = vadd.f32 %v730, %v880
      %v902 = vadd.f32 %v735, %v880
      %v903 = vadd.f32 %v740, %v880
      %v904 = vadd.f32 %v745, %v880
      %v905 = vadd.f32 %v750, %v880
      %v906 = vadd.f32 %v837, %v880
      %v907 = vadd.f32 %v842, %v880
      %v908 = vadd.f32 %v847, %v880
      %v909 = vadd.f32 %v852, %v880
      %v910 = vadd.f32 %v857, %v880
      %v911 = vadd.f32 %v862, %v880
      %v912 = vadd.f32 %v867, %v880
      %v913 = vadd.f32 %v872, %v880
      %vm914 = vcmask 261120
      %v915 = vsel %vm914, %v882, 0.0
      %v916 = vsel %vm914, %v883, 0.0
      %v917 = vadd.f32 %v915, %v916
      %v918 = vsel %vm914, %v884, 0.0
      %v919 = vadd.f32 %v917, %v918
      %v920 = vsel %vm914, %v885, 0.0
      %v921 = vadd.f32 %v919, %v920
      %v922 = vsel %vm914, %v886, 0.0
      %v923 = vadd.f32 %v921, %v922
      %v924 = vsel %vm914, %v887, 0.0
      %v925 = vadd.f32 %v923, %v924
      %v926 = vsel %vm914, %v888, 0.0
      %v927 = vadd.f32 %v925, %v926
      %v928 = vsel %vm914, %v889, 0.0
      %v929 = vadd.f32 %v927, %v928
      %v930 = vsel %vm914, %v890, 0.0
      %v931 = vadd.f32 %v929, %v930
      %v932 = vsel %vm914, %v891, 0.0
      %v933 = vadd.f32 %v931, %v932
      %v934 = vsel %vm914, %v892, 0.0
      %v935 = vadd.f32 %v933, %v934
      %v936 = vsel %vm914, %v893, 0.0
      %v937 = vadd.f32 %v935, %v936
      %v938 = vsel %vm914, %v894, 0.0
      %v939 = vadd.f32 %v937, %v938
      %v940 = vsel %vm914, %v895, 0.0
      %v941 = vadd.f32 %v939, %v940
      %v942 = vsel %vm914, %v896, 0.0
      %v943 = vadd.f32 %v941, %v942
      %v944 = vsel %vm914, %v897, 0.0
      %v945 = vadd.f32 %v943, %v944
      %v946 = vsel %vm914, %v898, 0.0
      %v947 = vadd.f32 %v945, %v946
      %v948 = vsel %vm914, %v899, 0.0
      %v949 = vadd.f32 %v947, %v948
      %v950 = vsel %vm914, %v900, 0.0
      %v951 = vadd.f32 %v949, %v950
      %v952 = vsel %vm914, %v901, 0.0
      %v953 = vadd.f32 %v951, %v952
      %v954 = vsel %vm914, %v902, 0.0
      %v955 = vadd.f32 %v953, %v954
      %v956 = vsel %vm914, %v903, 0.0
      %v957 = vadd.f32 %v955, %v956
      %v958 = vsel %vm914, %v904, 0.0
      %v959 = vadd.f32 %v957, %v958
      %v960 = vsel %vm914, %v905, 0.0
      %v961 = vadd.f32 %v959, %v960
      %v962 = vsel %vm914, %v906, 0.0
      %v963 = vadd.f32 %v961, %v962
      %v964 = vsel %vm914, %v907, 0.0
      %v965 = vadd.f32 %v963, %v964
      %v966 = vsel %vm914, %v908, 0.0
      %v967 = vadd.f32 %v965, %v966
      %v968 = vsel %vm914, %v909, 0.0
      %v969 = vadd.f32 %v967, %v968
      %v970 = vsel %vm914, %v910, 0.0
      %v971 = vadd.f32 %v969, %v970
      %v972 = vsel %vm914, %v911, 0.0
      %v973 = vadd.f32 %v971, %v972
      %v974 = vsel %vm914, %v912, 0.0
      %v975 = vadd.f32 %v973, %v974
      %v976 = vsel %vm914, %v913, 0.0
      %v977 = vadd.f32 %v975, %v976
      %v978 = vrot.slane %v977, 4
      %v979 = vadd.f32 %v977, %v978
      %v980 = vrot.slane %v979, 2
      %v981 = vadd.f32 %v979, %v980
      %v982 = vrot.slane %v981, 1
      %v983 = vadd.f32 %v981, %v982
      %v984 = vmul.f32 %v882, %v882
      %v985 = vmul.f32 %v883, %v883
      %v986 = vmul.f32 %v884, %v884
      %v987 = vmul.f32 %v885, %v885
      %v988 = vmul.f32 %v886, %v886
      %v989 = vmul.f32 %v887, %v887
      %v990 = vmul.f32 %v888, %v888
      %v991 = vmul.f32 %v889, %v889
      %v992 = vmul.f32 %v890, %v890
      %v993 = vmul.f32 %v891, %v891
      %v994 = vmul.f32 %v892, %v892
      %v995 = vmul.f32 %v893, %v893
      %v996 = vmul.f32 %v894, %v894
      %v997 = vmul.f32 %v895, %v895
      %v998 = vmul.f32 %v896, %v896
      %v999 = vmul.f32 %v897, %v897
      %v1000 = vmul.f32 %v898, %v898
      %v1001 = vmul.f32 %v899, %v899
      %v1002 = vmul.f32 %v900, %v900
      %v1003 = vmul.f32 %v901, %v901
      %v1004 = vmul.f32 %v902, %v902
      %v1005 = vmul.f32 %v903, %v903
      %v1006 = vmul.f32 %v904, %v904
      %v1007 = vmul.f32 %v905, %v905
      %v1008 = vmul.f32 %v906, %v906
      %v1009 = vmul.f32 %v907, %v907
      %v1010 = vmul.f32 %v908, %v908
      %v1011 = vmul.f32 %v909, %v909
      %v1012 = vmul.f32 %v910, %v910
      %v1013 = vmul.f32 %v911, %v911
      %v1014 = vmul.f32 %v912, %v912
      %v1015 = vmul.f32 %v913, %v913
      %v1016 = vsel %vm914, %v984, 0.0
      %v1017 = vsel %vm914, %v985, 0.0
      %v1018 = vadd.f32 %v1016, %v1017
      %v1019 = vsel %vm914, %v986, 0.0
      %v1020 = vadd.f32 %v1018, %v1019
      %v1021 = vsel %vm914, %v987, 0.0
      %v1022 = vadd.f32 %v1020, %v1021
      %v1023 = vsel %vm914, %v988, 0.0
      %v1024 = vadd.f32 %v1022, %v1023
      %v1025 = vsel %vm914, %v989, 0.0
      %v1026 = vadd.f32 %v1024, %v1025
      %v1027 = vsel %vm914, %v990, 0.0
      %v1028 = vadd.f32 %v1026, %v1027
      %v1029 = vsel %vm914, %v991, 0.0
      %v1030 = vadd.f32 %v1028, %v1029
      %v1031 = vsel %vm914, %v992, 0.0
      %v1032 = vadd.f32 %v1030, %v1031
      %v1033 = vsel %vm914, %v993, 0.0
      %v1034 = vadd.f32 %v1032, %v1033
      %v1035 = vsel %vm914, %v994, 0.0
      %v1036 = vadd.f32 %v1034, %v1035
      %v1037 = vsel %vm914, %v995, 0.0
      %v1038 = vadd.f32 %v1036, %v1037
      %v1039 = vsel %vm914, %v996, 0.0
      %v1040 = vadd.f32 %v1038, %v1039
      %v1041 = vsel %vm914, %v997, 0.0
      %v1042 = vadd.f32 %v1040, %v1041
      %v1043 = vsel %vm914, %v998, 0.0
      %v1044 = vadd.f32 %v1042, %v1043
      %v1045 = vsel %vm914, %v999, 0.0
      %v1046 = vadd.f32 %v1044, %v1045
      %v1047 = vsel %vm914, %v1000, 0.0
      %v1048 = vadd.f32 %v1046, %v1047
      %v1049 = vsel %vm914, %v1001, 0.0
      %v1050 = vadd.f32 %v1048, %v1049
      %v1051 = vsel %vm914, %v1002, 0.0
      %v1052 = vadd.f32 %v1050, %v1051
      %v1053 = vsel %vm914, %v1003, 0.0
      %v1054 = vadd.f32 %v1052, %v1053
      %v1055 = vsel %vm914, %v1004, 0.0
      %v1056 = vadd.f32 %v1054, %v1055
      %v1057 = vsel %vm914, %v1005, 0.0
      %v1058 = vadd.f32 %v1056, %v1057
      %v1059 = vsel %vm914, %v1006, 0.0
      %v1060 = vadd.f32 %v1058, %v1059
      %v1061 = vsel %vm914, %v1007, 0.0
      %v1062 = vadd.f32 %v1060, %v1061
      %v1063 = vsel %vm914, %v1008, 0.0
      %v1064 = vadd.f32 %v1062, %v1063
      %v1065 = vsel %vm914, %v1009, 0.0
      %v1066 = vadd.f32 %v1064, %v1065
      %v1067 = vsel %vm914, %v1010, 0.0
      %v1068 = vadd.f32 %v1066, %v1067
      %v1069 = vsel %vm914, %v1011, 0.0
      %v1070 = vadd.f32 %v1068, %v1069
      %v1071 = vsel %vm914, %v1012, 0.0
      %v1072 = vadd.f32 %v1070, %v1071
      %v1073 = vsel %vm914, %v1013, 0.0
      %v1074 = vadd.f32 %v1072, %v1073
      %v1075 = vsel %vm914, %v1014, 0.0
      %v1076 = vadd.f32 %v1074, %v1075
      %v1077 = vsel %vm914, %v1015, 0.0
      %v1078 = vadd.f32 %v1076, %v1077
      %v1079 = vrot.slane %v1078, 4
      %v1080 = vadd.f32 %v1078, %v1079
      %v1081 = vrot.slane %v1080, 2
      %v1082 = vadd.f32 %v1080, %v1081
      %v1083 = vrot.slane %v1082, 1
      %v1084 = vadd.f32 %v1082, %v1083
      %v1085 = vmul.f32 %v983, 0.00390625
      %v1086 = vmul.f32 %v1084, 0.00390625
      %v1087 = vmul.f32 %v1085, %v1085
      %v1088 = vsub.f32 %v1086, %v1087
      %v1089 = vmax.f32 %v1088, 0.0
      %v1090 = vsub.f32 %v882, %v1085
      %v1091 = vsub.f32 %v883, %v1085
      %v1092 = vsub.f32 %v884, %v1085
      %v1093 = vsub.f32 %v885, %v1085
      %v1094 = vsub.f32 %v886, %v1085
      %v1095 = vsub.f32 %v887, %v1085
      %v1096 = vsub.f32 %v888, %v1085
      %v1097 = vsub.f32 %v889, %v1085
      %v1098 = vsub.f32 %v890, %v1085
      %v1099 = vsub.f32 %v891, %v1085
      %v1100 = vsub.f32 %v892, %v1085
      %v1101 = vsub.f32 %v893, %v1085
      %v1102 = vsub.f32 %v894, %v1085
      %v1103 = vsub.f32 %v895, %v1085
      %v1104 = vsub.f32 %v896, %v1085
      %v1105 = vsub.f32 %v897, %v1085
      %v1106 = vsub.f32 %v898, %v1085
      %v1107 = vsub.f32 %v899, %v1085
      %v1108 = vsub.f32 %v900, %v1085
      %v1109 = vsub.f32 %v901, %v1085
      %v1110 = vsub.f32 %v902, %v1085
      %v1111 = vsub.f32 %v903, %v1085
      %v1112 = vsub.f32 %v904, %v1085
      %v1113 = vsub.f32 %v905, %v1085
      %v1114 = vsub.f32 %v906, %v1085
      %v1115 = vsub.f32 %v907, %v1085
      %v1116 = vsub.f32 %v908, %v1085
      %v1117 = vsub.f32 %v909, %v1085
      %v1118 = vsub.f32 %v910, %v1085
      %v1119 = vsub.f32 %v911, %v1085
      %v1120 = vsub.f32 %v912, %v1085
      %v1121 = vsub.f32 %v913, %v1085
      %v1122 = vadd.f32 %v1089, 1e-05
      %v1123 = vrsqrt.pop %v1122
      %v1124 = vmul.f32 %v1090, %v1123
      %v1125 = vmul.f32 %v1091, %v1123
      %v1126 = vmul.f32 %v1092, %v1123
      %v1127 = vmul.f32 %v1093, %v1123
      %v1128 = vmul.f32 %v1094, %v1123
      %v1129 = vmul.f32 %v1095, %v1123
      %v1130 = vmul.f32 %v1096, %v1123
      %v1131 = vmul.f32 %v1097, %v1123
      %v1132 = vmul.f32 %v1098, %v1123
      %v1133 = vmul.f32 %v1099, %v1123
      %v1134 = vmul.f32 %v1100, %v1123
      %v1135 = vmul.f32 %v1101, %v1123
      %v1136 = vmul.f32 %v1102, %v1123
      %v1137 = vmul.f32 %v1103, %v1123
      %v1138 = vmul.f32 %v1104, %v1123
      %v1139 = vmul.f32 %v1105, %v1123
      %v1140 = vmul.f32 %v1106, %v1123
      %v1141 = vmul.f32 %v1107, %v1123
      %v1142 = vmul.f32 %v1108, %v1123
      %v1143 = vmul.f32 %v1109, %v1123
      %v1144 = vmul.f32 %v1110, %v1123
      %v1145 = vmul.f32 %v1111, %v1123
      %v1146 = vmul.f32 %v1112, %v1123
      %v1147 = vmul.f32 %v1113, %v1123
      %v1148 = vmul.f32 %v1114, %v1123
      %v1149 = vmul.f32 %v1115, %v1123
      %v1150 = vmul.f32 %v1116, %v1123
      %v1151 = vmul.f32 %v1117, %v1123
      %v1152 = vmul.f32 %v1118, %v1123
      %v1153 = vmul.f32 %v1119, %v1123
      %v1154 = vmul.f32 %v1120, %v1123
      %v1155 = vmul.f32 %v1121, %v1123
      %v1156 = vmax.f32 %v1124, 0.0
      %v1157 = vmax.f32 %v1125, 0.0
      %v1158 = vmax.f32 %v1126, 0.0
      %v1159 = vmax.f32 %v1127, 0.0
      %v1160 = vmax.f32 %v1128, 0.0
      %v1161 = vmax.f32 %v1129, 0.0
      %v1162 = vmax.f32 %v1130, 0.0
      %v1163 = vmax.f32 %v1131, 0.0
      %v1164 = vmax.f32 %v1132, 0.0
      %v1165 = vmax.f32 %v1133, 0.0
      %v1166 = vmax.f32 %v1134, 0.0
      %v1167 = vmax.f32 %v1135, 0.0
      %v1168 = vmax.f32 %v1136, 0.0
      %v1169 = vmax.f32 %v1137, 0.0
      %v1170 = vmax.f32 %v1138, 0.0
      %v1171 = vmax.f32 %v1139, 0.0
      %v1172 = vmax.f32 %v1140, 0.0
      %v1173 = vmax.f32 %v1141, 0.0
      %v1174 = vmax.f32 %v1142, 0.0
      %v1175 = vmax.f32 %v1143, 0.0
      %v1176 = vmax.f32 %v1144, 0.0
      %v1177 = vmax.f32 %v1145, 0.0
      %v1178 = vmax.f32 %v1146, 0.0
      %v1179 = vmax.f32 %v1147, 0.0
      %v1180 = vmax.f32 %v1148, 0.0
      %v1181 = vmax.f32 %v1149, 0.0
      %v1182 = vmax.f32 %v1150, 0.0
      %v1183 = vmax.f32 %v1151, 0.0
      %v1184 = vmax.f32 %v1152, 0.0
      %v1185 = vmax.f32 %v1153, 0.0
      %v1186 = vmax.f32 %v1154, 0.0
      %v1187 = vmax.f32 %v1155, 0.0
      %v1188 = vld [vmem:[%s2] sm:$0xff]
      %v1189 = vld [vmem:[%s2 + $0x8] sm:$0xff]
      %v1190 = vld [vmem:[%s2 + $0x10] sm:$0xff]
      %v1191 = vld [vmem:[%s2 + $0x18] sm:$0xff]
      %v1192 = vld [vmem:[%s2 + $0x20] sm:$0xff]
      %v1193 = vld [vmem:[%s2 + $0x28] sm:$0xff]
      %v1194 = vld [vmem:[%s2 + $0x30] sm:$0xff]
      %v1195 = vld [vmem:[%s2 + $0x38] sm:$0xff]
      %v1196 = vld [vmem:[%s2 + $0x40] sm:$0xff]
      %v1197 = vld [vmem:[%s2 + $0x48] sm:$0xff]
      %v1198 = vld [vmem:[%s2 + $0x50] sm:$0xff]
      %v1199 = vld [vmem:[%s2 + $0x58] sm:$0xff]
      %v1200 = vld [vmem:[%s2 + $0x60] sm:$0xff]
      %v1201 = vld [vmem:[%s2 + $0x68] sm:$0xff]
      %v1202 = vld [vmem:[%s2 + $0x70] sm:$0xff]
      %v1203 = vld [vmem:[%s2 + $0x78] sm:$0xff]
      %v1204 = vld [vmem:[%s2 + $0x80] sm:$0xff]
      %v1205 = vld [vmem:[%s2 + $0x88] sm:$0xff]
      %v1206 = vld [vmem:[%s2 + $0x90] sm:$0xff]
      %v1207 = vld [vmem:[%s2 + $0x98] sm:$0xff]
      %v1208 = vld [vmem:[%s2 + $0xa0] sm:$0xff]
      %v1209 = vld [vmem:[%s2 + $0xa8] sm:$0xff]
      %v1210 = vld [vmem:[%s2 + $0xb0] sm:$0xff]
      %v1211 = vld [vmem:[%s2 + $0xb8] sm:$0xff]
      %v1212 = vld [vmem:[%s2 + $0xc0] sm:$0xff]
      %v1213 = vld [vmem:[%s2 + $0xc8] sm:$0xff]
      %v1214 = vld [vmem:[%s2 + $0xd0] sm:$0xff]
      %v1215 = vld [vmem:[%s2 + $0xd8] sm:$0xff]
      %v1216 = vld [vmem:[%s2 + $0xe0] sm:$0xff]
      %v1217 = vld [vmem:[%s2 + $0xe8] sm:$0xff]
      %v1218 = vld [vmem:[%s2 + $0xf0] sm:$0xff]
      %v1219 = vld [vmem:[%s2 + $0xf8] sm:$0xff]
      %v1220 = vld [vmem:[%s374] sm:$0xff]
      %v1221 = vld [vmem:[%s374 + $0x8] sm:$0xff]
      %v1222 = vld [vmem:[%s374 + $0x10] sm:$0xff]
      %v1223 = vld [vmem:[%s374 + $0x18] sm:$0xff]
      %v1224 = vld [vmem:[%s374 + $0x20] sm:$0xff]
      %v1225 = vld [vmem:[%s374 + $0x28] sm:$0xff]
      %v1226 = vld [vmem:[%s374 + $0x30] sm:$0xff]
      %v1227 = vld [vmem:[%s374 + $0x38] sm:$0xff]
      %v1228 = vld [vmem:[%s374 + $0x40] sm:$0xff]
      %v1229 = vld [vmem:[%s374 + $0x48] sm:$0xff]
      %v1230 = vld [vmem:[%s374 + $0x50] sm:$0xff]
      %v1231 = vld [vmem:[%s374 + $0x58] sm:$0xff]
      %v1232 = vld [vmem:[%s374 + $0x60] sm:$0xff]
      %v1233 = vld [vmem:[%s374 + $0x68] sm:$0xff]
      %v1234 = vld [vmem:[%s374 + $0x70] sm:$0xff]
      %v1235 = vld [vmem:[%s374 + $0x78] sm:$0xff]
      %v1236 = vld [vmem:[%s374 + $0x80] sm:$0xff]
      %v1237 = vld [vmem:[%s374 + $0x88] sm:$0xff]
      %v1238 = vld [vmem:[%s374 + $0x90] sm:$0xff]
      %v1239 = vld [vmem:[%s374 + $0x98] sm:$0xff]
      %v1240 = vld [vmem:[%s374 + $0xa0] sm:$0xff]
      %v1241 = vld [vmem:[%s374 + $0xa8] sm:$0xff]
      %v1242 = vld [vmem:[%s374 + $0xb0] sm:$0xff]
      %v1243 = vld [vmem:[%s374 + $0xb8] sm:$0xff]
      %v1244 = vld [vmem:[%s374 + $0xc0] sm:$0xff]
      %v1245 = vld [vmem:[%s374 + $0xc8] sm:$0xff]
      %v1246 = vld [vmem:[%s374 + $0xd0] sm:$0xff]
      %v1247 = vld [vmem:[%s374 + $0xd8] sm:$0xff]
      %v1248 = vld [vmem:[%s374 + $0xe0] sm:$0xff]
      %v1249 = vld [vmem:[%s374 + $0xe8] sm:$0xff]
      %v1250 = vld [vmem:[%s374 + $0xf0] sm:$0xff]
      %v1251 = vld [vmem:[%s374 + $0xf8] sm:$0xff]
      %v1252 = vld [vmem:[%s5] sm:$0xff]
      %v1253 = vld [vmem:[%s5 + $0x8] sm:$0xff]
      %v1254 = vld [vmem:[%s5 + $0x10] sm:$0xff]
      %v1255 = vld [vmem:[%s5 + $0x18] sm:$0xff]
      %v1256 = vld [vmem:[%s6] sm:$0x1]
      %v1258 = vlaneseq
      %v1259 = vshrl.u32 %v1258, 7
      %v1260 = vsub.s32 0, %v1259
      %v1261 = vrot.slane %v1256, %v1260
      %v1264 = vsel %vm914, %v1220, 0
      %v1267 = vsel %vm914, %v1221, 0
      %v1270 = vsel %vm914, %v1222, 0
      %v1273 = vsel %vm914, %v1223, 0
      %v1276 = vsel %vm914, %v1224, 0
      %v1279 = vsel %vm914, %v1225, 0
      %v1282 = vsel %vm914, %v1226, 0
      %v1285 = vsel %vm914, %v1227, 0
      %v1288 = vsel %vm914, %v1228, 0
      %v1291 = vsel %vm914, %v1229, 0
      %v1294 = vsel %vm914, %v1230, 0
      %v1297 = vsel %vm914, %v1231, 0
      %v1300 = vsel %vm914, %v1232, 0
      %v1303 = vsel %vm914, %v1233, 0
      %v1306 = vsel %vm914, %v1234, 0
      %v1309 = vsel %vm914, %v1235, 0
      %v1312 = vsel %vm914, %v1236, 0
      %v1315 = vsel %vm914, %v1237, 0
      %v1318 = vsel %vm914, %v1238, 0
      %v1321 = vsel %vm914, %v1239, 0
      %v1324 = vsel %vm914, %v1240, 0
      %v1327 = vsel %vm914, %v1241, 0
      %v1330 = vsel %vm914, %v1242, 0
      %v1333 = vsel %vm914, %v1243, 0
      %v1336 = vsel %vm914, %v1244, 0
      %v1339 = vsel %vm914, %v1245, 0
      %v1342 = vsel %vm914, %v1246, 0
      %v1345 = vsel %vm914, %v1247, 0
      %v1348 = vsel %vm914, %v1248, 0
      %v1351 = vsel %vm914, %v1249, 0
      %v1354 = vsel %vm914, %v1250, 0
      %v1357 = vsel %vm914, %v1251, 0
      %1359 = vmatprep.subr.mxu0 0.0
      %1360 = vmatpush1.msra.mxu0 %v1252
      %1361 = vmatprep.subr.mxu0 0.0
      %1362 = vmatpush1.msra.mxu0 %v1253
      %1363 = vmatprep.subr.mxu0 0.0
      %1364 = vmatpush1.msra.mxu0 %v1254
      %1365 = vmatprep.subr.mxu0 0.0
      %1366 = vmatpush1.msra.mxu0 %v1255
      %1367 = vmatprep.subr.mxu0 0.0
      %1368 = vmatpush1.msra.mxu0 0.0
      %1369 = vmatprep.subr.mxu0 0.0
      %1370 = vmatpush1.msra.mxu0 0.0
      %1371 = vmatprep.subr.mxu0 0.0
      %1372 = vmatpush1.msra.mxu0 0.0
      %1373 = vmatprep.subr.mxu0 0.0
      %1374 = vmatpush1.msra.mxu0 0.0
      %1375 = vmatprep.subr.mxu0 0.0
      %1376 = vmatpush1.msra.mxu0 0.0
      %1377 = vmatprep.subr.mxu0 0.0
      %1378 = vmatpush1.msra.mxu0 0.0
      %1379 = vmatprep.subr.mxu0 0.0
      %1380 = vmatpush1.msra.mxu0 0.0
      %1381 = vmatprep.subr.mxu0 0.0
      %1382 = vmatpush1.msra.mxu0 0.0
      %1383 = vmatprep.subr.mxu0 0.0
      %1384 = vmatpush1.msra.mxu0 0.0
      %1385 = vmatprep.subr.mxu0 0.0
      %1386 = vmatpush1.msra.mxu0 0.0
      %1387 = vmatprep.subr.mxu0 0.0
      %1388 = vmatpush1.msra.mxu0 0.0
      %1389 = vmatprep.subr.mxu0 0.0
      %1390 = vmatpush1.msra.mxu0 0.0
      %1391 = vmatprep.subr.mxu0 0.0
      %1392 = vmatpush1.msra.mxu0 0.0
      %1393 = vmatprep.subr.mxu0 0.0
      %1394 = vmatpush1.msra.mxu0 0.0
      %1395 = vmatprep.subr.mxu0 0.0
      %1396 = vmatpush1.msra.mxu0 0.0
      %1397 = vmatprep.subr.mxu0 0.0
      %1398 = vmatpush1.msra.mxu0 0.0
      %1399 = vmatprep.subr.mxu0 0.0
      %1400 = vmatpush1.msra.mxu0 0.0
      %1401 = vmatprep.subr.mxu0 0.0
      %1402 = vmatpush1.msra.mxu0 0.0
      %1403 = vmatprep.subr.mxu0 0.0
      %1404 = vmatpush1.msra.mxu0 0.0
      %1405 = vmatprep.subr.mxu0 0.0
      %1406 = vmatpush1.msra.mxu0 0.0
      %1407 = vmatprep.subr.mxu0 0.0
      %1408 = vmatpush1.msra.mxu0 0.0
      %1409 = vmatprep.subr.mxu0 0.0
      %1410 = vmatpush1.msra.mxu0 0.0
      %1411 = vmatprep.subr.mxu0 0.0
      %1412 = vmatpush1.msra.mxu0 0.0
      %1413 = vmatprep.subr.mxu0 0.0
      %1414 = vmatpush1.msra.mxu0 0.0
      %1415 = vmatprep.subr.mxu0 0.0
      %1416 = vmatpush1.msra.mxu0 0.0
      %1417 = vmatprep.subr.mxu0 0.0
      %1418 = vmatpush1.msra.mxu0 0.0
      %1419 = vmatprep.subr.mxu0 0.0
      %1420 = vmatpush1.msra.mxu0 0.0
      %1421 = vmatprep.subr.mxu0 0.0
      %1422 = vmatpush1.msra.mxu0 0.0
      %1423 = vmatprep.mubr.f32.mxu0 0.0
      %1424 = vmatmul.mubr.f32.gmra.mrb[0].mxu0 %v1264
      %v1425 = vpop.f32.mrb[0].mxu0
      %v1426 = vadd.f32 %v1261, %v1425
      %v1427 = vpop.f32.mrb[0].mxu0
      %1428 = vmatprep.mubr.f32.mxu0 0.0
      %1429 = vmatmul.mubr.f32.gmra.mrb[0].mxu0 %v1267
      %v1430 = vpop.f32.mrb[0].mxu0
      %v1431 = vadd.f32 %v1261, %v1430
      %v1432 = vpop.f32.mrb[0].mxu0
      %1433 = vmatprep.mubr.f32.mxu0 0.0
      %1434 = vmatmul.mubr.f32.gmra.mrb[0].mxu0 %v1270
      %v1435 = vpop.f32.mrb[0].mxu0
      %v1436 = vadd.f32 %v1261, %v1435
      %v1437 = vpop.f32.mrb[0].mxu0
      %1438 = vmatprep.mubr.f32.mxu0 0.0
      %1439 = vmatmul.mubr.f32.gmra.mrb[0].mxu0 %v1273
      %v1440 = vpop.f32.mrb[0].mxu0
      %v1441 = vadd.f32 %v1261, %v1440
      %v1442 = vpop.f32.mrb[0].mxu0
      %1443 = vmatprep.mubr.f32.mxu0 0.0
      %1444 = vmatmul.mubr.f32.gmra.mrb[0].mxu0 %v1276
      %v1445 = vpop.f32.mrb[0].mxu0
      %v1446 = vadd.f32 %v1261, %v1445
      %v1447 = vpop.f32.mrb[0].mxu0
      %1448 = vmatprep.mubr.f32.mxu0 0.0
      %1449 = vmatmul.mubr.f32.gmra.mrb[0].mxu0 %v1279
      %v1450 = vpop.f32.mrb[0].mxu0
      %v1451 = vadd.f32 %v1261, %v1450
      %v1452 = vpop.f32.mrb[0].mxu0
      %1453 = vmatprep.mubr.f32.mxu0 0.0
      %1454 = vmatmul.mubr.f32.gmra.mrb[0].mxu0 %v1282
      %v1455 = vpop.f32.mrb[0].mxu0
      %v1456 = vadd.f32 %v1261, %v1455
      %v1457 = vpop.f32.mrb[0].mxu0
      %1458 = vmatprep.mubr.f32.mxu0 0.0
      %1459 = vmatmul.mubr.f32.gmra.mrb[0].mxu0 %v1285
      %v1460 = vpop.f32.mrb[0].mxu0
      %v1461 = vadd.f32 %v1261, %v1460
      %v1462 = vpop.f32.mrb[0].mxu0
      %1463 = vmatprep.mubr.f32.mxu0 0.0
      %1464 = vmatmul.mubr.f32.gmra.mrb[0].mxu0 %v1288
      %v1465 = vpop.f32.mrb[0].mxu0
      %v1466 = vadd.f32 %v1261, %v1465
      %v1467 = vpop.f32.mrb[0].mxu0
      %1468 = vmatprep.mubr.f32.mxu0 0.0
      %1469 = vmatmul.mubr.f32.gmra.mrb[0].mxu0 %v1291
      %v1470 = vpop.f32.mrb[0].mxu0
      %v1471 = vadd.f32 %v1261, %v1470
      %v1472 = vpop.f32.mrb[0].mxu0
      %1473 = vmatprep.mubr.f32.mxu0 0.0
      %1474 = vmatmul.mubr.f32.gmra.mrb[0].mxu0 %v1294
      %v1475 = vpop.f32.mrb[0].mxu0
      %v1476 = vadd.f32 %v1261, %v1475
      %v1477 = vpop.f32.mrb[0].mxu0
      %1478 = vmatprep.mubr.f32.mxu0 0.0
      %1479 = vmatmul.mubr.f32.gmra.mrb[0].mxu0 %v1297
      %v1480 = vpop.f32.mrb[0].mxu0
      %v1481 = vadd.f32 %v1261, %v1480
      %v1482 = vpop.f32.mrb[0].mxu0
      %1483 = vmatprep.mubr.f32.mxu0 0.0
      %1484 = vmatmul.mubr.f32.gmra.mrb[0].mxu0 %v1300
      %v1485 = vpop.f32.mrb[0].mxu0
      %v1486 = vadd.f32 %v1261, %v1485
      %v1487 = vpop.f32.mrb[0].mxu0
      %1488 = vmatprep.mubr.f32.mxu0 0.0
      %1489 = vmatmul.mubr.f32.gmra.mrb[0].mxu0 %v1303
      %v1490 = vpop.f32.mrb[0].mxu0
      %v1491 = vadd.f32 %v1261, %v1490
      %v1492 = vpop.f32.mrb[0].mxu0
      %1493 = vmatprep.mubr.f32.mxu0 0.0
      %1494 = vmatmul.mubr.f32.gmra.mrb[0].mxu0 %v1306
      %v1495 = vpop.f32.mrb[0].mxu0
      %v1496 = vadd.f32 %v1261, %v1495
      %v1497 = vpop.f32.mrb[0].mxu0
      %1498 = vmatprep.mubr.f32.mxu0 0.0
      %1499 = vmatmul.mubr.f32.gmra.mrb[0].mxu0 %v1309
      %v1500 = vpop.f32.mrb[0].mxu0
      %v1501 = vadd.f32 %v1261, %v1500
      %v1502 = vpop.f32.mrb[0].mxu0
      %1503 = vmatprep.mubr.f32.mxu0 0.0
      %1504 = vmatmul.mubr.f32.gmra.mrb[0].mxu0 %v1312
      %v1505 = vpop.f32.mrb[0].mxu0
      %v1506 = vadd.f32 %v1261, %v1505
      %v1507 = vpop.f32.mrb[0].mxu0
      %1508 = vmatprep.mubr.f32.mxu0 0.0
      %1509 = vmatmul.mubr.f32.gmra.mrb[0].mxu0 %v1315
      %v1510 = vpop.f32.mrb[0].mxu0
      %v1511 = vadd.f32 %v1261, %v1510
      %v1512 = vpop.f32.mrb[0].mxu0
      %1513 = vmatprep.mubr.f32.mxu0 0.0
      %1514 = vmatmul.mubr.f32.gmra.mrb[0].mxu0 %v1318
      %v1515 = vpop.f32.mrb[0].mxu0
      %v1516 = vadd.f32 %v1261, %v1515
      %v1517 = vpop.f32.mrb[0].mxu0
      %1518 = vmatprep.mubr.f32.mxu0 0.0
      %1519 = vmatmul.mubr.f32.gmra.mrb[0].mxu0 %v1321
      %v1520 = vpop.f32.mrb[0].mxu0
      %v1521 = vadd.f32 %v1261, %v1520
      %v1522 = vpop.f32.mrb[0].mxu0
      %1523 = vmatprep.mubr.f32.mxu0 0.0
      %1524 = vmatmul.mubr.f32.gmra.mrb[0].mxu0 %v1324
      %v1525 = vpop.f32.mrb[0].mxu0
      %v1526 = vadd.f32 %v1261, %v1525
      %v1527 = vpop.f32.mrb[0].mxu0
      %1528 = vmatprep.mubr.f32.mxu0 0.0
      %1529 = vmatmul.mubr.f32.gmra.mrb[0].mxu0 %v1327
      %v1530 = vpop.f32.mrb[0].mxu0
      %v1531 = vadd.f32 %v1261, %v1530
      %v1532 = vpop.f32.mrb[0].mxu0
      %1533 = vmatprep.mubr.f32.mxu0 0.0
      %1534 = vmatmul.mubr.f32.gmra.mrb[0].mxu0 %v1330
      %v1535 = vpop.f32.mrb[0].mxu0
      %v1536 = vadd.f32 %v1261, %v1535
      %v1537 = vpop.f32.mrb[0].mxu0
      %1538 = vmatprep.mubr.f32.mxu0 0.0
      %1539 = vmatmul.mubr.f32.gmra.mrb[0].mxu0 %v1333
      %v1540 = vpop.f32.mrb[0].mxu0
      %v1541 = vadd.f32 %v1261, %v1540
      %v1542 = vpop.f32.mrb[0].mxu0
      %1543 = vmatprep.mubr.f32.mxu0 0.0
      %1544 = vmatmul.mubr.f32.gmra.mrb[0].mxu0 %v1336
      %v1545 = vpop.f32.mrb[0].mxu0
      %v1546 = vadd.f32 %v1261, %v1545
      %v1547 = vpop.f32.mrb[0].mxu0
      %1548 = vmatprep.mubr.f32.mxu0 0.0
      %1549 = vmatmul.mubr.f32.gmra.mrb[0].mxu0 %v1339
      %v1550 = vpop.f32.mrb[0].mxu0
      %v1551 = vadd.f32 %v1261, %v1550
      %v1552 = vpop.f32.mrb[0].mxu0
      %1553 = vmatprep.mubr.f32.mxu0 0.0
      %1554 = vmatmul.mubr.f32.gmra.mrb[0].mxu0 %v1342
      %v1555 = vpop.f32.mrb[0].mxu0
      %v1556 = vadd.f32 %v1261, %v1555
      %v1557 = vpop.f32.mrb[0].mxu0
      %1558 = vmatprep.mubr.f32.mxu0 0.0
      %1559 = vmatmul.mubr.f32.gmra.mrb[0].mxu0 %v1345
      %v1560 = vpop.f32.mrb[0].mxu0
      %v1561 = vadd.f32 %v1261, %v1560
      %v1562 = vpop.f32.mrb[0].mxu0
      %1563 = vmatprep.mubr.f32.mxu0 0.0
      %1564 = vmatmul.mubr.f32.gmra.mrb[0].mxu0 %v1348
      %v1565 = vpop.f32.mrb[0].mxu0
      %v1566 = vadd.f32 %v1261, %v1565
      %v1567 = vpop.f32.mrb[0].mxu0
      %1568 = vmatprep.mubr.f32.mxu0 0.0
      %1569 = vmatmul.mubr.f32.gmra.mrb[0].mxu0 %v1351
      %v1570 = vpop.f32.mrb[0].mxu0
      %v1571 = vadd.f32 %v1261, %v1570
      %v1572 = vpop.f32.mrb[0].mxu0
      %1573 = vmatprep.mubr.f32.mxu0 0.0
      %1574 = vmatmul.mubr.f32.gmra.mrb[0].mxu0 %v1354
      %v1575 = vpop.f32.mrb[0].mxu0
      %v1576 = vadd.f32 %v1261, %v1575
      %v1577 = vpop.f32.mrb[0].mxu0
      %1578 = vmatprep.mubr.f32.mxu0 0.0
      %1579 = vmatmul.mubr.f32.gmra.mrb[0].mxu0 %v1357
      %v1580 = vpop.f32.mrb[0].mxu0
      %v1581 = vadd.f32 %v1261, %v1580
      %v1582 = vpop.f32.mrb[0].mxu0
      %1583 = vdwg.mxu0
      %1585 = vset.pattern.permute.xlu0 0
      %1586 = vperm.xlu0 %1585, %v1188
      %v1587 = vpop.permute.xlu0 %1586
      %1590 = vset.pattern.permute.xlu0 0
      %1591 = vperm.xlu0 %1590, %v1189
      %v1592 = vpop.permute.xlu0 %1591
      %1595 = vset.pattern.permute.xlu0 0
      %1596 = vperm.xlu0 %1595, %v1190
      %v1597 = vpop.permute.xlu0 %1596
      %1600 = vset.pattern.permute.xlu0 0
      %1601 = vperm.xlu0 %1600, %v1191
      %v1602 = vpop.permute.xlu0 %1601
      %1605 = vset.pattern.permute.xlu0 0
      %1606 = vperm.xlu0 %1605, %v1192
      %v1607 = vpop.permute.xlu0 %1606
      %1610 = vset.pattern.permute.xlu0 0
      %1611 = vperm.xlu0 %1610, %v1193
      %v1612 = vpop.permute.xlu0 %1611
      %1615 = vset.pattern.permute.xlu0 0
      %1616 = vperm.xlu0 %1615, %v1194
      %v1617 = vpop.permute.xlu0 %1616
      %1620 = vset.pattern.permute.xlu0 0
      %1621 = vperm.xlu0 %1620, %v1195
      %v1622 = vpop.permute.xlu0 %1621
      %1625 = vset.pattern.permute.xlu0 0
      %1626 = vperm.xlu0 %1625, %v1196
      %v1627 = vpop.permute.xlu0 %1626
      %1630 = vset.pattern.permute.xlu0 0
      %1631 = vperm.xlu0 %1630, %v1197
      %v1632 = vpop.permute.xlu0 %1631
      %1635 = vset.pattern.permute.xlu0 0
      %1636 = vperm.xlu0 %1635, %v1198
      %v1637 = vpop.permute.xlu0 %1636
      %1640 = vset.pattern.permute.xlu0 0
      %1641 = vperm.xlu0 %1640, %v1199
      %v1642 = vpop.permute.xlu0 %1641
      %1645 = vset.pattern.permute.xlu0 0
      %1646 = vperm.xlu0 %1645, %v1200
      %v1647 = vpop.permute.xlu0 %1646
      %1650 = vset.pattern.permute.xlu0 0
      %1651 = vperm.xlu0 %1650, %v1201
      %v1652 = vpop.permute.xlu0 %1651
      %1655 = vset.pattern.permute.xlu0 0
      %1656 = vperm.xlu0 %1655, %v1202
      %v1657 = vpop.permute.xlu0 %1656
      %1660 = vset.pattern.permute.xlu0 0
      %1661 = vperm.xlu0 %1660, %v1203
      %v1662 = vpop.permute.xlu0 %1661
      %1665 = vset.pattern.permute.xlu0 0
      %1666 = vperm.xlu0 %1665, %v1204
      %v1667 = vpop.permute.xlu0 %1666
      %1670 = vset.pattern.permute.xlu0 0
      %1671 = vperm.xlu0 %1670, %v1205
      %v1672 = vpop.permute.xlu0 %1671
      %1675 = vset.pattern.permute.xlu0 0
      %1676 = vperm.xlu0 %1675, %v1206
      %v1677 = vpop.permute.xlu0 %1676
      %1680 = vset.pattern.permute.xlu0 0
      %1681 = vperm.xlu0 %1680, %v1207
      %v1682 = vpop.permute.xlu0 %1681
      %1685 = vset.pattern.permute.xlu0 0
      %1686 = vperm.xlu0 %1685, %v1208
      %v1687 = vpop.permute.xlu0 %1686
      %1690 = vset.pattern.permute.xlu0 0
      %1691 = vperm.xlu0 %1690, %v1209
      %v1692 = vpop.permute.xlu0 %1691
      %1695 = vset.pattern.permute.xlu0 0
      %1696 = vperm.xlu0 %1695, %v1210
      %v1697 = vpop.permute.xlu0 %1696
      %1700 = vset.pattern.permute.xlu0 0
      %1701 = vperm.xlu0 %1700, %v1211
      %v1702 = vpop.permute.xlu0 %1701
      %1705 = vset.pattern.permute.xlu0 0
      %1706 = vperm.xlu0 %1705, %v1212
      %v1707 = vpop.permute.xlu0 %1706
      %1710 = vset.pattern.permute.xlu0 0
      %1711 = vperm.xlu0 %1710, %v1213
      %v1712 = vpop.permute.xlu0 %1711
      %1715 = vset.pattern.permute.xlu0 0
      %1716 = vperm.xlu0 %1715, %v1214
      %v1717 = vpop.permute.xlu0 %1716
      %1720 = vset.pattern.permute.xlu0 0
      %1721 = vperm.xlu0 %1720, %v1215
      %v1722 = vpop.permute.xlu0 %1721
      %1725 = vset.pattern.permute.xlu0 0
      %1726 = vperm.xlu0 %1725, %v1216
      %v1727 = vpop.permute.xlu0 %1726
      %1730 = vset.pattern.permute.xlu0 0
      %1731 = vperm.xlu0 %1730, %v1217
      %v1732 = vpop.permute.xlu0 %1731
      %1735 = vset.pattern.permute.xlu0 0
      %1736 = vperm.xlu0 %1735, %v1218
      %v1737 = vpop.permute.xlu0 %1736
      %1740 = vset.pattern.permute.xlu0 0
      %1741 = vperm.xlu0 %1740, %v1219
      %v1742 = vpop.permute.xlu0 %1741
      %v1744 = vmul.f32 %v1426, %v1587
      %v1745 = vmul.f32 %v1431, %v1592
      %v1746 = vmul.f32 %v1436, %v1597
      %v1747 = vmul.f32 %v1441, %v1602
      %v1748 = vmul.f32 %v1446, %v1607
      %v1749 = vmul.f32 %v1451, %v1612
      %v1750 = vmul.f32 %v1456, %v1617
      %v1751 = vmul.f32 %v1461, %v1622
      %v1752 = vmul.f32 %v1466, %v1627
      %v1753 = vmul.f32 %v1471, %v1632
      %v1754 = vmul.f32 %v1476, %v1637
      %v1755 = vmul.f32 %v1481, %v1642
      %v1756 = vmul.f32 %v1486, %v1647
      %v1757 = vmul.f32 %v1491, %v1652
      %v1758 = vmul.f32 %v1496, %v1657
      %v1759 = vmul.f32 %v1501, %v1662
      %v1760 = vmul.f32 %v1506, %v1667
      %v1761 = vmul.f32 %v1511, %v1672
      %v1762 = vmul.f32 %v1516, %v1677
      %v1763 = vmul.f32 %v1521, %v1682
      %v1764 = vmul.f32 %v1526, %v1687
      %v1765 = vmul.f32 %v1531, %v1692
      %v1766 = vmul.f32 %v1536, %v1697
      %v1767 = vmul.f32 %v1541, %v1702
      %v1768 = vmul.f32 %v1546, %v1707
      %v1769 = vmul.f32 %v1551, %v1712
      %v1770 = vmul.f32 %v1556, %v1717
      %v1771 = vmul.f32 %v1561, %v1722
      %v1772 = vmul.f32 %v1566, %v1727
      %v1773 = vmul.f32 %v1571, %v1732
      %v1774 = vmul.f32 %v1576, %v1737
      %v1775 = vmul.f32 %v1581, %v1742
      %vm1776 = vcmask 130048
      %v1777 = vsel %vm1776, %v1744, 0.0
      %v1778 = vsel %vm1776, %v1745, 0.0
      %v1779 = vadd.f32 %v1777, %v1778
      %v1780 = vsel %vm1776, %v1746, 0.0
      %v1781 = vadd.f32 %v1779, %v1780
      %v1782 = vsel %vm1776, %v1747, 0.0
      %v1783 = vadd.f32 %v1781, %v1782
      %v1784 = vsel %vm1776, %v1748, 0.0
      %v1785 = vadd.f32 %v1783, %v1784
      %v1786 = vsel %vm1776, %v1749, 0.0
      %v1787 = vadd.f32 %v1785, %v1786
      %v1788 = vsel %vm1776, %v1750, 0.0
      %v1789 = vadd.f32 %v1787, %v1788
      %v1790 = vsel %vm1776, %v1751, 0.0
      %v1791 = vadd.f32 %v1789, %v1790
      %v1792 = vsel %vm1776, %v1752, 0.0
      %v1793 = vadd.f32 %v1791, %v1792
      %v1794 = vsel %vm1776, %v1753, 0.0
      %v1795 = vadd.f32 %v1793, %v1794
      %v1796 = vsel %vm1776, %v1754, 0.0
      %v1797 = vadd.f32 %v1795, %v1796
      %v1798 = vsel %vm1776, %v1755, 0.0
      %v1799 = vadd.f32 %v1797, %v1798
      %v1800 = vsel %vm1776, %v1756, 0.0
      %v1801 = vadd.f32 %v1799, %v1800
      %v1802 = vsel %vm1776, %v1757, 0.0
      %v1803 = vadd.f32 %v1801, %v1802
      %v1804 = vsel %vm1776, %v1758, 0.0
      %v1805 = vadd.f32 %v1803, %v1804
      %v1806 = vsel %vm1776, %v1759, 0.0
      %v1807 = vadd.f32 %v1805, %v1806
      %v1808 = vsel %vm1776, %v1760, 0.0
      %v1809 = vadd.f32 %v1807, %v1808
      %v1810 = vsel %vm1776, %v1761, 0.0
      %v1811 = vadd.f32 %v1809, %v1810
      %v1812 = vsel %vm1776, %v1762, 0.0
      %v1813 = vadd.f32 %v1811, %v1812
      %v1814 = vsel %vm1776, %v1763, 0.0
      %v1815 = vadd.f32 %v1813, %v1814
      %v1816 = vsel %vm1776, %v1764, 0.0
      %v1817 = vadd.f32 %v1815, %v1816
      %v1818 = vsel %vm1776, %v1765, 0.0
      %v1819 = vadd.f32 %v1817, %v1818
      %v1820 = vsel %vm1776, %v1766, 0.0
      %v1821 = vadd.f32 %v1819, %v1820
      %v1822 = vsel %vm1776, %v1767, 0.0
      %v1823 = vadd.f32 %v1821, %v1822
      %v1824 = vsel %vm1776, %v1768, 0.0
      %v1825 = vadd.f32 %v1823, %v1824
      %v1826 = vsel %vm1776, %v1769, 0.0
      %v1827 = vadd.f32 %v1825, %v1826
      %v1828 = vsel %vm1776, %v1770, 0.0
      %v1829 = vadd.f32 %v1827, %v1828
      %v1830 = vsel %vm1776, %v1771, 0.0
      %v1831 = vadd.f32 %v1829, %v1830
      %v1832 = vsel %vm1776, %v1772, 0.0
      %v1833 = vadd.f32 %v1831, %v1832
      %v1834 = vsel %vm1776, %v1773, 0.0
      %v1835 = vadd.f32 %v1833, %v1834
      %v1836 = vsel %vm1776, %v1774, 0.0
      %v1837 = vadd.f32 %v1835, %v1836
      %v1838 = vsel %vm1776, %v1775, 0.0
      %v1839 = vadd.f32 %v1837, %v1838
      %v1840 = vrot.slane %v1839, 4
      %v1841 = vadd.f32 %v1839, %v1840
      %v1842 = vrot.slane %v1841, 2
      %v1843 = vadd.f32 %v1841, %v1842
      %v1844 = vrot.slane %v1843, 1
      %v1845 = vadd.f32 %v1843, %v1844
      %v1846 = vmul.f32 %v1744, %v1744
      %v1847 = vmul.f32 %v1745, %v1745
      %v1848 = vmul.f32 %v1746, %v1746
      %v1849 = vmul.f32 %v1747, %v1747
      %v1850 = vmul.f32 %v1748, %v1748
      %v1851 = vmul.f32 %v1749, %v1749
      %v1852 = vmul.f32 %v1750, %v1750
      %v1853 = vmul.f32 %v1751, %v1751
      %v1854 = vmul.f32 %v1752, %v1752
      %v1855 = vmul.f32 %v1753, %v1753
      %v1856 = vmul.f32 %v1754, %v1754
      %v1857 = vmul.f32 %v1755, %v1755
      %v1858 = vmul.f32 %v1756, %v1756
      %v1859 = vmul.f32 %v1757, %v1757
      %v1860 = vmul.f32 %v1758, %v1758
      %v1861 = vmul.f32 %v1759, %v1759
      %v1862 = vmul.f32 %v1760, %v1760
      %v1863 = vmul.f32 %v1761, %v1761
      %v1864 = vmul.f32 %v1762, %v1762
      %v1865 = vmul.f32 %v1763, %v1763
      %v1866 = vmul.f32 %v1764, %v1764
      %v1867 = vmul.f32 %v1765, %v1765
      %v1868 = vmul.f32 %v1766, %v1766
      %v1869 = vmul.f32 %v1767, %v1767
      %v1870 = vmul.f32 %v1768, %v1768
      %v1871 = vmul.f32 %v1769, %v1769
      %v1872 = vmul.f32 %v1770, %v1770
      %v1873 = vmul.f32 %v1771, %v1771
      %v1874 = vmul.f32 %v1772, %v1772
      %v1875 = vmul.f32 %v1773, %v1773
      %v1876 = vmul.f32 %v1774, %v1774
      %v1877 = vmul.f32 %v1775, %v1775
      %v1878 = vsel %vm1776, %v1846, 0.0
      %v1879 = vsel %vm1776, %v1847, 0.0
      %v1880 = vadd.f32 %v1878, %v1879
      %v1881 = vsel %vm1776, %v1848, 0.0
      %v1882 = vadd.f32 %v1880, %v1881
      %v1883 = vsel %vm1776, %v1849, 0.0
      %v1884 = vadd.f32 %v1882, %v1883
      %v1885 = vsel %vm1776, %v1850, 0.0
      %v1886 = vadd.f32 %v1884, %v1885
      %v1887 = vsel %vm1776, %v1851, 0.0
      %v1888 = vadd.f32 %v1886, %v1887
      %v1889 = vsel %vm1776, %v1852, 0.0
      %v1890 = vadd.f32 %v1888, %v1889
      %v1891 = vsel %vm1776, %v1853, 0.0
      %v1892 = vadd.f32 %v1890, %v1891
      %v1893 = vsel %vm1776, %v1854, 0.0
      %v1894 = vadd.f32 %v1892, %v1893
      %v1895 = vsel %vm1776, %v1855, 0.0
      %v1896 = vadd.f32 %v1894, %v1895
      %v1897 = vsel %vm1776, %v1856, 0.0
      %v1898 = vadd.f32 %v1896, %v1897
      %v1899 = vsel %vm1776, %v1857, 0.0
      %v1900 = vadd.f32 %v1898, %v1899
      %v1901 = vsel %vm1776, %v1858, 0.0
      %v1902 = vadd.f32 %v1900, %v1901
      %v1903 = vsel %vm1776, %v1859, 0.0
      %v1904 = vadd.f32 %v1902, %v1903
      %v1905 = vsel %vm1776, %v1860, 0.0
      %v1906 = vadd.f32 %v1904, %v1905
      %v1907 = vsel %vm1776, %v1861, 0.0
      %v1908 = vadd.f32 %v1906, %v1907
      %v1909 = vsel %vm1776, %v1862, 0.0
      %v1910 = vadd.f32 %v1908, %v1909
      %v1911 = vsel %vm1776, %v1863, 0.0
      %v1912 = vadd.f32 %v1910, %v1911
      %v1913 = vsel %vm1776, %v1864, 0.0
      %v1914 = vadd.f32 %v1912, %v1913
      %v1915 = vsel %vm1776, %v1865, 0.0
      %v1916 = vadd.f32 %v1914, %v1915
      %v1917 = vsel %vm1776, %v1866, 0.0
      %v1918 = vadd.f32 %v1916, %v1917
      %v1919 = vsel %vm1776, %v1867, 0.0
      %v1920 = vadd.f32 %v1918, %v1919
      %v1921 = vsel %vm1776, %v1868, 0.0
      %v1922 = vadd.f32 %v1920, %v1921
      %v1923 = vsel %vm1776, %v1869, 0.0
      %v1924 = vadd.f32 %v1922, %v1923
      %v1925 = vsel %vm1776, %v1870, 0.0
      %v1926 = vadd.f32 %v1924, %v1925
      %v1927 = vsel %vm1776, %v1871, 0.0
      %v1928 = vadd.f32 %v1926, %v1927
      %v1929 = vsel %vm1776, %v1872, 0.0
      %v1930 = vadd.f32 %v1928, %v1929
      %v1931 = vsel %vm1776, %v1873, 0.0
      %v1932 = vadd.f32 %v1930, %v1931
      %v1933 = vsel %vm1776, %v1874, 0.0
      %v1934 = vadd.f32 %v1932, %v1933
      %v1935 = vsel %vm1776, %v1875, 0.0
      %v1936 = vadd.f32 %v1934, %v1935
      %v1937 = vsel %vm1776, %v1876, 0.0
      %v1938 = vadd.f32 %v1936, %v1937
      %v1939 = vsel %vm1776, %v1877, 0.0
      %v1940 = vadd.f32 %v1938, %v1939
      %v1941 = vrot.slane %v1940, 4
      %v1942 = vadd.f32 %v1940, %v1941
      %v1943 = vrot.slane %v1942, 2
      %v1944 = vadd.f32 %v1942, %v1943
      %v1945 = vrot.slane %v1944, 1
      %v1946 = vadd.f32 %v1944, %v1945
      %v1947 = vmul.f32 %v1845, 0.0069444445
      %v1948 = vmul.f32 %v1946, 0.0069444445
      %v1949 = vmul.f32 %v1947, %v1947
      %v1950 = vsub.f32 %v1948, %v1949
      %v1951 = vmax.f32 %v1950, 0.0
      %v1952 = vsub.f32 %v1744, %v1947
      %v1953 = vsub.f32 %v1745, %v1947
      %v1954 = vsub.f32 %v1746, %v1947
      %v1955 = vsub.f32 %v1747, %v1947
      %v1956 = vsub.f32 %v1748, %v1947
      %v1957 = vsub.f32 %v1749, %v1947
      %v1958 = vsub.f32 %v1750, %v1947
      %v1959 = vsub.f32 %v1751, %v1947
      %v1960 = vsub.f32 %v1752, %v1947
      %v1961 = vsub.f32 %v1753, %v1947
      %v1962 = vsub.f32 %v1754, %v1947
      %v1963 = vsub.f32 %v1755, %v1947
      %v1964 = vsub.f32 %v1756, %v1947
      %v1965 = vsub.f32 %v1757, %v1947
      %v1966 = vsub.f32 %v1758, %v1947
      %v1967 = vsub.f32 %v1759, %v1947
      %v1968 = vsub.f32 %v1760, %v1947
      %v1969 = vsub.f32 %v1761, %v1947
      %v1970 = vsub.f32 %v1762, %v1947
      %v1971 = vsub.f32 %v1763, %v1947
      %v1972 = vsub.f32 %v1764, %v1947
      %v1973 = vsub.f32 %v1765, %v1947
      %v1974 = vsub.f32 %v1766, %v1947
      %v1975 = vsub.f32 %v1767, %v1947
      %v1976 = vsub.f32 %v1768, %v1947
      %v1977 = vsub.f32 %v1769, %v1947
      %v1978 = vsub.f32 %v1770, %v1947
      %v1979 = vsub.f32 %v1771, %v1947
      %v1980 = vsub.f32 %v1772, %v1947
      %v1981 = vsub.f32 %v1773, %v1947
      %v1982 = vsub.f32 %v1774, %v1947
      %v1983 = vsub.f32 %v1775, %v1947
      %v1984 = vadd.f32 %v1951, 1e-05
      %v1985 = vrsqrt.pop %v1984
      %v1986 = vmul.f32 %v1952, %v1985
      %v1987 = vmul.f32 %v1953, %v1985
      %v1988 = vmul.f32 %v1954, %v1985
      %v1989 = vmul.f32 %v1955, %v1985
      %v1990 = vmul.f32 %v1956, %v1985
      %v1991 = vmul.f32 %v1957, %v1985
      %v1992 = vmul.f32 %v1958, %v1985
      %v1993 = vmul.f32 %v1959, %v1985
      %v1994 = vmul.f32 %v1960, %v1985
      %v1995 = vmul.f32 %v1961, %v1985
      %v1996 = vmul.f32 %v1962, %v1985
      %v1997 = vmul.f32 %v1963, %v1985
      %v1998 = vmul.f32 %v1964, %v1985
      %v1999 = vmul.f32 %v1965, %v1985
      %v2000 = vmul.f32 %v1966, %v1985
      %v2001 = vmul.f32 %v1967, %v1985
      %v2002 = vmul.f32 %v1968, %v1985
      %v2003 = vmul.f32 %v1969, %v1985
      %v2004 = vmul.f32 %v1970, %v1985
      %v2005 = vmul.f32 %v1971, %v1985
      %v2006 = vmul.f32 %v1972, %v1985
      %v2007 = vmul.f32 %v1973, %v1985
      %v2008 = vmul.f32 %v1974, %v1985
      %v2009 = vmul.f32 %v1975, %v1985
      %v2010 = vmul.f32 %v1976, %v1985
      %v2011 = vmul.f32 %v1977, %v1985
      %v2012 = vmul.f32 %v1978, %v1985
      %v2013 = vmul.f32 %v1979, %v1985
      %v2014 = vmul.f32 %v1980, %v1985
      %v2015 = vmul.f32 %v1981, %v1985
      %v2016 = vmul.f32 %v1982, %v1985
      %v2017 = vmul.f32 %v1983, %v1985
      %v2018 = vmax.f32 %v1986, 0.0
      %v2019 = vmax.f32 %v1987, 0.0
      %v2020 = vmax.f32 %v1988, 0.0
      %v2021 = vmax.f32 %v1989, 0.0
      %v2022 = vmax.f32 %v1990, 0.0
      %v2023 = vmax.f32 %v1991, 0.0
      %v2024 = vmax.f32 %v1992, 0.0
      %v2025 = vmax.f32 %v1993, 0.0
      %v2026 = vmax.f32 %v1994, 0.0
      %v2027 = vmax.f32 %v1995, 0.0
      %v2028 = vmax.f32 %v1996, 0.0
      %v2029 = vmax.f32 %v1997, 0.0
      %v2030 = vmax.f32 %v1998, 0.0
      %v2031 = vmax.f32 %v1999, 0.0
      %v2032 = vmax.f32 %v2000, 0.0
      %v2033 = vmax.f32 %v2001, 0.0
      %v2034 = vmax.f32 %v2002, 0.0
      %v2035 = vmax.f32 %v2003, 0.0
      %v2036 = vmax.f32 %v2004, 0.0
      %v2037 = vmax.f32 %v2005, 0.0
      %v2038 = vmax.f32 %v2006, 0.0
      %v2039 = vmax.f32 %v2007, 0.0
      %v2040 = vmax.f32 %v2008, 0.0
      %v2041 = vmax.f32 %v2009, 0.0
      %v2042 = vmax.f32 %v2010, 0.0
      %v2043 = vmax.f32 %v2011, 0.0
      %v2044 = vmax.f32 %v2012, 0.0
      %v2045 = vmax.f32 %v2013, 0.0
      %v2046 = vmax.f32 %v2014, 0.0
      %v2047 = vmax.f32 %v2015, 0.0
      %v2048 = vmax.f32 %v2016, 0.0
      %v2049 = vmax.f32 %v2017, 0.0
      %v2050 = vmul.f32 %v2018, %v1587
      %v2051 = vmul.f32 %v2019, %v1592
      %v2052 = vmul.f32 %v2020, %v1597
      %v2053 = vmul.f32 %v2021, %v1602
      %v2054 = vmul.f32 %v2022, %v1607
      %v2055 = vmul.f32 %v2023, %v1612
      %v2056 = vmul.f32 %v2024, %v1617
      %v2057 = vmul.f32 %v2025, %v1622
      %v2058 = vmul.f32 %v2026, %v1627
      %v2059 = vmul.f32 %v2027, %v1632
      %v2060 = vmul.f32 %v2028, %v1637
      %v2061 = vmul.f32 %v2029, %v1642
      %v2062 = vmul.f32 %v2030, %v1647
      %v2063 = vmul.f32 %v2031, %v1652
      %v2064 = vmul.f32 %v2032, %v1657
      %v2065 = vmul.f32 %v2033, %v1662
      %v2066 = vmul.f32 %v2034, %v1667
      %v2067 = vmul.f32 %v2035, %v1672
      %v2068 = vmul.f32 %v2036, %v1677
      %v2069 = vmul.f32 %v2037, %v1682
      %v2070 = vmul.f32 %v2038, %v1687
      %v2071 = vmul.f32 %v2039, %v1692
      %v2072 = vmul.f32 %v2040, %v1697
      %v2073 = vmul.f32 %v2041, %v1702
      %v2074 = vmul.f32 %v2042, %v1707
      %v2075 = vmul.f32 %v2043, %v1712
      %v2076 = vmul.f32 %v2044, %v1717
      %v2077 = vmul.f32 %v2045, %v1722
      %v2078 = vmul.f32 %v2046, %v1727
      %v2079 = vmul.f32 %v2047, %v1732
      %v2080 = vmul.f32 %v2048, %v1737
      %v2081 = vmul.f32 %v2049, %v1742
      %v2082 = vld [vmem:[%s7] sm:$0xff]
      %v2083 = vld [vmem:[%s7 + $0x8] sm:$0xff]
      %v2084 = vld [vmem:[%s7 + $0x10] sm:$0xff]
      %v2085 = vld [vmem:[%s7 + $0x18] sm:$0xff]
      %v2086 = vld [vmem:[%s8] sm:$0xff]
      %v2087 = vld [vmem:[%s8 + $0x8] sm:$0xff]
      %v2089 = vsel %vm1776, %v2050, 0
      %v2092 = vsel %vm1776, %v2051, 0
      %v2095 = vsel %vm1776, %v2052, 0
      %v2098 = vsel %vm1776, %v2053, 0
      %v2101 = vsel %vm1776, %v2054, 0
      %v2104 = vsel %vm1776, %v2055, 0
      %v2107 = vsel %vm1776, %v2056, 0
      %v2110 = vsel %vm1776, %v2057, 0
      %v2113 = vsel %vm1776, %v2058, 0
      %v2116 = vsel %vm1776, %v2059, 0
      %v2119 = vsel %vm1776, %v2060, 0
      %v2122 = vsel %vm1776, %v2061, 0
      %v2125 = vsel %vm1776, %v2062, 0
      %v2128 = vsel %vm1776, %v2063, 0
      %v2131 = vsel %vm1776, %v2064, 0
      %v2134 = vsel %vm1776, %v2065, 0
      %v2137 = vsel %vm1776, %v2066, 0
      %v2140 = vsel %vm1776, %v2067, 0
      %v2143 = vsel %vm1776, %v2068, 0
      %v2146 = vsel %vm1776, %v2069, 0
      %v2149 = vsel %vm1776, %v2070, 0
      %v2152 = vsel %vm1776, %v2071, 0
      %v2155 = vsel %vm1776, %v2072, 0
      %v2158 = vsel %vm1776, %v2073, 0
      %v2161 = vsel %vm1776, %v2074, 0
      %v2164 = vsel %vm1776, %v2075, 0
      %v2167 = vsel %vm1776, %v2076, 0
      %v2170 = vsel %vm1776, %v2077, 0
      %v2173 = vsel %vm1776, %v2078, 0
      %v2176 = vsel %vm1776, %v2079, 0
      %v2179 = vsel %vm1776, %v2080, 0
      %v2182 = vsel %vm1776, %v2081, 0
      %2184 = vmatprep.subr.mxu0 0.0
      %2185 = vmatpush1.msra.mxu0 %v2086
      %2186 = vmatprep.subr.mxu0 0.0
      %2187 = vmatpush1.msra.mxu0 %v2087
      %2188 = vmatprep.subr.mxu0 0.0
      %2189 = vmatpush1.msra.mxu0 0.0
      %2190 = vmatprep.subr.mxu0 0.0
      %2191 = vmatpush1.msra.mxu0 0.0
      %2192 = vmatprep.subr.mxu0 0.0
      %2193 = vmatpush1.msra.mxu0 0.0
      %2194 = vmatprep.subr.mxu0 0.0
      %2195 = vmatpush1.msra.mxu0 0.0
      %2196 = vmatprep.subr.mxu0 0.0
      %2197 = vmatpush1.msra.mxu0 0.0
      %2198 = vmatprep.subr.mxu0 0.0
      %2199 = vmatpush1.msra.mxu0 0.0
      %2200 = vmatprep.subr.mxu0 0.0
      %2201 = vmatpush1.msra.mxu0 0.0
      %2202 = vmatprep.subr.mxu0 0.0
      %2203 = vmatpush1.msra.mxu0 0.0
      %2204 = vmatprep.subr.mxu0 0.0
      %2205 = vmatpush1.msra.mxu0 0.0
      %2206 = vmatprep.subr.mxu0 0.0
      %2207 = vmatpush1.msra.mxu0 0.0
      %2208 = vmatprep.subr.mxu0 0.0
      %2209 = vmatpush1.msra.mxu0 0.0
      %2210 = vmatprep.subr.mxu0 0.0
      %2211 = vmatpush1.msra.mxu0 0.0
      %2212 = vmatprep.subr.mxu0 0.0
      %2213 = vmatpush1.msra.mxu0 0.0
      %2214 = vmatprep.subr.mxu0 0.0
      %2215 = vmatpush1.msra.mxu0 0.0
      %2216 = vmatprep.subr.mxu0 0.0
      %2217 = vmatpush1.msra.mxu0 0.0
      %2218 = vmatprep.subr.mxu0 0.0
      %2219 = vmatpush1.msra.mxu0 0.0
      %2220 = vmatprep.subr.mxu0 0.0
      %2221 = vmatpush1.msra.mxu0 0.0
      %2222 = vmatprep.subr.mxu0 0.0
      %2223 = vmatpush1.msra.mxu0 0.0
      %2224 = vmatprep.subr.mxu0 0.0
      %2225 = vmatpush1.msra.mxu0 0.0
      %2226 = vmatprep.subr.mxu0 0.0
      %2227 = vmatpush1.msra.mxu0 0.0
      %2228 = vmatprep.subr.mxu0 0.0
      %2229 = vmatpush1.msra.mxu0 0.0
      %2230 = vmatprep.subr.mxu0 0.0
      %2231 = vmatpush1.msra.mxu0 0.0
      %2232 = vmatprep.subr.mxu0 0.0
      %2233 = vmatpush1.msra.mxu0 0.0
      %2234 = vmatprep.subr.mxu0 0.0
      %2235 = vmatpush1.msra.mxu0 0.0
      %2236 = vmatprep.subr.mxu0 0.0
      %2237 = vmatpush1.msra.mxu0 0.0
      %2238 = vmatprep.subr.mxu0 0.0
      %2239 = vmatpush1.msra.mxu0 0.0
      %2240 = vmatprep.subr.mxu0 0.0
      %2241 = vmatpush1.msra.mxu0 0.0
      %2242 = vmatprep.subr.mxu0 0.0
      %2243 = vmatpush1.msra.mxu0 0.0
      %2244 = vmatprep.subr.mxu0 0.0
      %2245 = vmatpush1.msra.mxu0 0.0
      %2246 = vmatprep.subr.mxu0 0.0
      %2247 = vmatpush1.msra.mxu0 0.0
      %2248 = vmatprep.mubr.f32.mxu0 0.0
      %2249 = vmatmul.mubr.f32.gmra.mrb[0].mxu0 %v2089
      %v2250 = vpop.f32.mrb[0].mxu0
      %v2251 = vadd.f32 0.0, %v2250
      %v2252 = vpop.f32.mrb[0].mxu0
      %2253 = vmatprep.mubr.f32.mxu0 0.0
      %2254 = vmatmul.mubr.f32.gmra.mrb[0].mxu0 %v2092
      %v2255 = vpop.f32.mrb[0].mxu0
      %v2256 = vadd.f32 0.0, %v2255
      %v2257 = vpop.f32.mrb[0].mxu0
      %2258 = vmatprep.mubr.f32.mxu0 0.0
      %2259 = vmatmul.mubr.f32.gmra.mrb[0].mxu0 %v2095
      %v2260 = vpop.f32.mrb[0].mxu0
      %v2261 = vadd.f32 0.0, %v2260
      %v2262 = vpop.f32.mrb[0].mxu0
      %2263 = vmatprep.mubr.f32.mxu0 0.0
      %2264 = vmatmul.mubr.f32.gmra.mrb[0].mxu0 %v2098
      %v2265 = vpop.f32.mrb[0].mxu0
      %v2266 = vadd.f32 0.0, %v2265
      %v2267 = vpop.f32.mrb[0].mxu0
      %2268 = vmatprep.mubr.f32.mxu0 0.0
      %2269 = vmatmul.mubr.f32.gmra.mrb[0].mxu0 %v2101
      %v2270 = vpop.f32.mrb[0].mxu0
      %v2271 = vadd.f32 0.0, %v2270
      %v2272 = vpop.f32.mrb[0].mxu0
      %2273 = vmatprep.mubr.f32.mxu0 0.0
      %2274 = vmatmul.mubr.f32.gmra.mrb[0].mxu0 %v2104
      %v2275 = vpop.f32.mrb[0].mxu0
      %v2276 = vadd.f32 0.0, %v2275
      %v2277 = vpop.f32.mrb[0].mxu0
      %2278 = vmatprep.mubr.f32.mxu0 0.0
      %2279 = vmatmul.mubr.f32.gmra.mrb[0].mxu0 %v2107
      %v2280 = vpop.f32.mrb[0].mxu0
      %v2281 = vadd.f32 0.0, %v2280
      %v2282 = vpop.f32.mrb[0].mxu0
      %2283 = vmatprep.mubr.f32.mxu0 0.0
      %2284 = vmatmul.mubr.f32.gmra.mrb[0].mxu0 %v2110
      %v2285 = vpop.f32.mrb[0].mxu0
      %v2286 = vadd.f32 0.0, %v2285
      %v2287 = vpop.f32.mrb[0].mxu0
      %2288 = vmatprep.mubr.f32.mxu0 0.0
      %2289 = vmatmul.mubr.f32.gmra.mrb[0].mxu0 %v2113
      %v2290 = vpop.f32.mrb[0].mxu0
      %v2291 = vadd.f32 0.0, %v2290
      %v2292 = vpop.f32.mrb[0].mxu0
      %2293 = vmatprep.mubr.f32.mxu0 0.0
      %2294 = vmatmul.mubr.f32.gmra.mrb[0].mxu0 %v2116
      %v2295 = vpop.f32.mrb[0].mxu0
      %v2296 = vadd.f32 0.0, %v2295
      %v2297 = vpop.f32.mrb[0].mxu0
      %2298 = vmatprep.mubr.f32.mxu0 0.0
      %2299 = vmatmul.mubr.f32.gmra.mrb[0].mxu0 %v2119
      %v2300 = vpop.f32.mrb[0].mxu0
      %v2301 = vadd.f32 0.0, %v2300
      %v2302 = vpop.f32.mrb[0].mxu0
      %2303 = vmatprep.mubr.f32.mxu0 0.0
      %2304 = vmatmul.mubr.f32.gmra.mrb[0].mxu0 %v2122
      %v2305 = vpop.f32.mrb[0].mxu0
      %v2306 = vadd.f32 0.0, %v2305
      %v2307 = vpop.f32.mrb[0].mxu0
      %2308 = vmatprep.mubr.f32.mxu0 0.0
      %2309 = vmatmul.mubr.f32.gmra.mrb[0].mxu0 %v2125
      %v2310 = vpop.f32.mrb[0].mxu0
      %v2311 = vadd.f32 0.0, %v2310
      %v2312 = vpop.f32.mrb[0].mxu0
      %2313 = vmatprep.mubr.f32.mxu0 0.0
      %2314 = vmatmul.mubr.f32.gmra.mrb[0].mxu0 %v2128
      %v2315 = vpop.f32.mrb[0].mxu0
      %v2316 = vadd.f32 0.0, %v2315
      %v2317 = vpop.f32.mrb[0].mxu0
      %2318 = vmatprep.mubr.f32.mxu0 0.0
      %2319 = vmatmul.mubr.f32.gmra.mrb[0].mxu0 %v2131
      %v2320 = vpop.f32.mrb[0].mxu0
      %v2321 = vadd.f32 0.0, %v2320
      %v2322 = vpop.f32.mrb[0].mxu0
      %2323 = vmatprep.mubr.f32.mxu0 0.0
      %2324 = vmatmul.mubr.f32.gmra.mrb[0].mxu0 %v2134
      %v2325 = vpop.f32.mrb[0].mxu0
      %v2326 = vadd.f32 0.0, %v2325
      %v2327 = vpop.f32.mrb[0].mxu0
      %2328 = vmatprep.mubr.f32.mxu0 0.0
      %2329 = vmatmul.mubr.f32.gmra.mrb[0].mxu0 %v2137
      %v2330 = vpop.f32.mrb[0].mxu0
      %v2331 = vadd.f32 0.0, %v2330
      %v2332 = vpop.f32.mrb[0].mxu0
      %2333 = vmatprep.mubr.f32.mxu0 0.0
      %2334 = vmatmul.mubr.f32.gmra.mrb[0].mxu0 %v2140
      %v2335 = vpop.f32.mrb[0].mxu0
      %v2336 = vadd.f32 0.0, %v2335
      %v2337 = vpop.f32.mrb[0].mxu0
      %2338 = vmatprep.mubr.f32.mxu0 0.0
      %2339 = vmatmul.mubr.f32.gmra.mrb[0].mxu0 %v2143
      %v2340 = vpop.f32.mrb[0].mxu0
      %v2341 = vadd.f32 0.0, %v2340
      %v2342 = vpop.f32.mrb[0].mxu0
      %2343 = vmatprep.mubr.f32.mxu0 0.0
      %2344 = vmatmul.mubr.f32.gmra.mrb[0].mxu0 %v2146
      %v2345 = vpop.f32.mrb[0].mxu0
      %v2346 = vadd.f32 0.0, %v2345
      %v2347 = vpop.f32.mrb[0].mxu0
      %2348 = vmatprep.mubr.f32.mxu0 0.0
      %2349 = vmatmul.mubr.f32.gmra.mrb[0].mxu0 %v2149
      %v2350 = vpop.f32.mrb[0].mxu0
      %v2351 = vadd.f32 0.0, %v2350
      %v2352 = vpop.f32.mrb[0].mxu0
      %2353 = vmatprep.mubr.f32.mxu0 0.0
      %2354 = vmatmul.mubr.f32.gmra.mrb[0].mxu0 %v2152
      %v2355 = vpop.f32.mrb[0].mxu0
      %v2356 = vadd.f32 0.0, %v2355
      %v2357 = vpop.f32.mrb[0].mxu0
      %2358 = vmatprep.mubr.f32.mxu0 0.0
      %2359 = vmatmul.mubr.f32.gmra.mrb[0].mxu0 %v2155
      %v2360 = vpop.f32.mrb[0].mxu0
      %v2361 = vadd.f32 0.0, %v2360
      %v2362 = vpop.f32.mrb[0].mxu0
      %2363 = vmatprep.mubr.f32.mxu0 0.0
      %2364 = vmatmul.mubr.f32.gmra.mrb[0].mxu0 %v2158
      %v2365 = vpop.f32.mrb[0].mxu0
      %v2366 = vadd.f32 0.0, %v2365
      %v2367 = vpop.f32.mrb[0].mxu0
      %2368 = vmatprep.mubr.f32.mxu0 0.0
      %2369 = vmatmul.mubr.f32.gmra.mrb[0].mxu0 %v2161
      %v2370 = vpop.f32.mrb[0].mxu0
      %v2371 = vadd.f32 0.0, %v2370
      %v2372 = vpop.f32.mrb[0].mxu0
      %2373 = vmatprep.mubr.f32.mxu0 0.0
      %2374 = vmatmul.mubr.f32.gmra.mrb[0].mxu0 %v2164
      %v2375 = vpop.f32.mrb[0].mxu0
      %v2376 = vadd.f32 0.0, %v2375
      %v2377 = vpop.f32.mrb[0].mxu0
      %2378 = vmatprep.mubr.f32.mxu0 0.0
      %2379 = vmatmul.mubr.f32.gmra.mrb[0].mxu0 %v2167
      %v2380 = vpop.f32.mrb[0].mxu0
      %v2381 = vadd.f32 0.0, %v2380
      %v2382 = vpop.f32.mrb[0].mxu0
      %2383 = vmatprep.mubr.f32.mxu0 0.0
      %2384 = vmatmul.mubr.f32.gmra.mrb[0].mxu0 %v2170
      %v2385 = vpop.f32.mrb[0].mxu0
      %v2386 = vadd.f32 0.0, %v2385
      %v2387 = vpop.f32.mrb[0].mxu0
      %2388 = vmatprep.mubr.f32.mxu0 0.0
      %2389 = vmatmul.mubr.f32.gmra.mrb[0].mxu0 %v2173
      %v2390 = vpop.f32.mrb[0].mxu0
      %v2391 = vadd.f32 0.0, %v2390
      %v2392 = vpop.f32.mrb[0].mxu0
      %2393 = vmatprep.mubr.f32.mxu0 0.0
      %2394 = vmatmul.mubr.f32.gmra.mrb[0].mxu0 %v2176
      %v2395 = vpop.f32.mrb[0].mxu0
      %v2396 = vadd.f32 0.0, %v2395
      %v2397 = vpop.f32.mrb[0].mxu0
      %2398 = vmatprep.mubr.f32.mxu0 0.0
      %2399 = vmatmul.mubr.f32.gmra.mrb[0].mxu0 %v2179
      %v2400 = vpop.f32.mrb[0].mxu0
      %v2401 = vadd.f32 0.0, %v2400
      %v2402 = vpop.f32.mrb[0].mxu0
      %2403 = vmatprep.mubr.f32.mxu0 0.0
      %2404 = vmatmul.mubr.f32.gmra.mrb[0].mxu0 %v2182
      %v2405 = vpop.f32.mrb[0].mxu0
      %v2406 = vadd.f32 0.0, %v2405
      %v2407 = vpop.f32.mrb[0].mxu0
      %2408 = vdwg.mxu0
      %v2410 = vsel %vm914, %v1156, 0
      %v2413 = vsel %vm914, %v1157, 0
      %v2416 = vsel %vm914, %v1158, 0
      %v2419 = vsel %vm914, %v1159, 0
      %v2422 = vsel %vm914, %v1160, 0
      %v2425 = vsel %vm914, %v1161, 0
      %v2428 = vsel %vm914, %v1162, 0
      %v2431 = vsel %vm914, %v1163, 0
      %v2434 = vsel %vm914, %v1164, 0
      %v2437 = vsel %vm914, %v1165, 0
      %v2440 = vsel %vm914, %v1166, 0
      %v2443 = vsel %vm914, %v1167, 0
      %v2446 = vsel %vm914, %v1168, 0
      %v2449 = vsel %vm914, %v1169, 0
      %v2452 = vsel %vm914, %v1170, 0
      %v2455 = vsel %vm914, %v1171, 0
      %v2458 = vsel %vm914, %v1172, 0
      %v2461 = vsel %vm914, %v1173, 0
      %v2464 = vsel %vm914, %v1174, 0
      %v2467 = vsel %vm914, %v1175, 0
      %v2470 = vsel %vm914, %v1176, 0
      %v2473 = vsel %vm914, %v1177, 0
      %v2476 = vsel %vm914, %v1178, 0
      %v2479 = vsel %vm914, %v1179, 0
      %v2482 = vsel %vm914, %v1180, 0
      %v2485 = vsel %vm914, %v1181, 0
      %v2488 = vsel %vm914, %v1182, 0
      %v2491 = vsel %vm914, %v1183, 0
      %v2494 = vsel %vm914, %v1184, 0
      %v2497 = vsel %vm914, %v1185, 0
      %v2500 = vsel %vm914, %v1186, 0
      %v2503 = vsel %vm914, %v1187, 0
      %2505 = vmatprep.subr.mxu0 0.0
      %2506 = vmatpush1.msra.mxu0 %v2082
      %2507 = vmatprep.subr.mxu0 0.0
      %2508 = vmatpush1.msra.mxu0 %v2083
      %2509 = vmatprep.subr.mxu0 0.0
      %2510 = vmatpush1.msra.mxu0 %v2084
      %2511 = vmatprep.subr.mxu0 0.0
      %2512 = vmatpush1.msra.mxu0 %v2085
      %2513 = vmatprep.subr.mxu0 0.0
      %2514 = vmatpush1.msra.mxu0 0.0
      %2515 = vmatprep.subr.mxu0 0.0
      %2516 = vmatpush1.msra.mxu0 0.0
      %2517 = vmatprep.subr.mxu0 0.0
      %2518 = vmatpush1.msra.mxu0 0.0
      %2519 = vmatprep.subr.mxu0 0.0
      %2520 = vmatpush1.msra.mxu0 0.0
      %2521 = vmatprep.subr.mxu0 0.0
      %2522 = vmatpush1.msra.mxu0 0.0
      %2523 = vmatprep.subr.mxu0 0.0
      %2524 = vmatpush1.msra.mxu0 0.0
      %2525 = vmatprep.subr.mxu0 0.0
      %2526 = vmatpush1.msra.mxu0 0.0
      %2527 = vmatprep.subr.mxu0 0.0
      %2528 = vmatpush1.msra.mxu0 0.0
      %2529 = vmatprep.subr.mxu0 0.0
      %2530 = vmatpush1.msra.mxu0 0.0
      %2531 = vmatprep.subr.mxu0 0.0
      %2532 = vmatpush1.msra.mxu0 0.0
      %2533 = vmatprep.subr.mxu0 0.0
      %2534 = vmatpush1.msra.mxu0 0.0
      %2535 = vmatprep.subr.mxu0 0.0
      %2536 = vmatpush1.msra.mxu0 0.0
      %2537 = vmatprep.subr.mxu0 0.0
      %2538 = vmatpush1.msra.mxu0 0.0
      %2539 = vmatprep.subr.mxu0 0.0
      %2540 = vmatpush1.msra.mxu0 0.0
      %2541 = vmatprep.subr.mxu0 0.0
      %2542 = vmatpush1.msra.mxu0 0.0
      %2543 = vmatprep.subr.mxu0 0.0
      %2544 = vmatpush1.msra.mxu0 0.0
      %2545 = vmatprep.subr.mxu0 0.0
      %2546 = vmatpush1.msra.mxu0 0.0
      %2547 = vmatprep.subr.mxu0 0.0
      %2548 = vmatpush1.msra.mxu0 0.0
      %2549 = vmatprep.subr.mxu0 0.0
      %2550 = vmatpush1.msra.mxu0 0.0
      %2551 = vmatprep.subr.mxu0 0.0
      %2552 = vmatpush1.msra.mxu0 0.0
      %2553 = vmatprep.subr.mxu0 0.0
      %2554 = vmatpush1.msra.mxu0 0.0
      %2555 = vmatprep.subr.mxu0 0.0
      %2556 = vmatpush1.msra.mxu0 0.0
      %2557 = vmatprep.subr.mxu0 0.0
      %2558 = vmatpush1.msra.mxu0 0.0
      %2559 = vmatprep.subr.mxu0 0.0
      %2560 = vmatpush1.msra.mxu0 0.0
      %2561 = vmatprep.subr.mxu0 0.0
      %2562 = vmatpush1.msra.mxu0 0.0
      %2563 = vmatprep.subr.mxu0 0.0
      %2564 = vmatpush1.msra.mxu0 0.0
      %2565 = vmatprep.subr.mxu0 0.0
      %2566 = vmatpush1.msra.mxu0 0.0
      %2567 = vmatprep.subr.mxu0 0.0
      %2568 = vmatpush1.msra.mxu0 0.0
      %2569 = vmatprep.mubr.f32.mxu0 0.0
      %2570 = vmatmul.mubr.f32.gmra.mrb[0].mxu0 %v2410
      %v2571 = vpop.f32.mrb[0].mxu0
      %v2572 = vadd.f32 %v2251, %v2571
      %v2573 = vpop.f32.mrb[0].mxu0
      %2574 = vmatprep.mubr.f32.mxu0 0.0
      %2575 = vmatmul.mubr.f32.gmra.mrb[0].mxu0 %v2413
      %v2576 = vpop.f32.mrb[0].mxu0
      %v2577 = vadd.f32 %v2256, %v2576
      %v2578 = vpop.f32.mrb[0].mxu0
      %2579 = vmatprep.mubr.f32.mxu0 0.0
      %2580 = vmatmul.mubr.f32.gmra.mrb[0].mxu0 %v2416
      %v2581 = vpop.f32.mrb[0].mxu0
      %v2582 = vadd.f32 %v2261, %v2581
      %v2583 = vpop.f32.mrb[0].mxu0
      %2584 = vmatprep.mubr.f32.mxu0 0.0
      %2585 = vmatmul.mubr.f32.gmra.mrb[0].mxu0 %v2419
      %v2586 = vpop.f32.mrb[0].mxu0
      %v2587 = vadd.f32 %v2266, %v2586
      %v2588 = vpop.f32.mrb[0].mxu0
      %2589 = vmatprep.mubr.f32.mxu0 0.0
      %2590 = vmatmul.mubr.f32.gmra.mrb[0].mxu0 %v2422
      %v2591 = vpop.f32.mrb[0].mxu0
      %v2592 = vadd.f32 %v2271, %v2591
      %v2593 = vpop.f32.mrb[0].mxu0
      %2594 = vmatprep.mubr.f32.mxu0 0.0
      %2595 = vmatmul.mubr.f32.gmra.mrb[0].mxu0 %v2425
      %v2596 = vpop.f32.mrb[0].mxu0
      %v2597 = vadd.f32 %v2276, %v2596
      %v2598 = vpop.f32.mrb[0].mxu0
      %2599 = vmatprep.mubr.f32.mxu0 0.0
      %2600 = vmatmul.mubr.f32.gmra.mrb[0].mxu0 %v2428
      %v2601 = vpop.f32.mrb[0].mxu0
      %v2602 = vadd.f32 %v2281, %v2601
      %v2603 = vpop.f32.mrb[0].mxu0
      %2604 = vmatprep.mubr.f32.mxu0 0.0
      %2605 = vmatmul.mubr.f32.gmra.mrb[0].mxu0 %v2431
      %v2606 = vpop.f32.mrb[0].mxu0
      %v2607 = vadd.f32 %v2286, %v2606
      %v2608 = vpop.f32.mrb[0].mxu0
      %2609 = vmatprep.mubr.f32.mxu0 0.0
      %2610 = vmatmul.mubr.f32.gmra.mrb[0].mxu0 %v2434
      %v2611 = vpop.f32.mrb[0].mxu0
      %v2612 = vadd.f32 %v2291, %v2611
      %v2613 = vpop.f32.mrb[0].mxu0
      %2614 = vmatprep.mubr.f32.mxu0 0.0
      %2615 = vmatmul.mubr.f32.gmra.mrb[0].mxu0 %v2437
      %v2616 = vpop.f32.mrb[0].mxu0
      %v2617 = vadd.f32 %v2296, %v2616
      %v2618 = vpop.f32.mrb[0].mxu0
      %2619 = vmatprep.mubr.f32.mxu0 0.0
      %2620 = vmatmul.mubr.f32.gmra.mrb[0].mxu0 %v2440
      %v2621 = vpop.f32.mrb[0].mxu0
      %v2622 = vadd.f32 %v2301, %v2621
      %v2623 = vpop.f32.mrb[0].mxu0
      %2624 = vmatprep.mubr.f32.mxu0 0.0
      %2625 = vmatmul.mubr.f32.gmra.mrb[0].mxu0 %v2443
      %v2626 = vpop.f32.mrb[0].mxu0
      %v2627 = vadd.f32 %v2306, %v2626
      %v2628 = vpop.f32.mrb[0].mxu0
      %2629 = vmatprep.mubr.f32.mxu0 0.0
      %2630 = vmatmul.mubr.f32.gmra.mrb[0].mxu0 %v2446
      %v2631 = vpop.f32.mrb[0].mxu0
      %v2632 = vadd.f32 %v2311, %v2631
      %v2633 = vpop.f32.mrb[0].mxu0
      %2634 = vmatprep.mubr.f32.mxu0 0.0
      %2635 = vmatmul.mubr.f32.gmra.mrb[0].mxu0 %v2449
      %v2636 = vpop.f32.mrb[0].mxu0
      %v2637 = vadd.f32 %v2316, %v2636
      %v2638 = vpop.f32.mrb[0].mxu0
      %2639 = vmatprep.mubr.f32.mxu0 0.0
      %2640 = vmatmul.mubr.f32.gmra.mrb[0].mxu0 %v2452
      %v2641 = vpop.f32.mrb[0].mxu0
      %v2642 = vadd.f32 %v2321, %v2641
      %v2643 = vpop.f32.mrb[0].mxu0
      %2644 = vmatprep.mubr.f32.mxu0 0.0
      %2645 = vmatmul.mubr.f32.gmra.mrb[0].mxu0 %v2455
      %v2646 = vpop.f32.mrb[0].mxu0
      %v2647 = vadd.f32 %v2326, %v2646
      %v2648 = vpop.f32.mrb[0].mxu0
      %2649 = vmatprep.mubr.f32.mxu0 0.0
      %2650 = vmatmul.mubr.f32.gmra.mrb[0].mxu0 %v2458
      %v2651 = vpop.f32.mrb[0].mxu0
      %v2652 = vadd.f32 %v2331, %v2651
      %v2653 = vpop.f32.mrb[0].mxu0
      %2654 = vmatprep.mubr.f32.mxu0 0.0
      %2655 = vmatmul.mubr.f32.gmra.mrb[0].mxu0 %v2461
      %v2656 = vpop.f32.mrb[0].mxu0
      %v2657 = vadd.f32 %v2336, %v2656
      %v2658 = vpop.f32.mrb[0].mxu0
      %2659 = vmatprep.mubr.f32.mxu0 0.0
      %2660 = vmatmul.mubr.f32.gmra.mrb[0].mxu0 %v2464
      %v2661 = vpop.f32.mrb[0].mxu0
      %v2662 = vadd.f32 %v2341, %v2661
      %v2663 = vpop.f32.mrb[0].mxu0
      %2664 = vmatprep.mubr.f32.mxu0 0.0
      %2665 = vmatmul.mubr.f32.gmra.mrb[0].mxu0 %v2467
      %v2666 = vpop.f32.mrb[0].mxu0
      %v2667 = vadd.f32 %v2346, %v2666
      %v2668 = vpop.f32.mrb[0].mxu0
      %2669 = vmatprep.mubr.f32.mxu0 0.0
      %2670 = vmatmul.mubr.f32.gmra.mrb[0].mxu0 %v2470
      %v2671 = vpop.f32.mrb[0].mxu0
      %v2672 = vadd.f32 %v2351, %v2671
      %v2673 = vpop.f32.mrb[0].mxu0
      %2674 = vmatprep.mubr.f32.mxu0 0.0
      %2675 = vmatmul.mubr.f32.gmra.mrb[0].mxu0 %v2473
      %v2676 = vpop.f32.mrb[0].mxu0
      %v2677 = vadd.f32 %v2356, %v2676
      %v2678 = vpop.f32.mrb[0].mxu0
      %2679 = vmatprep.mubr.f32.mxu0 0.0
      %2680 = vmatmul.mubr.f32.gmra.mrb[0].mxu0 %v2476
      %v2681 = vpop.f32.mrb[0].mxu0
      %v2682 = vadd.f32 %v2361, %v2681
      %v2683 = vpop.f32.mrb[0].mxu0
      %2684 = vmatprep.mubr.f32.mxu0 0.0
      %2685 = vmatmul.mubr.f32.gmra.mrb[0].mxu0 %v2479
      %v2686 = vpop.f32.mrb[0].mxu0
      %v2687 = vadd.f32 %v2366, %v2686
      %v2688 = vpop.f32.mrb[0].mxu0
      %2689 = vmatprep.mubr.f32.mxu0 0.0
      %2690 = vmatmul.mubr.f32.gmra.mrb[0].mxu0 %v2482
      %v2691 = vpop.f32.mrb[0].mxu0
      %v2692 = vadd.f32 %v2371, %v2691
      %v2693 = vpop.f32.mrb[0].mxu0
      %2694 = vmatprep.mubr.f32.mxu0 0.0
      %2695 = vmatmul.mubr.f32.gmra.mrb[0].mxu0 %v2485
      %v2696 = vpop.f32.mrb[0].mxu0
      %v2697 = vadd.f32 %v2376, %v2696
      %v2698 = vpop.f32.mrb[0].mxu0
      %2699 = vmatprep.mubr.f32.mxu0 0.0
      %2700 = vmatmul.mubr.f32.gmra.mrb[0].mxu0 %v2488
      %v2701 = vpop.f32.mrb[0].mxu0
      %v2702 = vadd.f32 %v2381, %v2701
      %v2703 = vpop.f32.mrb[0].mxu0
      %2704 = vmatprep.mubr.f32.mxu0 0.0
      %2705 = vmatmul.mubr.f32.gmra.mrb[0].mxu0 %v2491
      %v2706 = vpop.f32.mrb[0].mxu0
      %v2707 = vadd.f32 %v2386, %v2706
      %v2708 = vpop.f32.mrb[0].mxu0
      %2709 = vmatprep.mubr.f32.mxu0 0.0
      %2710 = vmatmul.mubr.f32.gmra.mrb[0].mxu0 %v2494
      %v2711 = vpop.f32.mrb[0].mxu0
      %v2712 = vadd.f32 %v2391, %v2711
      %v2713 = vpop.f32.mrb[0].mxu0
      %2714 = vmatprep.mubr.f32.mxu0 0.0
      %2715 = vmatmul.mubr.f32.gmra.mrb[0].mxu0 %v2497
      %v2716 = vpop.f32.mrb[0].mxu0
      %v2717 = vadd.f32 %v2396, %v2716
      %v2718 = vpop.f32.mrb[0].mxu0
      %2719 = vmatprep.mubr.f32.mxu0 0.0
      %2720 = vmatmul.mubr.f32.gmra.mrb[0].mxu0 %v2500
      %v2721 = vpop.f32.mrb[0].mxu0
      %v2722 = vadd.f32 %v2401, %v2721
      %v2723 = vpop.f32.mrb[0].mxu0
      %2724 = vmatprep.mubr.f32.mxu0 0.0
      %2725 = vmatmul.mubr.f32.gmra.mrb[0].mxu0 %v2503
      %v2726 = vpop.f32.mrb[0].mxu0
      %v2727 = vadd.f32 %v2406, %v2726
      %v2728 = vpop.f32.mrb[0].mxu0
      %2729 = vdwg.mxu0
      %v2730 = vld [vmem:[%s9] sm:$0x1]
      %v2732 = vlaneseq
      %v2733 = vshrl.u32 %v2732, 7
      %v2734 = vsub.s32 0, %v2733
      %v2735 = vrot.slane %v2730, %v2734
      %v2737 = vadd.f32 %v2572, %v2735
      %v2738 = vadd.f32 %v2577, %v2735
      %v2739 = vadd.f32 %v2582, %v2735
      %v2740 = vadd.f32 %v2587, %v2735
      %v2741 = vadd.f32 %v2592, %v2735
      %v2742 = vadd.f32 %v2597, %v2735
      %v2743 = vadd.f32 %v2602, %v2735
      %v2744 = vadd.f32 %v2607, %v2735
      %v2745 = vadd.f32 %v2612, %v2735
      %v2746 = vadd.f32 %v2617, %v2735
      %v2747 = vadd.f32 %v2622, %v2735
      %v2748 = vadd.f32 %v2627, %v2735
      %v2749 = vadd.f32 %v2632, %v2735
      %v2750 = vadd.f32 %v2637, %v2735
      %v2751 = vadd.f32 %v2642, %v2735
      %v2752 = vadd.f32 %v2647, %v2735
      %v2753 = vadd.f32 %v2652, %v2735
      %v2754 = vadd.f32 %v2657, %v2735
      %v2755 = vadd.f32 %v2662, %v2735
      %v2756 = vadd.f32 %v2667, %v2735
      %v2757 = vadd.f32 %v2672, %v2735
      %v2758 = vadd.f32 %v2677, %v2735
      %v2759 = vadd.f32 %v2682, %v2735
      %v2760 = vadd.f32 %v2687, %v2735
      %v2761 = vadd.f32 %v2692, %v2735
      %v2762 = vadd.f32 %v2697, %v2735
      %v2763 = vadd.f32 %v2702, %v2735
      %v2764 = vadd.f32 %v2707, %v2735
      %v2765 = vadd.f32 %v2712, %v2735
      %v2766 = vadd.f32 %v2717, %v2735
      %v2767 = vadd.f32 %v2722, %v2735
      %v2768 = vadd.f32 %v2727, %v2735
      %v2769 = vsel %vm914, %v2737, 0.0
      %v2770 = vsel %vm914, %v2738, 0.0
      %v2771 = vadd.f32 %v2769, %v2770
      %v2772 = vsel %vm914, %v2739, 0.0
      %v2773 = vadd.f32 %v2771, %v2772
      %v2774 = vsel %vm914, %v2740, 0.0
      %v2775 = vadd.f32 %v2773, %v2774
      %v2776 = vsel %vm914, %v2741, 0.0
      %v2777 = vadd.f32 %v2775, %v2776
      %v2778 = vsel %vm914, %v2742, 0.0
      %v2779 = vadd.f32 %v2777, %v2778
      %v2780 = vsel %vm914, %v2743, 0.0
      %v2781 = vadd.f32 %v2779, %v2780
      %v2782 = vsel %vm914, %v2744, 0.0
      %v2783 = vadd.f32 %v2781, %v2782
      %v2784 = vsel %vm914, %v2745, 0.0
      %v2785 = vadd.f32 %v2783, %v2784
      %v2786 = vsel %vm914, %v2746, 0.0
      %v2787 = vadd.f32 %v2785, %v2786
      %v2788 = vsel %vm914, %v2747, 0.0
      %v2789 = vadd.f32 %v2787, %v2788
      %v2790 = vsel %vm914, %v2748, 0.0
      %v2791 = vadd.f32 %v2789, %v2790
      %v2792 = vsel %vm914, %v2749, 0.0
      %v2793 = vadd.f32 %v2791, %v2792
      %v2794 = vsel %vm914, %v2750, 0.0
      %v2795 = vadd.f32 %v2793, %v2794
      %v2796 = vsel %vm914, %v2751, 0.0
      %v2797 = vadd.f32 %v2795, %v2796
      %v2798 = vsel %vm914, %v2752, 0.0
      %v2799 = vadd.f32 %v2797, %v2798
      %v2800 = vsel %vm914, %v2753, 0.0
      %v2801 = vadd.f32 %v2799, %v2800
      %v2802 = vsel %vm914, %v2754, 0.0
      %v2803 = vadd.f32 %v2801, %v2802
      %v2804 = vsel %vm914, %v2755, 0.0
      %v2805 = vadd.f32 %v2803, %v2804
      %v2806 = vsel %vm914, %v2756, 0.0
      %v2807 = vadd.f32 %v2805, %v2806
      %v2808 = vsel %vm914, %v2757, 0.0
      %v2809 = vadd.f32 %v2807, %v2808
      %v2810 = vsel %vm914, %v2758, 0.0
      %v2811 = vadd.f32 %v2809, %v2810
      %v2812 = vsel %vm914, %v2759, 0.0
      %v2813 = vadd.f32 %v2811, %v2812
      %v2814 = vsel %vm914, %v2760, 0.0
      %v2815 = vadd.f32 %v2813, %v2814
      %v2816 = vsel %vm914, %v2761, 0.0
      %v2817 = vadd.f32 %v2815, %v2816
      %v2818 = vsel %vm914, %v2762, 0.0
      %v2819 = vadd.f32 %v2817, %v2818
      %v2820 = vsel %vm914, %v2763, 0.0
      %v2821 = vadd.f32 %v2819, %v2820
      %v2822 = vsel %vm914, %v2764, 0.0
      %v2823 = vadd.f32 %v2821, %v2822
      %v2824 = vsel %vm914, %v2765, 0.0
      %v2825 = vadd.f32 %v2823, %v2824
      %v2826 = vsel %vm914, %v2766, 0.0
      %v2827 = vadd.f32 %v2825, %v2826
      %v2828 = vsel %vm914, %v2767, 0.0
      %v2829 = vadd.f32 %v2827, %v2828
      %v2830 = vsel %vm914, %v2768, 0.0
      %v2831 = vadd.f32 %v2829, %v2830
      %v2832 = vrot.slane %v2831, 4
      %v2833 = vadd.f32 %v2831, %v2832
      %v2834 = vrot.slane %v2833, 2
      %v2835 = vadd.f32 %v2833, %v2834
      %v2836 = vrot.slane %v2835, 1
      %v2837 = vadd.f32 %v2835, %v2836
      %v2838 = vmul.f32 %v2737, %v2737
      %v2839 = vmul.f32 %v2738, %v2738
      %v2840 = vmul.f32 %v2739, %v2739
      %v2841 = vmul.f32 %v2740, %v2740
      %v2842 = vmul.f32 %v2741, %v2741
      %v2843 = vmul.f32 %v2742, %v2742
      %v2844 = vmul.f32 %v2743, %v2743
      %v2845 = vmul.f32 %v2744, %v2744
      %v2846 = vmul.f32 %v2745, %v2745
      %v2847 = vmul.f32 %v2746, %v2746
      %v2848 = vmul.f32 %v2747, %v2747
      %v2849 = vmul.f32 %v2748, %v2748
      %v2850 = vmul.f32 %v2749, %v2749
      %v2851 = vmul.f32 %v2750, %v2750
      %v2852 = vmul.f32 %v2751, %v2751
      %v2853 = vmul.f32 %v2752, %v2752
      %v2854 = vmul.f32 %v2753, %v2753
      %v2855 = vmul.f32 %v2754, %v2754
      %v2856 = vmul.f32 %v2755, %v2755
      %v2857 = vmul.f32 %v2756, %v2756
      %v2858 = vmul.f32 %v2757, %v2757
      %v2859 = vmul.f32 %v2758, %v2758
      %v2860 = vmul.f32 %v2759, %v2759
      %v2861 = vmul.f32 %v2760, %v2760
      %v2862 = vmul.f32 %v2761, %v2761
      %v2863 = vmul.f32 %v2762, %v2762
      %v2864 = vmul.f32 %v2763, %v2763
      %v2865 = vmul.f32 %v2764, %v2764
      %v2866 = vmul.f32 %v2765, %v2765
      %v2867 = vmul.f32 %v2766, %v2766
      %v2868 = vmul.f32 %v2767, %v2767
      %v2869 = vmul.f32 %v2768, %v2768
      %v2870 = vsel %vm914, %v2838, 0.0
      %v2871 = vsel %vm914, %v2839, 0.0
      %v2872 = vadd.f32 %v2870, %v2871
      %v2873 = vsel %vm914, %v2840, 0.0
      %v2874 = vadd.f32 %v2872, %v2873
      %v2875 = vsel %vm914, %v2841, 0.0
      %v2876 = vadd.f32 %v2874, %v2875
      %v2877 = vsel %vm914, %v2842, 0.0
      %v2878 = vadd.f32 %v2876, %v2877
      %v2879 = vsel %vm914, %v2843, 0.0
      %v2880 = vadd.f32 %v2878, %v2879
      %v2881 = vsel %vm914, %v2844, 0.0
      %v2882 = vadd.f32 %v2880, %v2881
      %v2883 = vsel %vm914, %v2845, 0.0
      %v2884 = vadd.f32 %v2882, %v2883
      %v2885 = vsel %vm914, %v2846, 0.0
      %v2886 = vadd.f32 %v2884, %v2885
      %v2887 = vsel %vm914, %v2847, 0.0
      %v2888 = vadd.f32 %v2886, %v2887
      %v2889 = vsel %vm914, %v2848, 0.0
      %v2890 = vadd.f32 %v2888, %v2889
      %v2891 = vsel %vm914, %v2849, 0.0
      %v2892 = vadd.f32 %v2890, %v2891
      %v2893 = vsel %vm914, %v2850, 0.0
      %v2894 = vadd.f32 %v2892, %v2893
      %v2895 = vsel %vm914, %v2851, 0.0
      %v2896 = vadd.f32 %v2894, %v2895
      %v2897 = vsel %vm914, %v2852, 0.0
      %v2898 = vadd.f32 %v2896, %v2897
      %v2899 = vsel %vm914, %v2853, 0.0
      %v2900 = vadd.f32 %v2898, %v2899
      %v2901 = vsel %vm914, %v2854, 0.0
      %v2902 = vadd.f32 %v2900, %v2901
      %v2903 = vsel %vm914, %v2855, 0.0
      %v2904 = vadd.f32 %v2902, %v2903
      %v2905 = vsel %vm914, %v2856, 0.0
      %v2906 = vadd.f32 %v2904, %v2905
      %v2907 = vsel %vm914, %v2857, 0.0
      %v2908 = vadd.f32 %v2906, %v2907
      %v2909 = vsel %vm914, %v2858, 0.0
      %v2910 = vadd.f32 %v2908, %v2909
      %v2911 = vsel %vm914, %v2859, 0.0
      %v2912 = vadd.f32 %v2910, %v2911
      %v2913 = vsel %vm914, %v2860, 0.0
      %v2914 = vadd.f32 %v2912, %v2913
      %v2915 = vsel %vm914, %v2861, 0.0
      %v2916 = vadd.f32 %v2914, %v2915
      %v2917 = vsel %vm914, %v2862, 0.0
      %v2918 = vadd.f32 %v2916, %v2917
      %v2919 = vsel %vm914, %v2863, 0.0
      %v2920 = vadd.f32 %v2918, %v2919
      %v2921 = vsel %vm914, %v2864, 0.0
      %v2922 = vadd.f32 %v2920, %v2921
      %v2923 = vsel %vm914, %v2865, 0.0
      %v2924 = vadd.f32 %v2922, %v2923
      %v2925 = vsel %vm914, %v2866, 0.0
      %v2926 = vadd.f32 %v2924, %v2925
      %v2927 = vsel %vm914, %v2867, 0.0
      %v2928 = vadd.f32 %v2926, %v2927
      %v2929 = vsel %vm914, %v2868, 0.0
      %v2930 = vadd.f32 %v2928, %v2929
      %v2931 = vsel %vm914, %v2869, 0.0
      %v2932 = vadd.f32 %v2930, %v2931
      %v2933 = vrot.slane %v2932, 4
      %v2934 = vadd.f32 %v2932, %v2933
      %v2935 = vrot.slane %v2934, 2
      %v2936 = vadd.f32 %v2934, %v2935
      %v2937 = vrot.slane %v2936, 1
      %v2938 = vadd.f32 %v2936, %v2937
      %v2939 = vmul.f32 %v2837, 0.00390625
      %v2940 = vmul.f32 %v2938, 0.00390625
      %v2941 = vmul.f32 %v2939, %v2939
      %v2942 = vsub.f32 %v2940, %v2941
      %v2943 = vmax.f32 %v2942, 0.0
      %v2944 = vsub.f32 %v2737, %v2939
      %v2945 = vsub.f32 %v2738, %v2939
      %v2946 = vsub.f32 %v2739, %v2939
      %v2947 = vsub.f32 %v2740, %v2939
      %v2948 = vsub.f32 %v2741, %v2939
      %v2949 = vsub.f32 %v2742, %v2939
      %v2950 = vsub.f32 %v2743, %v2939
      %v2951 = vsub.f32 %v2744, %v2939
      %v2952 = vsub.f32 %v2745, %v2939
      %v2953 = vsub.f32 %v2746, %v2939
      %v2954 = vsub.f32 %v2747, %v2939
      %v2955 = vsub.f32 %v2748, %v2939
      %v2956 = vsub.f32 %v2749, %v2939
      %v2957 = vsub.f32 %v2750, %v2939
      %v2958 = vsub.f32 %v2751, %v2939
      %v2959 = vsub.f32 %v2752, %v2939
      %v2960 = vsub.f32 %v2753, %v2939
      %v2961 = vsub.f32 %v2754, %v2939
      %v2962 = vsub.f32 %v2755, %v2939
      %v2963 = vsub.f32 %v2756, %v2939
      %v2964 = vsub.f32 %v2757, %v2939
      %v2965 = vsub.f32 %v2758, %v2939
      %v2966 = vsub.f32 %v2759, %v2939
      %v2967 = vsub.f32 %v2760, %v2939
      %v2968 = vsub.f32 %v2761, %v2939
      %v2969 = vsub.f32 %v2762, %v2939
      %v2970 = vsub.f32 %v2763, %v2939
      %v2971 = vsub.f32 %v2764, %v2939
      %v2972 = vsub.f32 %v2765, %v2939
      %v2973 = vsub.f32 %v2766, %v2939
      %v2974 = vsub.f32 %v2767, %v2939
      %v2975 = vsub.f32 %v2768, %v2939
      %v2976 = vadd.f32 %v2943, 1e-05
      %v2977 = vrsqrt.pop %v2976
      %v2978 = vmul.f32 %v2944, %v2977
      %v2979 = vmul.f32 %v2945, %v2977
      %v2980 = vmul.f32 %v2946, %v2977
      %v2981 = vmul.f32 %v2947, %v2977
      %v2982 = vmul.f32 %v2948, %v2977
      %v2983 = vmul.f32 %v2949, %v2977
      %v2984 = vmul.f32 %v2950, %v2977
      %v2985 = vmul.f32 %v2951, %v2977
      %v2986 = vmul.f32 %v2952, %v2977
      %v2987 = vmul.f32 %v2953, %v2977
      %v2988 = vmul.f32 %v2954, %v2977
      %v2989 = vmul.f32 %v2955, %v2977
      %v2990 = vmul.f32 %v2956, %v2977
      %v2991 = vmul.f32 %v2957, %v2977
      %v2992 = vmul.f32 %v2958, %v2977
      %v2993 = vmul.f32 %v2959, %v2977
      %v2994 = vmul.f32 %v2960, %v2977
      %v2995 = vmul.f32 %v2961, %v2977
      %v2996 = vmul.f32 %v2962, %v2977
      %v2997 = vmul.f32 %v2963, %v2977
      %v2998 = vmul.f32 %v2964, %v2977
      %v2999 = vmul.f32 %v2965, %v2977
      %v3000 = vmul.f32 %v2966, %v2977
      %v3001 = vmul.f32 %v2967, %v2977
      %v3002 = vmul.f32 %v2968, %v2977
      %v3003 = vmul.f32 %v2969, %v2977
      %v3004 = vmul.f32 %v2970, %v2977
      %v3005 = vmul.f32 %v2971, %v2977
      %v3006 = vmul.f32 %v2972, %v2977
      %v3007 = vmul.f32 %v2973, %v2977
      %v3008 = vmul.f32 %v2974, %v2977
      %v3009 = vmul.f32 %v2975, %v2977
      %v3010 = vmax.f32 %v2978, 0.0
      %v3011 = vmax.f32 %v2979, 0.0
      %v3012 = vmax.f32 %v2980, 0.0
      %v3013 = vmax.f32 %v2981, 0.0
      %v3014 = vmax.f32 %v2982, 0.0
      %v3015 = vmax.f32 %v2983, 0.0
      %v3016 = vmax.f32 %v2984, 0.0
      %v3017 = vmax.f32 %v2985, 0.0
      %v3018 = vmax.f32 %v2986, 0.0
      %v3019 = vmax.f32 %v2987, 0.0
      %v3020 = vmax.f32 %v2988, 0.0
      %v3021 = vmax.f32 %v2989, 0.0
      %v3022 = vmax.f32 %v2990, 0.0
      %v3023 = vmax.f32 %v2991, 0.0
      %v3024 = vmax.f32 %v2992, 0.0
      %v3025 = vmax.f32 %v2993, 0.0
      %v3026 = vmax.f32 %v2994, 0.0
      %v3027 = vmax.f32 %v2995, 0.0
      %v3028 = vmax.f32 %v2996, 0.0
      %v3029 = vmax.f32 %v2997, 0.0
      %v3030 = vmax.f32 %v2998, 0.0
      %v3031 = vmax.f32 %v2999, 0.0
      %v3032 = vmax.f32 %v3000, 0.0
      %v3033 = vmax.f32 %v3001, 0.0
      %v3034 = vmax.f32 %v3002, 0.0
      %v3035 = vmax.f32 %v3003, 0.0
      %v3036 = vmax.f32 %v3004, 0.0
      %v3037 = vmax.f32 %v3005, 0.0
      %v3038 = vmax.f32 %v3006, 0.0
      %v3039 = vmax.f32 %v3007, 0.0
      %v3040 = vmax.f32 %v3008, 0.0
      %v3041 = vmax.f32 %v3009, 0.0
      %3042 = vst.msk [vmem:[%s379] sm:$0xff] %vm914, %v3010
      %3043 = vst.msk [vmem:[%s379 + $0x8] sm:$0xff] %vm914, %v3011
      %3044 = vst.msk [vmem:[%s379 + $0x10] sm:$0xff] %vm914, %v3012
      %3045 = vst.msk [vmem:[%s379 + $0x18] sm:$0xff] %vm914, %v3013
      %3046 = vst.msk [vmem:[%s379 + $0x20] sm:$0xff] %vm914, %v3014
      %3047 = vst.msk [vmem:[%s379 + $0x28] sm:$0xff] %vm914, %v3015
      %3048 = vst.msk [vmem:[%s379 + $0x30] sm:$0xff] %vm914, %v3016
      %3049 = vst.msk [vmem:[%s379 + $0x38] sm:$0xff] %vm914, %v3017
      %3050 = vst.msk [vmem:[%s379 + $0x40] sm:$0xff] %vm914, %v3018
      %3051 = vst.msk [vmem:[%s379 + $0x48] sm:$0xff] %vm914, %v3019
      %3052 = vst.msk [vmem:[%s379 + $0x50] sm:$0xff] %vm914, %v3020
      %3053 = vst.msk [vmem:[%s379 + $0x58] sm:$0xff] %vm914, %v3021
      %3054 = vst.msk [vmem:[%s379 + $0x60] sm:$0xff] %vm914, %v3022
      %3055 = vst.msk [vmem:[%s379 + $0x68] sm:$0xff] %vm914, %v3023
      %3056 = vst.msk [vmem:[%s379 + $0x70] sm:$0xff] %vm914, %v3024
      %3057 = vst.msk [vmem:[%s379 + $0x78] sm:$0xff] %vm914, %v3025
      %3058 = vst.msk [vmem:[%s379 + $0x80] sm:$0xff] %vm914, %v3026
      %3059 = vst.msk [vmem:[%s379 + $0x88] sm:$0xff] %vm914, %v3027
      %3060 = vst.msk [vmem:[%s379 + $0x90] sm:$0xff] %vm914, %v3028
      %3061 = vst.msk [vmem:[%s379 + $0x98] sm:$0xff] %vm914, %v3029
      %3062 = vst.msk [vmem:[%s379 + $0xa0] sm:$0xff] %vm914, %v3030
      %3063 = vst.msk [vmem:[%s379 + $0xa8] sm:$0xff] %vm914, %v3031
      %3064 = vst.msk [vmem:[%s379 + $0xb0] sm:$0xff] %vm914, %v3032
      %3065 = vst.msk [vmem:[%s379 + $0xb8] sm:$0xff] %vm914, %v3033
      %3066 = vst.msk [vmem:[%s379 + $0xc0] sm:$0xff] %vm914, %v3034
      %3067 = vst.msk [vmem:[%s379 + $0xc8] sm:$0xff] %vm914, %v3035
      %3068 = vst.msk [vmem:[%s379 + $0xd0] sm:$0xff] %vm914, %v3036
      %3069 = vst.msk [vmem:[%s379 + $0xd8] sm:$0xff] %vm914, %v3037
      %3070 = vst.msk [vmem:[%s379 + $0xe0] sm:$0xff] %vm914, %v3038
      %3071 = vst.msk [vmem:[%s379 + $0xe8] sm:$0xff] %vm914, %v3039
      %3072 = vst.msk [vmem:[%s379 + $0xf0] sm:$0xff] %vm914, %v3040
      %3073 = vst.msk [vmem:[%s379 + $0xf8] sm:$0xff] %vm914, %v3041
      %p3074 = scmp.lt.s32.totalorder %s21, 1
      %s3075 = scalar_select %p3074, %s21, 1
      %s3076 = smul.addr %s3075, 32
      %s3077 = smul.addr %s3076, 8
      %s3078 = scalar_lea.vmem %s10, %s3077
      // Predicated region
      $region61: #{up_forward.1} parent=59 // pred_check
        %p3079 = pneg %p259
      $region62: #{up_forward.1} parent=59 // pred_check_branch
        %3081 = sbr.rel (%p3079) target = $region64
      $region63: #{up_forward.1} parent=59 // pred_region
        _
      $region64: #{up_forward.1} parent=59 // pred_fallthru
        _
    $region60: #{up_forward.1} parent=5 // pred_fallthru
      _
    %p3082 = scmp.le.s32.totalorder 2, %s16
    // Predicated region
    $region65: #{up_forward.1} parent=5 // pred_check
      %p3083 = pneg %p3082
    $region66: #{up_forward.1} parent=5 // pred_check_branch
      %3085 = sbr.rel (%p3083) target = $region68
    $region67: #{up_forward.1} parent=5 // pred_region
      %s3086 = ssub.s32 %s16, 2
      // Predicated region
      $region69: #{up_forward.1} parent=67 // pred_check
        %p3087 = pneg %p265
      $region70: #{up_forward.1} parent=67 // pred_check_branch
        %3089 = sbr.rel (%p3087) target = $region72
      $region71: #{up_forward.1} parent=67 // pred_region
        %p3090 = scmp.lt.s32.totalorder %s22, 1
        %s3091 = scalar_select %p3090, %s22, 1
        %s3092 = smul.addr %s3091, 32
        %s3093 = smul.addr %s3092, 8
        %s3094 = scalar_lea.vmem %s10, %s3093
      $region72: #{up_forward.1} parent=67 // pred_fallthru
        _
    $region68: #{up_forward.1} parent=5 // pred_fallthru
      _
  $region6: #{up_forward.1} parent=0 // loop_footer
    %s20 = sadd.s32 1, %s16
  $region7: #{up_forward.1} parent=0 // loop_footer_branch
    %15 = sbr.rel target = $region3
  $region8: #{up_forward.1} parent=0 // loop_exit
    _

</llo_original>
